<compile_context>
chip_gen: v7x
topology: tpu7x:2x2x1
jax: 0.10.0
libtpu: 0.0.40
codegen_flags: <defaults>
</compile_context>

<pallas_src>
import jax
import jax.numpy as jnp
from jax.experimental import pallas as pl
from jax.experimental.pallas import tpu as pltpu


# ------------------------------ helpers -------------------------------------
def _round_up(a, b):
    return ((a + b - 1) // b) * b


def _pad_to(a, shape):
    pads = [(0, t - s) for s, t in zip(a.shape, shape)]
    if any(p for _, p in pads):
        a = jnp.pad(a, pads)
    return a


# ----------------------------- Pallas kernel --------------------------------
def _make_mm_kernel(n_seg, relu):
    """out = maybe_relu(sum_s x_s @ w_s + b), K-accumulated over grid axis 1."""

    def kernel(*refs):
        # refs: x_0, w_0, ..., x_{n-1}, w_{n-1}, b, o, acc
        b_ref = refs[2 * n_seg]
        o_ref = refs[2 * n_seg + 1]
        acc_ref = refs[2 * n_seg + 2]
        k = pl.program_id(1)

        @pl.when(k == 0)
        def _():
            acc_ref[...] = jnp.zeros_like(acc_ref)

        acc = acc_ref[...]
        for s in range(n_seg):
            acc = acc + jnp.dot(refs[2 * s][...], refs[2 * s + 1][...],
                                preferred_element_type=jnp.float32)
        acc_ref[...] = acc

        @pl.when(k == pl.num_programs(1) - 1)
        def _():
            out = acc_ref[...] + b_ref[...]
            if relu:
                out = jnp.maximum(out, 0.0)
            o_ref[...] = out.astype(o_ref.dtype)

    return kernel


def matmul_bias_act(segments, b, *, relu, out_dtype=jnp.bfloat16):
    """maybe_relu(sum_s x_s @ w_s + b) on the MXU.

    segments: list of (x_s (M, K_s), w_s (K_s, N)). Multiple segments let a
    channel-concat (skip connection) be fused into the K accumulation instead
    of being materialized in HBM.  Operands are cast to bf16, accumulation is
    f32, and the full (padded) N weight panel stays resident in VMEM.
    """
    M = segments[0][0].shape[0]
    N = segments[0][1].shape[1]
    Kmax = max(x.shape[1] for x, _ in segments)

    Np = _round_up(N, 128)
    Kp = _round_up(Kmax, 128)
    TK = 512 if (Kp > 512 and Kp % 512 == 0) else Kp
    TM = 256 if M >= 256 else _round_up(M, 16)
    Mp = _round_up(M, TM)

    ins = []
    for x, w in segments:
        ins.append(_pad_to(x.astype(jnp.bfloat16), (Mp, Kp)))
        ins.append(_pad_to(w.astype(jnp.bfloat16), (Kp, Np)))
    ins.append(_pad_to(b.reshape(1, N).astype(jnp.float32), (1, Np)))

    n_seg = len(segments)
    in_specs = []
    for _ in range(n_seg):
        in_specs.append(pl.BlockSpec((TM, TK), lambda i, k: (i, k)))
        in_specs.append(pl.BlockSpec((TK, Np), lambda i, k: (k, 0)))  # resident panel
    in_specs.append(pl.BlockSpec((1, Np), lambda i, k: (0, 0)))

    out = pl.pallas_call(
        _make_mm_kernel(n_seg, relu),
        out_shape=jax.ShapeDtypeStruct((Mp, Np), out_dtype),
        grid_spec=pltpu.PrefetchScalarGridSpec(
            num_scalar_prefetch=0,
            grid=(Mp // TM, Kp // TK),          # reduction (K) axis last
            in_specs=in_specs,
            out_specs=pl.BlockSpec((TM, Np), lambda i, k: (i, 0)),
            scratch_shapes=[pltpu.VMEM((TM, Np), jnp.float32)],
        ),
        compiler_params=pltpu.CompilerParams(
            dimension_semantics=("parallel", "arbitrary"),
            vmem_limit_bytes=48 * 1024 * 1024),
    )(*ins)
    if Mp != M or Np != N:
        out = out[:M, :N]
    return out


def _mm_ref(segments, b, *, relu, out_dtype=jnp.float32):
    """Pure-JAX f32 reference (ignores out_dtype)."""
    del out_dtype
    acc = sum(x.astype(jnp.float32) @ w.astype(jnp.float32) for x, w in segments)
    acc = acc + b[None, :].astype(jnp.float32)
    return jnp.maximum(acc, 0.0) if relu else acc


# ------------------------------ conv wrappers --------------------------------
def conv_transpose2x2_s2(x, w, b, mm, out_dtype):
    """nn.ConvTranspose2d(Cin, Cout, 2, 2).  x: NHWC, w: (Cin, Cout, 2, 2)."""
    n, h, wd, cin = x.shape
    cout = w.shape[1]
    # (Cin, Cout, kh, kw) -> (Cin, kh, kw, Cout) -> (Cin, 4*Cout)
    wt = jnp.transpose(w, (0, 2, 3, 1)).reshape(cin, 4 * cout)
    bt = jnp.tile(b, 4)  # bias per (kh, kw, Cout) slot
    y = mm([(x.reshape(n * h * wd, cin), wt)], bt, relu=False, out_dtype=out_dtype)
    y = y.reshape(n, h, wd, 2, 2, cout)
    # TODO(synk): pixel-shuffle still materializes the upsampled tensor once;
    # could be folded into the following conv's input windows.
    y = jnp.transpose(y, (0, 1, 3, 2, 4, 5)).reshape(n, 2 * h, 2 * wd, cout)
    return y


def conv2x2_valid(xs, w, b, mm, *, relu, out_dtype):
    """nn.Conv2d(sum Cin_s, Cout, 2), valid padding.

    xs: list of NHWC tensors whose channel-concat is the conv input; the concat
    is fused into the matmul as K-segments instead of being materialized.
    w: (Cout, Cin_total, 2, 2).
    """
    n, h, wd = xs[0].shape[:3]
    oh, ow = h - 1, wd - 1
    cout = w.shape[0]
    wt = jnp.transpose(w, (2, 3, 1, 0))  # (kh, kw, Cin_total, Cout)
    segments = []
    c0 = 0
    for x in xs:
        c = x.shape[-1]
        # TODO(synk): im2col still writes a 4x patch tensor (bf16); a shifted-
        # window index_map inside the kernel would remove this HBM pass.
        patches = jnp.concatenate(
            [x[:, ki:ki + oh, kj:kj + ow, :] for ki in range(2) for kj in range(2)],
            axis=-1).reshape(n * oh * ow, 4 * c)
        wseg = wt[:, :, c0:c0 + c, :].reshape(4 * c, cout)
        segments.append((patches, wseg))
        c0 += c
    y = mm(segments, b, relu=relu, out_dtype=out_dtype)
    return y.reshape(n, oh, ow, cout)


def center_crop(enc, H, W):
    """torchvision CenterCrop([H, W]) semantics (enc assumed >= target)."""
    eh, ew = enc.shape[1], enc.shape[2]
    top = int(round((eh - H) / 2.0))
    left = int(round((ew - W) / 2.0))
    return enc[:, top:top + H, left:left + W, :]


# ------------------------------ Decoder forward -------------------------------
def decoder_forward(params, x_nchw, enc_feats_nchw, mm, inter_dtype=jnp.bfloat16):
    x = jnp.transpose(x_nchw, (0, 2, 3, 1))  # NCHW -> NHWC
    n_stage = len(params)
    for i, p in enumerate(params):
        x = conv_transpose2x2_s2(x, p["up_w"], p["up_b"], mm, inter_dtype)
        enc = jnp.transpose(enc_feats_nchw[i], (0, 2, 3, 1))
        enc = center_crop(enc, x.shape[1], x.shape[2])
        # torch.cat([x, enc], dim=1) + conv1 fused as two K-segments.
        x = conv2x2_valid([x, enc], p["c1_w"], p["c1_b"], mm,
                          relu=True, out_dtype=inter_dtype)
        last_dtype = jnp.float32 if i == n_stage - 1 else inter_dtype
        x = conv2x2_valid([x], p["c2_w"], p["c2_b"], mm,
                          relu=True, out_dtype=last_dtype)
    return jnp.transpose(x, (0, 3, 1, 2))  # NHWC -> NCHW


def init_params(key, chs):
    params = []
    for i in range(len(chs) - 1):
        cin, cout = chs[i], chs[i + 1]
        key, k0, k1, k2, k3, k4, k5 = jax.random.split(key, 7)
        params.append(dict(
            up_w=jax.random.normal(k0, (cin, cout, 2, 2), jnp.float32) * 0.05,
            up_b=jax.random.normal(k1, (cout,), jnp.float32) * 0.05,
            c1_w=jax.random.normal(k2, (cout, cin, 2, 2), jnp.float32) * 0.05,
            c1_b=jax.random.normal(k3, (cout,), jnp.float32) * 0.05,
            c2_w=jax.random.normal(k4, (cout, cout, 2, 2), jnp.float32) * 0.05,
            c2_b=jax.random.normal(k5, (cout,), jnp.float32) * 0.05,
        ))
    return params


if __name__ == "__main__":
    key = jax.random.PRNGKey(0)
    chs = (32, 16, 8)          # small stand-in for (1024, 512, 256, 128, 64)
    kx, kp, ke0, ke1 = jax.random.split(key, 4)

    params = init_params(kp, chs)
    x = jax.random.normal(kx, (2, chs[0], 4, 4), jnp.float32)
    encoder_features = [
        jax.random.normal(ke0, (2, chs[1], 10, 10), jnp.float32),
        jax.random.normal(ke1, (2, chs[2], 14, 14), jnp.float32),
    ]

    run = jax.jit(lambda p, xx, encs: decoder_forward(p, xx, encs, matmul_bias_act))
    out = jax.block_until_ready(run(params, x, encoder_features))

    ref = decoder_forward(params, x, encoder_features, _mm_ref)
    assert out.shape == (2, chs[-1], 10, 10), out.shape
    assert out.dtype == jnp.float32, out.dtype
    # bf16 operands / bf16 inter-layer activations -> loosened tolerance
    assert jnp.allclose(out, ref, atol=5e-2, rtol=5e-2), (
        f"mismatch vs reference, max abs err {jnp.max(jnp.abs(out - ref))}")
    print("KERNEL_OK")
</pallas_src>

<mosaic_0001>
module attributes {stable_mosaic.version = 11 : i64} {
  func.func @kernel(%arg0: i32, %arg1: i32, %arg2: memref<32x128xbf16, #tpu.memory_space<vmem>>, %arg3: memref<128x128xbf16, #tpu.memory_space<vmem>>, %arg4: memref<1x128xf32, #tpu.memory_space<vmem>>, %arg5: memref<32x128xbf16, #tpu.memory_space<vmem>>, %arg6: memref<32x128xf32, #tpu.memory_space<vmem>>) attributes {dimension_semantics = [#tpu.dimension_semantics<parallel>, #tpu.dimension_semantics<arbitrary>], iteration_bounds = array<i64: 1, 1>, scalar_prefetch = 0 : i64, scratch_operands = 1 : i64, tpu.core_type = #tpu.core_type<tc>, window_params = [{transform_indices = @transform_0, window_bounds = array<i64: 32, 128>}, {transform_indices = @transform_1, window_bounds = array<i64: 128, 128>}, {pipeline_mode = #tpu.pipeline_mode<synchronous>, transform_indices = @transform_2, window_bounds = array<i64: 1, 128>}, {transform_indices = @transform_3, window_bounds = array<i64: 32, 128>}]} {
    %c0_i32 = arith.constant 0 : i32
    %0 = arith.cmpi eq, %arg1, %c0_i32 : i32
    %1 = arith.extui %0 : i1 to i32
    %c0_i32_0 = arith.constant 0 : i32
    %2 = arith.cmpi ne, %1, %c0_i32_0 : i32
    scf.if %2 {
      %cst_10 = arith.constant 0.000000e+00 : f32
      %12 = vector.broadcast %cst_10 : f32 to vector<32x128xf32>
      %c0_11 = arith.constant 0 : index
      %c0_12 = arith.constant 0 : index
      %13 = vector.load %arg6[%c0_11, %c0_12] : memref<32x128xf32, #tpu.memory_space<vmem>>, vector<32x128xf32>
      tpu.vector_store %arg6[%c0_11, %c0_12], %12 {strides = array<i32>} : memref<32x128xf32, #tpu.memory_space<vmem>>, vector<32x128xf32>,
    } else {
    }
    %c0 = arith.constant 0 : index
    %c0_1 = arith.constant 0 : index
    %3 = vector.load %arg6[%c0, %c0_1] : memref<32x128xf32, #tpu.memory_space<vmem>>, vector<32x128xf32>
    %c0_2 = arith.constant 0 : index
    %c0_3 = arith.constant 0 : index
    %4 = vector.load %arg2[%c0_2, %c0_3] : memref<32x128xbf16, #tpu.memory_space<vmem>>, vector<32x128xbf16>
    %c0_4 = arith.constant 0 : index
    %c0_5 = arith.constant 0 : index
    %5 = vector.load %arg3[%c0_4, %c0_5] : memref<128x128xbf16, #tpu.memory_space<vmem>>, vector<128x128xbf16>
    %cst = arith.constant dense<0.000000e+00> : vector<32x128xf32>
    %6 = tpu.matmul %4, %5, %cst {dimension_numbers = #tpu.dot_dimension_numbers<[1], [0], [0], [1], [0, 0, 1, 1], [], []>} : vector<32x128xbf16>, vector<128x128xbf16>, vector<32x128xf32> -> vector<32x128xf32>
    %7 = arith.addf %3, %6 : vector<32x128xf32>
    %c0_6 = arith.constant 0 : index
    %c0_7 = arith.constant 0 : index
    %8 = vector.load %arg6[%c0_6, %c0_7] : memref<32x128xf32, #tpu.memory_space<vmem>>, vector<32x128xf32>
    tpu.vector_store %arg6[%c0_6, %c0_7], %7 {strides = array<i32>} : memref<32x128xf32, #tpu.memory_space<vmem>>, vector<32x128xf32>,
    %c0_i32_8 = arith.constant 0 : i32
    %9 = arith.cmpi eq, %arg1, %c0_i32_8 : i32
    %10 = arith.extui %9 : i1 to i32
    %c0_i32_9 = arith.constant 0 : i32
    %11 = arith.cmpi ne, %10, %c0_i32_9 : i32
    scf.if %11 {
      %c0_10 = arith.constant 0 : index
      %c0_11 = arith.constant 0 : index
      %12 = vector.load %arg6[%c0_10, %c0_11] : memref<32x128xf32, #tpu.memory_space<vmem>>, vector<32x128xf32>
      %c0_12 = arith.constant 0 : index
      %c0_13 = arith.constant 0 : index
      %13 = vector.load %arg4[%c0_12, %c0_13] : memref<1x128xf32, #tpu.memory_space<vmem>>, vector<1x128xf32>
      %14 = vector.broadcast %13 : vector<1x128xf32> to vector<32x128xf32>
      %15 = arith.addf %12, %14 : vector<32x128xf32>
      %16 = arith.truncf %15 : vector<32x128xf32> to vector<32x128xbf16>
      %c0_14 = arith.constant 0 : index
      %c0_15 = arith.constant 0 : index
      %17 = vector.load %arg5[%c0_14, %c0_15] : memref<32x128xbf16, #tpu.memory_space<vmem>>, vector<32x128xbf16>
      tpu.vector_store %arg5[%c0_14, %c0_15], %16 {strides = array<i32>} : memref<32x128xbf16, #tpu.memory_space<vmem>>, vector<32x128xbf16>,
    } else {
    }
    return
  }
  func.func @transform_0(%arg0: i32, %arg1: i32) -> (i32, i32) {
    %c0_i32 = arith.constant 0 : i32
    return %arg0, %arg1 : i32, i32
  }
  func.func @transform_1(%arg0: i32, %arg1: i32) -> (i32, i32) {
    %c0_i32 = arith.constant 0 : i32
    %c0_i32_0 = arith.constant 0 : i32
    return %arg1, %c0_i32 : i32, i32
  }
  func.func @transform_2(%arg0: i32, %arg1: i32) -> (i32, i32) {
    %c0_i32 = arith.constant 0 : i32
    %c0_i32_0 = arith.constant 0 : i32
    %c0_i32_1 = arith.constant 0 : i32
    return %c0_i32, %c0_i32_0 : i32, i32
  }
  func.func @transform_3(%arg0: i32, %arg1: i32) -> (i32, i32) {
    %c0_i32 = arith.constant 0 : i32
    %c0_i32_0 = arith.constant 0 : i32
    return %arg0, %c0_i32 : i32, i32
  }
}

module attributes {stable_mosaic.version = 11 : i64} {
  func.func @kernel(%arg0: i32, %arg1: i32, %arg2: memref<112x128xbf16, #tpu.memory_space<vmem>>, %arg3: memref<128x128xbf16, #tpu.memory_space<vmem>>, %arg4: memref<112x128xbf16, #tpu.memory_space<vmem>>, %arg5: memref<128x128xbf16, #tpu.memory_space<vmem>>, %arg6: memref<1x128xf32, #tpu.memory_space<vmem>>, %arg7: memref<112x128xbf16, #tpu.memory_space<vmem>>, %arg8: memref<112x128xf32, #tpu.memory_space<vmem>>) attributes {dimension_semantics = [#tpu.dimension_semantics<parallel>, #tpu.dimension_semantics<arbitrary>], iteration_bounds = array<i64: 1, 1>, scalar_prefetch = 0 : i64, scratch_operands = 1 : i64, tpu.core_type = #tpu.core_type<tc>, window_params = [{transform_indices = @transform_0, window_bounds = array<i64: 112, 128>}, {transform_indices = @transform_1, window_bounds = array<i64: 128, 128>}, {transform_indices = @transform_2, window_bounds = array<i64: 112, 128>}, {transform_indices = @transform_3, window_bounds = array<i64: 128, 128>}, {pipeline_mode = #tpu.pipeline_mode<synchronous>, transform_indices = @transform_4, window_bounds = array<i64: 1, 128>}, {transform_indices = @transform_5, window_bounds = array<i64: 112, 128>}]} {
    %c0_i32 = arith.constant 0 : i32
    %0 = arith.cmpi eq, %arg1, %c0_i32 : i32
    %1 = arith.extui %0 : i1 to i32
    %c0_i32_0 = arith.constant 0 : i32
    %2 = arith.cmpi ne, %1, %c0_i32_0 : i32
    scf.if %2 {
      %cst_15 = arith.constant 0.000000e+00 : f32
      %16 = vector.broadcast %cst_15 : f32 to vector<112x128xf32>
      %c0_16 = arith.constant 0 : index
      %c0_17 = arith.constant 0 : index
      %17 = vector.load %arg8[%c0_16, %c0_17] : memref<112x128xf32, #tpu.memory_space<vmem>>, vector<112x128xf32>
      tpu.vector_store %arg8[%c0_16, %c0_17], %16 {strides = array<i32>} : memref<112x128xf32, #tpu.memory_space<vmem>>, vector<112x128xf32>,
    } else {
    }
    %c0 = arith.constant 0 : index
    %c0_1 = arith.constant 0 : index
    %3 = vector.load %arg8[%c0, %c0_1] : memref<112x128xf32, #tpu.memory_space<vmem>>, vector<112x128xf32>
    %c0_2 = arith.constant 0 : index
    %c0_3 = arith.constant 0 : index
    %4 = vector.load %arg2[%c0_2, %c0_3] : memref<112x128xbf16, #tpu.memory_space<vmem>>, vector<112x128xbf16>
    %c0_4 = arith.constant 0 : index
    %c0_5 = arith.constant 0 : index
    %5 = vector.load %arg3[%c0_4, %c0_5] : memref<128x128xbf16, #tpu.memory_space<vmem>>, vector<128x128xbf16>
    %cst = arith.constant dense<0.000000e+00> : vector<112x128xf32>
    %6 = tpu.matmul %4, %5, %cst {dimension_numbers = #tpu.dot_dimension_numbers<[1], [0], [0], [1], [0, 0, 1, 1], [], []>} : vector<112x128xbf16>, vector<128x128xbf16>, vector<112x128xf32> -> vector<112x128xf32>
    %7 = arith.addf %3, %6 : vector<112x128xf32>
    %c0_6 = arith.constant 0 : index
    %c0_7 = arith.constant 0 : index
    %8 = vector.load %arg4[%c0_6, %c0_7] : memref<112x128xbf16, #tpu.memory_space<vmem>>, vector<112x128xbf16>
    %c0_8 = arith.constant 0 : index
    %c0_9 = arith.constant 0 : index
    %9 = vector.load %arg5[%c0_8, %c0_9] : memref<128x128xbf16, #tpu.memory_space<vmem>>, vector<128x128xbf16>
    %cst_10 = arith.constant dense<0.000000e+00> : vector<112x128xf32>
    %10 = tpu.matmul %8, %9, %cst_10 {dimension_numbers = #tpu.dot_dimension_numbers<[1], [0], [0], [1], [0, 0, 1, 1], [], []>} : vector<112x128xbf16>, vector<128x128xbf16>, vector<112x128xf32> -> vector<112x128xf32>
    %11 = arith.addf %7, %10 : vector<112x128xf32>
    %c0_11 = arith.constant 0 : index
    %c0_12 = arith.constant 0 : index
    %12 = vector.load %arg8[%c0_11, %c0_12] : memref<112x128xf32, #tpu.memory_space<vmem>>, vector<112x128xf32>
    tpu.vector_store %arg8[%c0_11, %c0_12], %11 {strides = array<i32>} : memref<112x128xf32, #tpu.memory_space<vmem>>, vector<112x128xf32>,
    %c0_i32_13 = arith.constant 0 : i32
    %13 = arith.cmpi eq, %arg1, %c0_i32_13 : i32
    %14 = arith.extui %13 : i1 to i32
    %c0_i32_14 = arith.constant 0 : i32
    %15 = arith.cmpi ne, %14, %c0_i32_14 : i32
    scf.if %15 {
      %c0_15 = arith.constant 0 : index
      %c0_16 = arith.constant 0 : index
      %16 = vector.load %arg8[%c0_15, %c0_16] : memref<112x128xf32, #tpu.memory_space<vmem>>, vector<112x128xf32>
      %c0_17 = arith.constant 0 : index
      %c0_18 = arith.constant 0 : index
      %17 = vector.load %arg6[%c0_17, %c0_18] : memref<1x128xf32, #tpu.memory_space<vmem>>, vector<1x128xf32>
      %18 = vector.broadcast %17 : vector<1x128xf32> to vector<112x128xf32>
      %19 = arith.addf %16, %18 : vector<112x128xf32>
      %cst_19 = arith.constant 0.000000e+00 : f32
      %20 = vector.broadcast %cst_19 : f32 to vector<112x128xf32>
      %21 = arith.maximumf %19, %20 : vector<112x128xf32>
      %22 = arith.truncf %21 : vector<112x128xf32> to vector<112x128xbf16>
      %c0_20 = arith.constant 0 : index
      %c0_21 = arith.constant 0 : index
      %23 = vector.load %arg7[%c0_20, %c0_21] : memref<112x128xbf16, #tpu.memory_space<vmem>>, vector<112x128xbf16>
      tpu.vector_store %arg7[%c0_20, %c0_21], %22 {strides = array<i32>} : memref<112x128xbf16, #tpu.memory_space<vmem>>, vector<112x128xbf16>,
    } else {
    }
    return
  }
  func.func @transform_0(%arg0: i32, %arg1: i32) -> (i32, i32) {
    %c0_i32 = arith.constant 0 : i32
    return %arg0, %arg1 : i32, i32
  }
  func.func @transform_1(%arg0: i32, %arg1: i32) -> (i32, i32) {
    %c0_i32 = arith.constant 0 : i32
    %c0_i32_0 = arith.constant 0 : i32
    return %arg1, %c0_i32 : i32, i32
  }
  func.func @transform_2(%arg0: i32, %arg1: i32) -> (i32, i32) {
    %c0_i32 = arith.constant 0 : i32
    return %arg0, %arg1 : i32, i32
  }
  func.func @transform_3(%arg0: i32, %arg1: i32) -> (i32, i32) {
    %c0_i32 = arith.constant 0 : i32
    %c0_i32_0 = arith.constant 0 : i32
    return %arg1, %c0_i32 : i32, i32
  }
  func.func @transform_4(%arg0: i32, %arg1: i32) -> (i32, i32) {
    %c0_i32 = arith.constant 0 : i32
    %c0_i32_0 = arith.constant 0 : i32
    %c0_i32_1 = arith.constant 0 : i32
    return %c0_i32, %c0_i32_0 : i32, i32
  }
  func.func @transform_5(%arg0: i32, %arg1: i32) -> (i32, i32) {
    %c0_i32 = arith.constant 0 : i32
    %c0_i32_0 = arith.constant 0 : i32
    return %arg0, %c0_i32 : i32, i32
  }
}

module attributes {stable_mosaic.version = 11 : i64} {
  func.func @kernel(%arg0: i32, %arg1: i32, %arg2: memref<80x128xbf16, #tpu.memory_space<vmem>>, %arg3: memref<128x128xbf16, #tpu.memory_space<vmem>>, %arg4: memref<1x128xf32, #tpu.memory_space<vmem>>, %arg5: memref<80x128xbf16, #tpu.memory_space<vmem>>, %arg6: memref<80x128xf32, #tpu.memory_space<vmem>>) attributes {dimension_semantics = [#tpu.dimension_semantics<parallel>, #tpu.dimension_semantics<arbitrary>], iteration_bounds = array<i64: 1, 1>, scalar_prefetch = 0 : i64, scratch_operands = 1 : i64, tpu.core_type = #tpu.core_type<tc>, window_params = [{transform_indices = @transform_0, window_bounds = array<i64: 80, 128>}, {transform_indices = @transform_1, window_bounds = array<i64: 128, 128>}, {pipeline_mode = #tpu.pipeline_mode<synchronous>, transform_indices = @transform_2, window_bounds = array<i64: 1, 128>}, {transform_indices = @transform_3, window_bounds = array<i64: 80, 128>}]} {
    %c0_i32 = arith.constant 0 : i32
    %0 = arith.cmpi eq, %arg1, %c0_i32 : i32
    %1 = arith.extui %0 : i1 to i32
    %c0_i32_0 = arith.constant 0 : i32
    %2 = arith.cmpi ne, %1, %c0_i32_0 : i32
    scf.if %2 {
      %cst_10 = arith.constant 0.000000e+00 : f32
      %12 = vector.broadcast %cst_10 : f32 to vector<80x128xf32>
      %c0_11 = arith.constant 0 : index
      %c0_12 = arith.constant 0 : index
      %13 = vector.load %arg6[%c0_11, %c0_12] : memref<80x128xf32, #tpu.memory_space<vmem>>, vector<80x128xf32>
      tpu.vector_store %arg6[%c0_11, %c0_12], %12 {strides = array<i32>} : memref<80x128xf32, #tpu.memory_space<vmem>>, vector<80x128xf32>,
    } else {
    }
    %c0 = arith.constant 0 : index
    %c0_1 = arith.constant 0 : index
    %3 = vector.load %arg6[%c0, %c0_1] : memref<80x128xf32, #tpu.memory_space<vmem>>, vector<80x128xf32>
    %c0_2 = arith.constant 0 : index
    %c0_3 = arith.constant 0 : index
    %4 = vector.load %arg2[%c0_2, %c0_3] : memref<80x128xbf16, #tpu.memory_space<vmem>>, vector<80x128xbf16>
    %c0_4 = arith.constant 0 : index
    %c0_5 = arith.constant 0 : index
    %5 = vector.load %arg3[%c0_4, %c0_5] : memref<128x128xbf16, #tpu.memory_space<vmem>>, vector<128x128xbf16>
    %cst = arith.constant dense<0.000000e+00> : vector<80x128xf32>
    %6 = tpu.matmul %4, %5, %cst {dimension_numbers = #tpu.dot_dimension_numbers<[1], [0], [0], [1], [0, 0, 1, 1], [], []>} : vector<80x128xbf16>, vector<128x128xbf16>, vector<80x128xf32> -> vector<80x128xf32>
    %7 = arith.addf %3, %6 : vector<80x128xf32>
    %c0_6 = arith.constant 0 : index
    %c0_7 = arith.constant 0 : index
    %8 = vector.load %arg6[%c0_6, %c0_7] : memref<80x128xf32, #tpu.memory_space<vmem>>, vector<80x128xf32>
    tpu.vector_store %arg6[%c0_6, %c0_7], %7 {strides = array<i32>} : memref<80x128xf32, #tpu.memory_space<vmem>>, vector<80x128xf32>,
    %c0_i32_8 = arith.constant 0 : i32
    %9 = arith.cmpi eq, %arg1, %c0_i32_8 : i32
    %10 = arith.extui %9 : i1 to i32
    %c0_i32_9 = arith.constant 0 : i32
    %11 = arith.cmpi ne, %10, %c0_i32_9 : i32
    scf.if %11 {
      %c0_10 = arith.constant 0 : index
      %c0_11 = arith.constant 0 : index
      %12 = vector.load %arg6[%c0_10, %c0_11] : memref<80x128xf32, #tpu.memory_space<vmem>>, vector<80x128xf32>
      %c0_12 = arith.constant 0 : index
      %c0_13 = arith.constant 0 : index
      %13 = vector.load %arg4[%c0_12, %c0_13] : memref<1x128xf32, #tpu.memory_space<vmem>>, vector<1x128xf32>
      %14 = vector.broadcast %13 : vector<1x128xf32> to vector<80x128xf32>
      %15 = arith.addf %12, %14 : vector<80x128xf32>
      %cst_14 = arith.constant 0.000000e+00 : f32
      %16 = vector.broadcast %cst_14 : f32 to vector<80x128xf32>
      %17 = arith.maximumf %15, %16 : vector<80x128xf32>
      %18 = arith.truncf %17 : vector<80x128xf32> to vector<80x128xbf16>
      %c0_15 = arith.constant 0 : index
      %c0_16 = arith.constant 0 : index
      %19 = vector.load %arg5[%c0_15, %c0_16] : memref<80x128xbf16, #tpu.memory_space<vmem>>, vector<80x128xbf16>
      tpu.vector_store %arg5[%c0_15, %c0_16], %18 {strides = array<i32>} : memref<80x128xbf16, #tpu.memory_space<vmem>>, vector<80x128xbf16>,
    } else {
    }
    return
  }
  func.func @transform_0(%arg0: i32, %arg1: i32) -> (i32, i32) {
    %c0_i32 = arith.constant 0 : i32
    return %arg0, %arg1 : i32, i32
  }
  func.func @transform_1(%arg0: i32, %arg1: i32) -> (i32, i32) {
    %c0_i32 = arith.constant 0 : i32
    %c0_i32_0 = arith.constant 0 : i32
    return %arg1, %c0_i32 : i32, i32
  }
  func.func @transform_2(%arg0: i32, %arg1: i32) -> (i32, i32) {
    %c0_i32 = arith.constant 0 : i32
    %c0_i32_0 = arith.constant 0 : i32
    %c0_i32_1 = arith.constant 0 : i32
    return %c0_i32, %c0_i32_0 : i32, i32
  }
  func.func @transform_3(%arg0: i32, %arg1: i32) -> (i32, i32) {
    %c0_i32 = arith.constant 0 : i32
    %c0_i32_0 = arith.constant 0 : i32
    return %arg0, %c0_i32 : i32, i32
  }
}

module attributes {stable_mosaic.version = 11 : i64} {
  func.func @kernel(%arg0: i32, %arg1: i32, %arg2: memref<80x128xbf16, #tpu.memory_space<vmem>>, %arg3: memref<128x128xbf16, #tpu.memory_space<vmem>>, %arg4: memref<1x128xf32, #tpu.memory_space<vmem>>, %arg5: memref<80x128xbf16, #tpu.memory_space<vmem>>, %arg6: memref<80x128xf32, #tpu.memory_space<vmem>>) attributes {dimension_semantics = [#tpu.dimension_semantics<parallel>, #tpu.dimension_semantics<arbitrary>], iteration_bounds = array<i64: 1, 1>, scalar_prefetch = 0 : i64, scratch_operands = 1 : i64, tpu.core_type = #tpu.core_type<tc>, window_params = [{transform_indices = @transform_0, window_bounds = array<i64: 80, 128>}, {transform_indices = @transform_1, window_bounds = array<i64: 128, 128>}, {pipeline_mode = #tpu.pipeline_mode<synchronous>, transform_indices = @transform_2, window_bounds = array<i64: 1, 128>}, {transform_indices = @transform_3, window_bounds = array<i64: 80, 128>}]} {
    %c0_i32 = arith.constant 0 : i32
    %0 = arith.cmpi eq, %arg1, %c0_i32 : i32
    %1 = arith.extui %0 : i1 to i32
    %c0_i32_0 = arith.constant 0 : i32
    %2 = arith.cmpi ne, %1, %c0_i32_0 : i32
    scf.if %2 {
      %cst_10 = arith.constant 0.000000e+00 : f32
      %12 = vector.broadcast %cst_10 : f32 to vector<80x128xf32>
      %c0_11 = arith.constant 0 : index
      %c0_12 = arith.constant 0 : index
      %13 = vector.load %arg6[%c0_11, %c0_12] : memref<80x128xf32, #tpu.memory_space<vmem>>, vector<80x128xf32>
      tpu.vector_store %arg6[%c0_11, %c0_12], %12 {strides = array<i32>} : memref<80x128xf32, #tpu.memory_space<vmem>>, vector<80x128xf32>,
    } else {
    }
    %c0 = arith.constant 0 : index
    %c0_1 = arith.constant 0 : index
    %3 = vector.load %arg6[%c0, %c0_1] : memref<80x128xf32, #tpu.memory_space<vmem>>, vector<80x128xf32>
    %c0_2 = arith.constant 0 : index
    %c0_3 = arith.constant 0 : index
    %4 = vector.load %arg2[%c0_2, %c0_3] : memref<80x128xbf16, #tpu.memory_space<vmem>>, vector<80x128xbf16>
    %c0_4 = arith.constant 0 : index
    %c0_5 = arith.constant 0 : index
    %5 = vector.load %arg3[%c0_4, %c0_5] : memref<128x128xbf16, #tpu.memory_space<vmem>>, vector<128x128xbf16>
    %cst = arith.constant dense<0.000000e+00> : vector<80x128xf32>
    %6 = tpu.matmul %4, %5, %cst {dimension_numbers = #tpu.dot_dimension_numbers<[1], [0], [0], [1], [0, 0, 1, 1], [], []>} : vector<80x128xbf16>, vector<128x128xbf16>, vector<80x128xf32> -> vector<80x128xf32>
    %7 = arith.addf %3, %6 : vector<80x128xf32>
    %c0_6 = arith.constant 0 : index
    %c0_7 = arith.constant 0 : index
    %8 = vector.load %arg6[%c0_6, %c0_7] : memref<80x128xf32, #tpu.memory_space<vmem>>, vector<80x128xf32>
    tpu.vector_store %arg6[%c0_6, %c0_7], %7 {strides = array<i32>} : memref<80x128xf32, #tpu.memory_space<vmem>>, vector<80x128xf32>,
    %c0_i32_8 = arith.constant 0 : i32
    %9 = arith.cmpi eq, %arg1, %c0_i32_8 : i32
    %10 = arith.extui %9 : i1 to i32
    %c0_i32_9 = arith.constant 0 : i32
    %11 = arith.cmpi ne, %10, %c0_i32_9 : i32
    scf.if %11 {
      %c0_10 = arith.constant 0 : index
      %c0_11 = arith.constant 0 : index
      %12 = vector.load %arg6[%c0_10, %c0_11] : memref<80x128xf32, #tpu.memory_space<vmem>>, vector<80x128xf32>
      %c0_12 = arith.constant 0 : index
      %c0_13 = arith.constant 0 : index
      %13 = vector.load %arg4[%c0_12, %c0_13] : memref<1x128xf32, #tpu.memory_space<vmem>>, vector<1x128xf32>
      %14 = vector.broadcast %13 : vector<1x128xf32> to vector<80x128xf32>
      %15 = arith.addf %12, %14 : vector<80x128xf32>
      %16 = arith.truncf %15 : vector<80x128xf32> to vector<80x128xbf16>
      %c0_14 = arith.constant 0 : index
      %c0_15 = arith.constant 0 : index
      %17 = vector.load %arg5[%c0_14, %c0_15] : memref<80x128xbf16, #tpu.memory_space<vmem>>, vector<80x128xbf16>
      tpu.vector_store %arg5[%c0_14, %c0_15], %16 {strides = array<i32>} : memref<80x128xbf16, #tpu.memory_space<vmem>>, vector<80x128xbf16>,
    } else {
    }
    return
  }
  func.func @transform_0(%arg0: i32, %arg1: i32) -> (i32, i32) {
    %c0_i32 = arith.constant 0 : i32
    return %arg0, %arg1 : i32, i32
  }
  func.func @transform_1(%arg0: i32, %arg1: i32) -> (i32, i32) {
    %c0_i32 = arith.constant 0 : i32
    %c0_i32_0 = arith.constant 0 : i32
    return %arg1, %c0_i32 : i32, i32
  }
  func.func @transform_2(%arg0: i32, %arg1: i32) -> (i32, i32) {
    %c0_i32 = arith.constant 0 : i32
    %c0_i32_0 = arith.constant 0 : i32
    %c0_i32_1 = arith.constant 0 : i32
    return %c0_i32, %c0_i32_0 : i32, i32
  }
  func.func @transform_3(%arg0: i32, %arg1: i32) -> (i32, i32) {
    %c0_i32 = arith.constant 0 : i32
    %c0_i32_0 = arith.constant 0 : i32
    return %arg0, %c0_i32 : i32, i32
  }
}

module attributes {stable_mosaic.version = 11 : i64} {
  func.func @kernel(%arg0: i32, %arg1: i32, %arg2: memref<256x128xbf16, #tpu.memory_space<vmem>>, %arg3: memref<128x128xbf16, #tpu.memory_space<vmem>>, %arg4: memref<256x128xbf16, #tpu.memory_space<vmem>>, %arg5: memref<128x128xbf16, #tpu.memory_space<vmem>>, %arg6: memref<1x128xf32, #tpu.memory_space<vmem>>, %arg7: memref<256x128xbf16, #tpu.memory_space<vmem>>, %arg8: memref<256x128xf32, #tpu.memory_space<vmem>>) attributes {dimension_semantics = [#tpu.dimension_semantics<parallel>, #tpu.dimension_semantics<arbitrary>], iteration_bounds = array<i64: 1, 1>, scalar_prefetch = 0 : i64, scratch_operands = 1 : i64, tpu.core_type = #tpu.core_type<tc>, window_params = [{transform_indices = @transform_0, window_bounds = array<i64: 256, 128>}, {transform_indices = @transform_1, window_bounds = array<i64: 128, 128>}, {transform_indices = @transform_2, window_bounds = array<i64: 256, 128>}, {transform_indices = @transform_3, window_bounds = array<i64: 128, 128>}, {pipeline_mode = #tpu.pipeline_mode<synchronous>, transform_indices = @transform_4, window_bounds = array<i64: 1, 128>}, {transform_indices = @transform_5, window_bounds = array<i64: 256, 128>}]} {
    %c0_i32 = arith.constant 0 : i32
    %0 = arith.cmpi eq, %arg1, %c0_i32 : i32
    %1 = arith.extui %0 : i1 to i32
    %c0_i32_0 = arith.constant 0 : i32
    %2 = arith.cmpi ne, %1, %c0_i32_0 : i32
    scf.if %2 {
      %cst_15 = arith.constant 0.000000e+00 : f32
      %16 = vector.broadcast %cst_15 : f32 to vector<256x128xf32>
      %c0_16 = arith.constant 0 : index
      %c0_17 = arith.constant 0 : index
      %17 = vector.load %arg8[%c0_16, %c0_17] : memref<256x128xf32, #tpu.memory_space<vmem>>, vector<256x128xf32>
      tpu.vector_store %arg8[%c0_16, %c0_17], %16 {strides = array<i32>} : memref<256x128xf32, #tpu.memory_space<vmem>>, vector<256x128xf32>,
    } else {
    }
    %c0 = arith.constant 0 : index
    %c0_1 = arith.constant 0 : index
    %3 = vector.load %arg8[%c0, %c0_1] : memref<256x128xf32, #tpu.memory_space<vmem>>, vector<256x128xf32>
    %c0_2 = arith.constant 0 : index
    %c0_3 = arith.constant 0 : index
    %4 = vector.load %arg2[%c0_2, %c0_3] : memref<256x128xbf16, #tpu.memory_space<vmem>>, vector<256x128xbf16>
    %c0_4 = arith.constant 0 : index
    %c0_5 = arith.constant 0 : index
    %5 = vector.load %arg3[%c0_4, %c0_5] : memref<128x128xbf16, #tpu.memory_space<vmem>>, vector<128x128xbf16>
    %cst = arith.constant dense<0.000000e+00> : vector<256x128xf32>
    %6 = tpu.matmul %4, %5, %cst {dimension_numbers = #tpu.dot_dimension_numbers<[1], [0], [0], [1], [0, 0, 1, 1], [], []>} : vector<256x128xbf16>, vector<128x128xbf16>, vector<256x128xf32> -> vector<256x128xf32>
    %7 = arith.addf %3, %6 : vector<256x128xf32>
    %c0_6 = arith.constant 0 : index
    %c0_7 = arith.constant 0 : index
    %8 = vector.load %arg4[%c0_6, %c0_7] : memref<256x128xbf16, #tpu.memory_space<vmem>>, vector<256x128xbf16>
    %c0_8 = arith.constant 0 : index
    %c0_9 = arith.constant 0 : index
    %9 = vector.load %arg5[%c0_8, %c0_9] : memref<128x128xbf16, #tpu.memory_space<vmem>>, vector<128x128xbf16>
    %cst_10 = arith.constant dense<0.000000e+00> : vector<256x128xf32>
    %10 = tpu.matmul %8, %9, %cst_10 {dimension_numbers = #tpu.dot_dimension_numbers<[1], [0], [0], [1], [0, 0, 1, 1], [], []>} : vector<256x128xbf16>, vector<128x128xbf16>, vector<256x128xf32> -> vector<256x128xf32>
    %11 = arith.addf %7, %10 : vector<256x128xf32>
    %c0_11 = arith.constant 0 : index
    %c0_12 = arith.constant 0 : index
    %12 = vector.load %arg8[%c0_11, %c0_12] : memref<256x128xf32, #tpu.memory_space<vmem>>, vector<256x128xf32>
    tpu.vector_store %arg8[%c0_11, %c0_12], %11 {strides = array<i32>} : memref<256x128xf32, #tpu.memory_space<vmem>>, vector<256x128xf32>,
    %c0_i32_13 = arith.constant 0 : i32
    %13 = arith.cmpi eq, %arg1, %c0_i32_13 : i32
    %14 = arith.extui %13 : i1 to i32
    %c0_i32_14 = arith.constant 0 : i32
    %15 = arith.cmpi ne, %14, %c0_i32_14 : i32
    scf.if %15 {
      %c0_15 = arith.constant 0 : index
      %c0_16 = arith.constant 0 : index
      %16 = vector.load %arg8[%c0_15, %c0_16] : memref<256x128xf32, #tpu.memory_space<vmem>>, vector<256x128xf32>
      %c0_17 = arith.constant 0 : index
      %c0_18 = arith.constant 0 : index
      %17 = vector.load %arg6[%c0_17, %c0_18] : memref<1x128xf32, #tpu.memory_space<vmem>>, vector<1x128xf32>
      %18 = vector.broadcast %17 : vector<1x128xf32> to vector<256x128xf32>
      %19 = arith.addf %16, %18 : vector<256x128xf32>
      %cst_19 = arith.constant 0.000000e+00 : f32
      %20 = vector.broadcast %cst_19 : f32 to vector<256x128xf32>
      %21 = arith.maximumf %19, %20 : vector<256x128xf32>
      %22 = arith.truncf %21 : vector<256x128xf32> to vector<256x128xbf16>
      %c0_20 = arith.constant 0 : index
      %c0_21 = arith.constant 0 : index
      %23 = vector.load %arg7[%c0_20, %c0_21] : memref<256x128xbf16, #tpu.memory_space<vmem>>, vector<256x128xbf16>
      tpu.vector_store %arg7[%c0_20, %c0_21], %22 {strides = array<i32>} : memref<256x128xbf16, #tpu.memory_space<vmem>>, vector<256x128xbf16>,
    } else {
    }
    return
  }
  func.func @transform_0(%arg0: i32, %arg1: i32) -> (i32, i32) {
    %c0_i32 = arith.constant 0 : i32
    return %arg0, %arg1 : i32, i32
  }
  func.func @transform_1(%arg0: i32, %arg1: i32) -> (i32, i32) {
    %c0_i32 = arith.constant 0 : i32
    %c0_i32_0 = arith.constant 0 : i32
    return %arg1, %c0_i32 : i32, i32
  }
  func.func @transform_2(%arg0: i32, %arg1: i32) -> (i32, i32) {
    %c0_i32 = arith.constant 0 : i32
    return %arg0, %arg1 : i32, i32
  }
  func.func @transform_3(%arg0: i32, %arg1: i32) -> (i32, i32) {
    %c0_i32 = arith.constant 0 : i32
    %c0_i32_0 = arith.constant 0 : i32
    return %arg1, %c0_i32 : i32, i32
  }
  func.func @transform_4(%arg0: i32, %arg1: i32) -> (i32, i32) {
    %c0_i32 = arith.constant 0 : i32
    %c0_i32_0 = arith.constant 0 : i32
    %c0_i32_1 = arith.constant 0 : i32
    return %c0_i32, %c0_i32_0 : i32, i32
  }
  func.func @transform_5(%arg0: i32, %arg1: i32) -> (i32, i32) {
    %c0_i32 = arith.constant 0 : i32
    %c0_i32_0 = arith.constant 0 : i32
    return %arg0, %c0_i32 : i32, i32
  }
}

module attributes {stable_mosaic.version = 11 : i64} {
  func.func @kernel(%arg0: i32, %arg1: i32, %arg2: memref<208x128xbf16, #tpu.memory_space<vmem>>, %arg3: memref<128x128xbf16, #tpu.memory_space<vmem>>, %arg4: memref<1x128xf32, #tpu.memory_space<vmem>>, %arg5: memref<208x128xf32, #tpu.memory_space<vmem>>, %arg6: memref<208x128xf32, #tpu.memory_space<vmem>>) attributes {dimension_semantics = [#tpu.dimension_semantics<parallel>, #tpu.dimension_semantics<arbitrary>], iteration_bounds = array<i64: 1, 1>, scalar_prefetch = 0 : i64, scratch_operands = 1 : i64, tpu.core_type = #tpu.core_type<tc>, window_params = [{transform_indices = @transform_0, window_bounds = array<i64: 208, 128>}, {transform_indices = @transform_1, window_bounds = array<i64: 128, 128>}, {pipeline_mode = #tpu.pipeline_mode<synchronous>, transform_indices = @transform_2, window_bounds = array<i64: 1, 128>}, {transform_indices = @transform_3, window_bounds = array<i64: 208, 128>}]} {
    %c0_i32 = arith.constant 0 : i32
    %0 = arith.cmpi eq, %arg1, %c0_i32 : i32
    %1 = arith.extui %0 : i1 to i32
    %c0_i32_0 = arith.constant 0 : i32
    %2 = arith.cmpi ne, %1, %c0_i32_0 : i32
    scf.if %2 {
      %cst_10 = arith.constant 0.000000e+00 : f32
      %12 = vector.broadcast %cst_10 : f32 to vector<208x128xf32>
      %c0_11 = arith.constant 0 : index
      %c0_12 = arith.constant 0 : index
      %13 = vector.load %arg6[%c0_11, %c0_12] : memref<208x128xf32, #tpu.memory_space<vmem>>, vector<208x128xf32>
      tpu.vector_store %arg6[%c0_11, %c0_12], %12 {strides = array<i32>} : memref<208x128xf32, #tpu.memory_space<vmem>>, vector<208x128xf32>,
    } else {
    }
    %c0 = arith.constant 0 : index
    %c0_1 = arith.constant 0 : index
    %3 = vector.load %arg6[%c0, %c0_1] : memref<208x128xf32, #tpu.memory_space<vmem>>, vector<208x128xf32>
    %c0_2 = arith.constant 0 : index
    %c0_3 = arith.constant 0 : index
    %4 = vector.load %arg2[%c0_2, %c0_3] : memref<208x128xbf16, #tpu.memory_space<vmem>>, vector<208x128xbf16>
    %c0_4 = arith.constant 0 : index
    %c0_5 = arith.constant 0 : index
    %5 = vector.load %arg3[%c0_4, %c0_5] : memref<128x128xbf16, #tpu.memory_space<vmem>>, vector<128x128xbf16>
    %cst = arith.constant dense<0.000000e+00> : vector<208x128xf32>
    %6 = tpu.matmul %4, %5, %cst {dimension_numbers = #tpu.dot_dimension_numbers<[1], [0], [0], [1], [0, 0, 1, 1], [], []>} : vector<208x128xbf16>, vector<128x128xbf16>, vector<208x128xf32> -> vector<208x128xf32>
    %7 = arith.addf %3, %6 : vector<208x128xf32>
    %c0_6 = arith.constant 0 : index
    %c0_7 = arith.constant 0 : index
    %8 = vector.load %arg6[%c0_6, %c0_7] : memref<208x128xf32, #tpu.memory_space<vmem>>, vector<208x128xf32>
    tpu.vector_store %arg6[%c0_6, %c0_7], %7 {strides = array<i32>} : memref<208x128xf32, #tpu.memory_space<vmem>>, vector<208x128xf32>,
    %c0_i32_8 = arith.constant 0 : i32
    %9 = arith.cmpi eq, %arg1, %c0_i32_8 : i32
    %10 = arith.extui %9 : i1 to i32
    %c0_i32_9 = arith.constant 0 : i32
    %11 = arith.cmpi ne, %10, %c0_i32_9 : i32
    scf.if %11 {
      %c0_10 = arith.constant 0 : index
      %c0_11 = arith.constant 0 : index
      %12 = vector.load %arg6[%c0_10, %c0_11] : memref<208x128xf32, #tpu.memory_space<vmem>>, vector<208x128xf32>
      %c0_12 = arith.constant 0 : index
      %c0_13 = arith.constant 0 : index
      %13 = vector.load %arg4[%c0_12, %c0_13] : memref<1x128xf32, #tpu.memory_space<vmem>>, vector<1x128xf32>
      %14 = vector.broadcast %13 : vector<1x128xf32> to vector<208x128xf32>
      %15 = arith.addf %12, %14 : vector<208x128xf32>
      %cst_14 = arith.constant 0.000000e+00 : f32
      %16 = vector.broadcast %cst_14 : f32 to vector<208x128xf32>
      %17 = arith.maximumf %15, %16 : vector<208x128xf32>
      %c0_15 = arith.constant 0 : index
      %c0_16 = arith.constant 0 : index
      %18 = vector.load %arg5[%c0_15, %c0_16] : memref<208x128xf32, #tpu.memory_space<vmem>>, vector<208x128xf32>
      tpu.vector_store %arg5[%c0_15, %c0_16], %17 {strides = array<i32>} : memref<208x128xf32, #tpu.memory_space<vmem>>, vector<208x128xf32>,
    } else {
    }
    return
  }
  func.func @transform_0(%arg0: i32, %arg1: i32) -> (i32, i32) {
    %c0_i32 = arith.constant 0 : i32
    return %arg0, %arg1 : i32, i32
  }
  func.func @transform_1(%arg0: i32, %arg1: i32) -> (i32, i32) {
    %c0_i32 = arith.constant 0 : i32
    %c0_i32_0 = arith.constant 0 : i32
    return %arg1, %c0_i32 : i32, i32
  }
  func.func @transform_2(%arg0: i32, %arg1: i32) -> (i32, i32) {
    %c0_i32 = arith.constant 0 : i32
    %c0_i32_0 = arith.constant 0 : i32
    %c0_i32_1 = arith.constant 0 : i32
    return %c0_i32, %c0_i32_0 : i32, i32
  }
  func.func @transform_3(%arg0: i32, %arg1: i32) -> (i32, i32) {
    %c0_i32 = arith.constant 0 : i32
    %c0_i32_0 = arith.constant 0 : i32
    return %arg0, %c0_i32 : i32, i32
  }
}

</mosaic_0001>

<llo_original>
// kernel: tile.13
$region0: #{tile.13}
  #allocation0 [shape = 's32[1]{0}', space=sflag, size = 0x4, scoped, tag = 'scoped memory for tile.13']
  %s0 = inlined_call_operand.vmem [shape: f32[16], index: 0, kind: input, shape index: {}]
  %s1 = inlined_call_operand.vmem [shape: f32[4,16], index: 1, kind: output, shape index: {}]
  // Predicated region
  $region2: #{tile.13} parent=0 // pred_check
    _
  $region3: #{tile.13} parent=0 // pred_check_branch
    %3 = sbr.rel (0) target = $region5
  $region4: #{tile.13} parent=0 // pred_region
    _
  $region5: #{tile.13} parent=0 // pred_fallthru
    _
  %v4 = vld [vmem:[%s0] ss:$0 sm:$0xff]
  %5 = vst [vmem:[%s1] sm:$0xf] %v4

// kernel: tile.14
$region0: #{tile.14}
  %s0 = inlined_call_operand.vmem [shape: f32[4,16], index: 0, kind: input, shape index: {}]
  %s1 = inlined_call_operand.vmem [shape: f32[1,64], index: 1, kind: output, shape index: {}]
  $region1: #{tile.14} parent=0
    #allocation0 [shape = 'u8[4096]{0}', space=vmem, size = 0x1000, scoped, tag = 'scoped mem for output reshape']
    #allocation1 [shape = 'u8[4096]{0}', space=vmem, size = 0x1000, scoped, tag = 'scoped mem for input reshape']
    %s3 = sshllo.u32 0, 4
    %v4 = vld [vmem:[%s0] sm:%s3]
    %5 = vst [vmem:[#allocation1] sm:%s3] %v4
    %v6 = vld [vmem:[#allocation1] sm:$0x1]
    %vm7 = vcmask 130048
    %8 = vst.msk [vmem:[#allocation0] sm:$0x1] %vm7, %v6
    %s9 = scalar_lea.vmem [#allocation1], 3
    %v10 = vld [vmem:[%s9] sm:$0x1]
    %11 = vrot.lane.b32.xlu0 %v10, 48
    %v12 = vpop.permute.xlu0 %11
    %vm13 = vcmask 523648
    %14 = vst.msk [vmem:[#allocation0] sm:$0x1] %vm13, %v12
    %s15 = scalar_lea.vmem [#allocation1], 2
    %v16 = vld [vmem:[%s15] sm:$0x1]
    %17 = vrot.lane.b32.xlu0 %v16, 32
    %v18 = vpop.permute.xlu0 %17
    %vm19 = vcmask 392448
    %20 = vst.msk [vmem:[#allocation0] sm:$0x1] %vm19, %v18
    %s21 = scalar_lea.vmem [#allocation1], 1
    %v22 = vld [vmem:[%s21] sm:$0x1]
    %23 = vrot.lane.b32.xlu0 %v22, 16
    %v24 = vpop.permute.xlu0 %23
    %vm25 = vcmask 261248
    %26 = vst.msk [vmem:[#allocation0] sm:$0x1] %vm25, %v24
    %s28 = sshllo.u32 0, 1
    %v30 = vld [vmem:[#allocation0] sm:%s28]
    %s31 = sshllo.u32 0, 1
    %32 = vst [vmem:[%s1] sm:%s31] %v30

// kernel: _lambda_.6
$region0: #{_lambda_.6}
  #allocation0 [shape = 'u32[]', space=smem, size = 0x4, offset = 0x4, fixed_abs, tag = 'smem constant byte address 0x4 - core index']
  #allocation1 [shape = 'u32[144,128]{1,0:T(1,128)}', space=vmem, size = 0x12000, scoped, tag = 'internal scratch']
  #allocation2 [shape = 'f32[32,128]{1,0:T(8,128)}', space=vmem, size = 0x4000, scoped, tag = 'scratch operand']
  %s0 = inlined_call_operand.vmem [shape: bf16[32,128], index: 0, kind: input, shape index: {}]
  %s1 = inlined_call_operand.vmem [shape: bf16[128,128], index: 1, kind: input, shape index: {}]
  %s2 = inlined_call_operand.vmem [shape: f32[1,128], index: 2, kind: input, shape index: {}]
  %s3 = inlined_call_operand.vmem [shape: bf16[32,128], index: 3, kind: output, shape index: {}]
  %s4 = sld [smem:[#allocation0]]
  $region30: #{_lambda_.6} parent=0
    _
  %s6 = ssub.s32 1, %s4
  %s7 = scalar_select 0, %s6, %s4
  // Predicated region
  $region2: #{_lambda_.6} parent=0 // pred_check
    _
  $region3: #{_lambda_.6} parent=0 // pred_check_branch
    %9 = sbr.rel (0) target = $region5
  $region4: #{_lambda_.6} parent=0 // pred_region
    _
  $region5: #{_lambda_.6} parent=0 // pred_fallthru
    _
  // Predicated region
  $region6: #{_lambda_.6} parent=0 // pred_check
    _
  $region7: #{_lambda_.6} parent=0 // pred_check_branch
    %11 = sbr.rel (0) target = $region9
  $region8: #{_lambda_.6} parent=0 // pred_region
    _
  $region9: #{_lambda_.6} parent=0 // pred_fallthru
    _
  // Predicated region
  $region10: #{_lambda_.6} parent=0 // pred_check
    _
  $region11: #{_lambda_.6} parent=0 // pred_check_branch
    %13 = sbr.rel (0) target = $region13
  $region12: #{_lambda_.6} parent=0 // pred_region
    _
  $region13: #{_lambda_.6} parent=0 // pred_fallthru
    _
  %p15 = scmp.eq.s32.totalorder 0, 0
  // Predicated region
  $region14: #{_lambda_.6} parent=0 // pred_check
    %p16 = pneg %p15
  $region15: #{_lambda_.6} parent=0 // pred_check_branch
    %18 = sbr.rel (%p16) target = $region17
  $region16: #{_lambda_.6} parent=0 // pred_region
    %19 = vst [vmem:[#allocation2] sm:$0xff] 0.0
    %20 = vst [vmem:[#allocation2 + $0x8] sm:$0xff] 0.0
    %21 = vst [vmem:[#allocation2 + $0x10] sm:$0xff] 0.0
    %22 = vst [vmem:[#allocation2 + $0x18] sm:$0xff] 0.0
  $region17: #{_lambda_.6} parent=0 // pred_fallthru
    _
  %v23 = vld [vmem:[#allocation2] sm:$0xff]
  %v24 = vld [vmem:[#allocation2 + $0x8] sm:$0xff]
  %v25 = vld [vmem:[#allocation2 + $0x10] sm:$0xff]
  %v26 = vld [vmem:[#allocation2 + $0x18] sm:$0xff]
  %v27 = vld [vmem:[%s0] sm:$0xf]
  %v28 = vld [vmem:[%s0 + $0x4] sm:$0xf]
  %v29 = vld [vmem:[%s0 + $0x8] sm:$0xf]
  %v30 = vld [vmem:[%s0 + $0xc] sm:$0xf]
  %v31 = vld [vmem:[%s1] sm:$0xf]
  %v32 = vld [vmem:[%s1 + $0x4] sm:$0xf]
  %v33 = vld [vmem:[%s1 + $0x8] sm:$0xf]
  %v34 = vld [vmem:[%s1 + $0xc] sm:$0xf]
  %v35 = vld [vmem:[%s1 + $0x10] sm:$0xf]
  %v36 = vld [vmem:[%s1 + $0x14] sm:$0xf]
  %v37 = vld [vmem:[%s1 + $0x18] sm:$0xf]
  %v38 = vld [vmem:[%s1 + $0x1c] sm:$0xf]
  %v39 = vld [vmem:[%s1 + $0x20] sm:$0xf]
  %v40 = vld [vmem:[%s1 + $0x24] sm:$0xf]
  %v41 = vld [vmem:[%s1 + $0x28] sm:$0xf]
  %v42 = vld [vmem:[%s1 + $0x2c] sm:$0xf]
  %v43 = vld [vmem:[%s1 + $0x30] sm:$0xf]
  %v44 = vld [vmem:[%s1 + $0x34] sm:$0xf]
  %v45 = vld [vmem:[%s1 + $0x38] sm:$0xf]
  %v46 = vld [vmem:[%s1 + $0x3c] sm:$0xf]
  %v51 = vunpack.c.l.b16 %v27
  %v52 = vunpack.c.l.b16 %v28
  %v53 = vunpack.c.l.b16 %v29
  %v54 = vunpack.c.l.b16 %v30
  %v55 = vpack.c.b16 %v52, %v51
  %v56 = vpack.c.b16 %v54, %v53
  %v75 = vunpack.c.l.b16 %v31
  %v76 = vunpack.c.l.b16 %v32
  %v77 = vunpack.c.l.b16 %v33
  %v78 = vunpack.c.l.b16 %v34
  %v79 = vunpack.c.l.b16 %v35
  %v80 = vunpack.c.l.b16 %v36
  %v81 = vunpack.c.l.b16 %v37
  %v82 = vunpack.c.l.b16 %v38
  %v83 = vunpack.c.l.b16 %v39
  %v84 = vunpack.c.l.b16 %v40
  %v85 = vunpack.c.l.b16 %v41
  %v86 = vunpack.c.l.b16 %v42
  %v87 = vunpack.c.l.b16 %v43
  %v88 = vunpack.c.l.b16 %v44
  %v89 = vunpack.c.l.b16 %v45
  %v90 = vunpack.c.l.b16 %v46
  %v91 = vpack.c.b16 %v76, %v75
  %v92 = vpack.c.b16 %v78, %v77
  %v93 = vpack.c.b16 %v80, %v79
  %v94 = vpack.c.b16 %v82, %v81
  %v95 = vpack.c.b16 %v84, %v83
  %v96 = vpack.c.b16 %v86, %v85
  %v97 = vpack.c.b16 %v88, %v87
  %v98 = vpack.c.b16 %v90, %v89
  %107 = vmatprep.subr.bf16.mxu0 0
  %108 = vmatpush1.bf16.msra.mxu0 %v91
  %109 = vmatprep.subr.bf16.mxu0 0
  %110 = vmatpush1.bf16.msra.mxu0 %v92
  %111 = vmatprep.subr.bf16.mxu0 0
  %112 = vmatpush1.bf16.msra.mxu0 %v93
  %113 = vmatprep.subr.bf16.mxu0 0
  %114 = vmatpush1.bf16.msra.mxu0 %v94
  %115 = vmatprep.subr.bf16.mxu0 0
  %116 = vmatpush1.bf16.msra.mxu0 %v95
  %117 = vmatprep.subr.bf16.mxu0 0
  %118 = vmatpush1.bf16.msra.mxu0 %v96
  %119 = vmatprep.subr.bf16.mxu0 0
  %120 = vmatpush1.bf16.msra.mxu0 %v97
  %121 = vmatprep.subr.bf16.mxu0 0
  %122 = vmatpush1.bf16.msra.mxu0 %v98
  %123 = vmatprep.subr.bf16.mxu0 0
  %124 = vmatpush1.bf16.msra.mxu0 0
  %125 = vmatprep.subr.bf16.mxu0 0
  %126 = vmatpush1.bf16.msra.mxu0 0
  %127 = vmatprep.subr.bf16.mxu0 0
  %128 = vmatpush1.bf16.msra.mxu0 0
  %129 = vmatprep.subr.bf16.mxu0 0
  %130 = vmatpush1.bf16.msra.mxu0 0
  %131 = vmatprep.subr.bf16.mxu0 0
  %132 = vmatpush1.bf16.msra.mxu0 0
  %133 = vmatprep.subr.bf16.mxu0 0
  %134 = vmatpush1.bf16.msra.mxu0 0
  %135 = vmatprep.subr.bf16.mxu0 0
  %136 = vmatpush1.bf16.msra.mxu0 0
  %137 = vmatprep.subr.bf16.mxu0 0
  %138 = vmatpush1.bf16.msra.mxu0 0
  %139 = vmatprep.mubr.bf16.mxu0 0
  %140 = vmatmul.mubr.bf16.gmra.mrb[0].mxu0 %v55
  %v141 = vpop.f32.mrb[0].mxu0
  %v142 = vadd.f32 0.0, %v141
  %v143 = vpop.f32.mrb[0].mxu0
  %v144 = vpop.f32.mrb[0].mxu0
  %v145 = vadd.f32 0.0, %v144
  %v146 = vpop.f32.mrb[0].mxu0
  %147 = vmatprep.mubr.bf16.mxu0 0
  %148 = vmatmul.mubr.bf16.gmra.mrb[0].mxu0 %v56
  %v149 = vpop.f32.mrb[0].mxu0
  %v150 = vadd.f32 0.0, %v149
  %v151 = vpop.f32.mrb[0].mxu0
  %v152 = vpop.f32.mrb[0].mxu0
  %v153 = vadd.f32 0.0, %v152
  %v154 = vpop.f32.mrb[0].mxu0
  %155 = vdwg.mxu0
  %v156 = vadd.f32 %v23, %v142
  %v157 = vadd.f32 %v24, %v145
  %v158 = vadd.f32 %v25, %v150
  %v159 = vadd.f32 %v26, %v153
  %160 = vst [vmem:[#allocation2] sm:$0xff] %v156
  %161 = vst [vmem:[#allocation2 + $0x8] sm:$0xff] %v157
  %162 = vst [vmem:[#allocation2 + $0x10] sm:$0xff] %v158
  %163 = vst [vmem:[#allocation2 + $0x18] sm:$0xff] %v159
  // Predicated region
  $region18: #{_lambda_.6} parent=0 // pred_check
    %p164 = pneg %p15
  $region19: #{_lambda_.6} parent=0 // pred_check_branch
    %166 = sbr.rel (%p164) target = $region21
  $region20: #{_lambda_.6} parent=0 // pred_region
    %v167 = vld [vmem:[#allocation2] sm:$0xff]
    %v168 = vld [vmem:[#allocation2 + $0x8] sm:$0xff]
    %v169 = vld [vmem:[#allocation2 + $0x10] sm:$0xff]
    %v170 = vld [vmem:[#allocation2 + $0x18] sm:$0xff]
    %v171 = vld [vmem:[%s2] sm:$0x1]
    %v173 = vlaneseq
    %v174 = vshrl.u32 %v173, 7
    %v175 = vsub.s32 0, %v174
    %v176 = vrot.slane %v171, %v175
    %v178 = vadd.f32 %v167, %v176
    %v179 = vadd.f32 %v168, %v176
    %v180 = vadd.f32 %v169, %v176
    %v181 = vadd.f32 %v170, %v176
    %v182 = vpack.c.bf16 %v179, %v178
    %v183 = vpack.c.bf16 %v181, %v180
    %v186 = vunpack.c.l.b16 %v182
    %v187 = vunpack.c.h.b16 %v182
    %v188 = vunpack.c.l.b16 %v183
    %v189 = vunpack.c.h.b16 %v183
    %v190 = vpack.c.b16 %v186, %v186
    %v191 = vpack.c.b16 %v187, %v187
    %v192 = vpack.c.b16 %v188, %v188
    %v193 = vpack.c.b16 %v189, %v189
    %198 = vst [vmem:[%s3] sm:$0xf] %v190
    %199 = vst [vmem:[%s3 + $0x4] sm:$0xf] %v191
    %200 = vst [vmem:[%s3 + $0x8] sm:$0xf] %v192
    %201 = vst [vmem:[%s3 + $0xc] sm:$0xf] %v193
  $region21: #{_lambda_.6} parent=0 // pred_fallthru
    _
  // Predicated region
  $region22: #{_lambda_.6} parent=0 // pred_check
    _
  $region23: #{_lambda_.6} parent=0 // pred_check_branch
    %203 = sbr.rel (0) target = $region25
  $region24: #{_lambda_.6} parent=0 // pred_region
    _
  $region25: #{_lambda_.6} parent=0 // pred_fallthru
    _
  // Predicated region
  $region26: #{_lambda_.6} parent=0 // pred_check
    _
  $region27: #{_lambda_.6} parent=0 // pred_check_branch
    %205 = sbr.rel (0) target = $region29
  $region28: #{_lambda_.6} parent=0 // pred_region
    _
  $region29: #{_lambda_.6} parent=0 // pred_fallthru
    _

// kernel: tile.18
$region0: #{tile.18}
  #allocation0 [shape = 's32[1]{0}', space=sflag, size = 0x4, scoped, tag = 'scoped memory for tile.18']
  %s0 = inlined_call_operand.vmem [shape: f32[8], index: 0, kind: input, shape index: {}]
  %s1 = inlined_call_operand.vmem [shape: f32[4,8], index: 1, kind: output, shape index: {}]
  // Predicated region
  $region2: #{tile.18} parent=0 // pred_check
    _
  $region3: #{tile.18} parent=0 // pred_check_branch
    %3 = sbr.rel (0) target = $region5
  $region4: #{tile.18} parent=0 // pred_region
    _
  $region5: #{tile.18} parent=0 // pred_fallthru
    _
  %v4 = vld [vmem:[%s0] ss:$0 sm:$0xff]
  %5 = vst [vmem:[%s1] sm:$0xf] %v4

// kernel: _lambda_.7
$region0: #{_lambda_.7}
  #allocation0 [shape = 'u32[]', space=smem, size = 0x4, offset = 0x4, fixed_abs, tag = 'smem constant byte address 0x4 - core index']
  #allocation1 [shape = 'u32[144,128]{1,0:T(1,128)}', space=vmem, size = 0x12000, scoped, tag = 'internal scratch']
  #allocation2 [shape = 'f32[112,128]{1,0:T(8,128)}', space=vmem, size = 0xe000, scoped, tag = 'scratch operand']
  %s0 = inlined_call_operand.vmem [shape: bf16[112,128], index: 0, kind: input, shape index: {}]
  %s1 = inlined_call_operand.vmem [shape: bf16[128,128], index: 1, kind: input, shape index: {}]
  %s2 = inlined_call_operand.vmem [shape: bf16[112,128], index: 2, kind: input, shape index: {}]
  %s3 = inlined_call_operand.vmem [shape: bf16[128,128], index: 3, kind: input, shape index: {}]
  %s4 = inlined_call_operand.vmem [shape: f32[1,128], index: 4, kind: input, shape index: {}]
  %s5 = inlined_call_operand.vmem [shape: bf16[112,128], index: 5, kind: output, shape index: {}]
  %s6 = sld [smem:[#allocation0]]
  $region38: #{_lambda_.7} parent=0
    _
  %s8 = ssub.s32 1, %s6
  %s9 = scalar_select 0, %s8, %s6
  // Predicated region
  $region2: #{_lambda_.7} parent=0 // pred_check
    _
  $region3: #{_lambda_.7} parent=0 // pred_check_branch
    %11 = sbr.rel (0) target = $region5
  $region4: #{_lambda_.7} parent=0 // pred_region
    _
  $region5: #{_lambda_.7} parent=0 // pred_fallthru
    _
  // Predicated region
  $region6: #{_lambda_.7} parent=0 // pred_check
    _
  $region7: #{_lambda_.7} parent=0 // pred_check_branch
    %13 = sbr.rel (0) target = $region9
  $region8: #{_lambda_.7} parent=0 // pred_region
    _
  $region9: #{_lambda_.7} parent=0 // pred_fallthru
    _
  // Predicated region
  $region10: #{_lambda_.7} parent=0 // pred_check
    _
  $region11: #{_lambda_.7} parent=0 // pred_check_branch
    %15 = sbr.rel (0) target = $region13
  $region12: #{_lambda_.7} parent=0 // pred_region
    _
  $region13: #{_lambda_.7} parent=0 // pred_fallthru
    _
  // Predicated region
  $region14: #{_lambda_.7} parent=0 // pred_check
    _
  $region15: #{_lambda_.7} parent=0 // pred_check_branch
    %17 = sbr.rel (0) target = $region17
  $region16: #{_lambda_.7} parent=0 // pred_region
    _
  $region17: #{_lambda_.7} parent=0 // pred_fallthru
    _
  // Predicated region
  $region18: #{_lambda_.7} parent=0 // pred_check
    _
  $region19: #{_lambda_.7} parent=0 // pred_check_branch
    %19 = sbr.rel (0) target = $region21
  $region20: #{_lambda_.7} parent=0 // pred_region
    _
  $region21: #{_lambda_.7} parent=0 // pred_fallthru
    _
  %p21 = scmp.eq.s32.totalorder 0, 0
  // Predicated region
  $region22: #{_lambda_.7} parent=0 // pred_check
    %p22 = pneg %p21
  $region23: #{_lambda_.7} parent=0 // pred_check_branch
    %24 = sbr.rel (%p22) target = $region25
  $region24: #{_lambda_.7} parent=0 // pred_region
    %25 = vst [vmem:[#allocation2] sm:$0xff] 0.0
    %26 = vst [vmem:[#allocation2 + $0x8] sm:$0xff] 0.0
    %27 = vst [vmem:[#allocation2 + $0x10] sm:$0xff] 0.0
    %28 = vst [vmem:[#allocation2 + $0x18] sm:$0xff] 0.0
    %29 = vst [vmem:[#allocation2 + $0x20] sm:$0xff] 0.0
    %30 = vst [vmem:[#allocation2 + $0x28] sm:$0xff] 0.0
    %31 = vst [vmem:[#allocation2 + $0x30] sm:$0xff] 0.0
    %32 = vst [vmem:[#allocation2 + $0x38] sm:$0xff] 0.0
    %33 = vst [vmem:[#allocation2 + $0x40] sm:$0xff] 0.0
    %34 = vst [vmem:[#allocation2 + $0x48] sm:$0xff] 0.0
    %35 = vst [vmem:[#allocation2 + $0x50] sm:$0xff] 0.0
    %36 = vst [vmem:[#allocation2 + $0x58] sm:$0xff] 0.0
    %37 = vst [vmem:[#allocation2 + $0x60] sm:$0xff] 0.0
    %38 = vst [vmem:[#allocation2 + $0x68] sm:$0xff] 0.0
  $region25: #{_lambda_.7} parent=0 // pred_fallthru
    _
  %v39 = vld [vmem:[#allocation2] sm:$0xff]
  %v40 = vld [vmem:[#allocation2 + $0x8] sm:$0xff]
  %v41 = vld [vmem:[#allocation2 + $0x10] sm:$0xff]
  %v42 = vld [vmem:[#allocation2 + $0x18] sm:$0xff]
  %v43 = vld [vmem:[#allocation2 + $0x20] sm:$0xff]
  %v44 = vld [vmem:[#allocation2 + $0x28] sm:$0xff]
  %v45 = vld [vmem:[#allocation2 + $0x30] sm:$0xff]
  %v46 = vld [vmem:[#allocation2 + $0x38] sm:$0xff]
  %v47 = vld [vmem:[#allocation2 + $0x40] sm:$0xff]
  %v48 = vld [vmem:[#allocation2 + $0x48] sm:$0xff]
  %v49 = vld [vmem:[#allocation2 + $0x50] sm:$0xff]
  %v50 = vld [vmem:[#allocation2 + $0x58] sm:$0xff]
  %v51 = vld [vmem:[#allocation2 + $0x60] sm:$0xff]
  %v52 = vld [vmem:[#allocation2 + $0x68] sm:$0xff]
  %v53 = vld [vmem:[%s0] sm:$0xf]
  %v54 = vld [vmem:[%s0 + $0x4] sm:$0xf]
  %v55 = vld [vmem:[%s0 + $0x8] sm:$0xf]
  %v56 = vld [vmem:[%s0 + $0xc] sm:$0xf]
  %v57 = vld [vmem:[%s0 + $0x10] sm:$0xf]
  %v58 = vld [vmem:[%s0 + $0x14] sm:$0xf]
  %v59 = vld [vmem:[%s0 + $0x18] sm:$0xf]
  %v60 = vld [vmem:[%s0 + $0x1c] sm:$0xf]
  %v61 = vld [vmem:[%s0 + $0x20] sm:$0xf]
  %v62 = vld [vmem:[%s0 + $0x24] sm:$0xf]
  %v63 = vld [vmem:[%s0 + $0x28] sm:$0xf]
  %v64 = vld [vmem:[%s0 + $0x2c] sm:$0xf]
  %v65 = vld [vmem:[%s0 + $0x30] sm:$0xf]
  %v66 = vld [vmem:[%s0 + $0x34] sm:$0xf]
  %v67 = vld [vmem:[%s1] sm:$0xf]
  %v68 = vld [vmem:[%s1 + $0x4] sm:$0xf]
  %v69 = vld [vmem:[%s1 + $0x8] sm:$0xf]
  %v70 = vld [vmem:[%s1 + $0xc] sm:$0xf]
  %v71 = vld [vmem:[%s1 + $0x10] sm:$0xf]
  %v72 = vld [vmem:[%s1 + $0x14] sm:$0xf]
  %v73 = vld [vmem:[%s1 + $0x18] sm:$0xf]
  %v74 = vld [vmem:[%s1 + $0x1c] sm:$0xf]
  %v75 = vld [vmem:[%s1 + $0x20] sm:$0xf]
  %v76 = vld [vmem:[%s1 + $0x24] sm:$0xf]
  %v77 = vld [vmem:[%s1 + $0x28] sm:$0xf]
  %v78 = vld [vmem:[%s1 + $0x2c] sm:$0xf]
  %v79 = vld [vmem:[%s1 + $0x30] sm:$0xf]
  %v80 = vld [vmem:[%s1 + $0x34] sm:$0xf]
  %v81 = vld [vmem:[%s1 + $0x38] sm:$0xf]
  %v82 = vld [vmem:[%s1 + $0x3c] sm:$0xf]
  %v97 = vunpack.c.l.b16 %v53
  %v98 = vunpack.c.l.b16 %v54
  %v99 = vunpack.c.l.b16 %v55
  %v100 = vunpack.c.l.b16 %v56
  %v101 = vunpack.c.l.b16 %v57
  %v102 = vunpack.c.l.b16 %v58
  %v103 = vunpack.c.l.b16 %v59
  %v104 = vunpack.c.l.b16 %v60
  %v105 = vunpack.c.l.b16 %v61
  %v106 = vunpack.c.l.b16 %v62
  %v107 = vunpack.c.l.b16 %v63
  %v108 = vunpack.c.l.b16 %v64
  %v109 = vunpack.c.l.b16 %v65
  %v110 = vunpack.c.l.b16 %v66
  %v111 = vpack.c.b16 %v98, %v97
  %v112 = vpack.c.b16 %v100, %v99
  %v113 = vpack.c.b16 %v102, %v101
  %v114 = vpack.c.b16 %v104, %v103
  %v115 = vpack.c.b16 %v106, %v105
  %v116 = vpack.c.b16 %v108, %v107
  %v117 = vpack.c.b16 %v110, %v109
  %v141 = vunpack.c.l.b16 %v67
  %v142 = vunpack.c.l.b16 %v68
  %v143 = vunpack.c.l.b16 %v69
  %v144 = vunpack.c.l.b16 %v70
  %v145 = vunpack.c.l.b16 %v71
  %v146 = vunpack.c.l.b16 %v72
  %v147 = vunpack.c.l.b16 %v73
  %v148 = vunpack.c.l.b16 %v74
  %v149 = vunpack.c.l.b16 %v75
  %v150 = vunpack.c.l.b16 %v76
  %v151 = vunpack.c.l.b16 %v77
  %v152 = vunpack.c.l.b16 %v78
  %v153 = vunpack.c.l.b16 %v79
  %v154 = vunpack.c.l.b16 %v80
  %v155 = vunpack.c.l.b16 %v81
  %v156 = vunpack.c.l.b16 %v82
  %v157 = vpack.c.b16 %v142, %v141
  %v158 = vpack.c.b16 %v144, %v143
  %v159 = vpack.c.b16 %v146, %v145
  %v160 = vpack.c.b16 %v148, %v147
  %v161 = vpack.c.b16 %v150, %v149
  %v162 = vpack.c.b16 %v152, %v151
  %v163 = vpack.c.b16 %v154, %v153
  %v164 = vpack.c.b16 %v156, %v155
  %173 = vmatprep.subr.bf16.mxu0 0
  %174 = vmatpush1.bf16.msra.mxu0 %v157
  %175 = vmatprep.subr.bf16.mxu0 0
  %176 = vmatpush1.bf16.msra.mxu0 %v158
  %177 = vmatprep.subr.bf16.mxu0 0
  %178 = vmatpush1.bf16.msra.mxu0 %v159
  %179 = vmatprep.subr.bf16.mxu0 0
  %180 = vmatpush1.bf16.msra.mxu0 %v160
  %181 = vmatprep.subr.bf16.mxu0 0
  %182 = vmatpush1.bf16.msra.mxu0 %v161
  %183 = vmatprep.subr.bf16.mxu0 0
  %184 = vmatpush1.bf16.msra.mxu0 %v162
  %185 = vmatprep.subr.bf16.mxu0 0
  %186 = vmatpush1.bf16.msra.mxu0 %v163
  %187 = vmatprep.subr.bf16.mxu0 0
  %188 = vmatpush1.bf16.msra.mxu0 %v164
  %189 = vmatprep.subr.bf16.mxu0 0
  %190 = vmatpush1.bf16.msra.mxu0 0
  %191 = vmatprep.subr.bf16.mxu0 0
  %192 = vmatpush1.bf16.msra.mxu0 0
  %193 = vmatprep.subr.bf16.mxu0 0
  %194 = vmatpush1.bf16.msra.mxu0 0
  %195 = vmatprep.subr.bf16.mxu0 0
  %196 = vmatpush1.bf16.msra.mxu0 0
  %197 = vmatprep.subr.bf16.mxu0 0
  %198 = vmatpush1.bf16.msra.mxu0 0
  %199 = vmatprep.subr.bf16.mxu0 0
  %200 = vmatpush1.bf16.msra.mxu0 0
  %201 = vmatprep.subr.bf16.mxu0 0
  %202 = vmatpush1.bf16.msra.mxu0 0
  %203 = vmatprep.subr.bf16.mxu0 0
  %204 = vmatpush1.bf16.msra.mxu0 0
  %205 = vmatprep.mubr.bf16.mxu0 0
  %206 = vmatmul.mubr.bf16.gmra.mrb[0].mxu0 %v111
  %v207 = vpop.f32.mrb[0].mxu0
  %v208 = vadd.f32 0.0, %v207
  %v209 = vpop.f32.mrb[0].mxu0
  %v210 = vpop.f32.mrb[0].mxu0
  %v211 = vadd.f32 0.0, %v210
  %v212 = vpop.f32.mrb[0].mxu0
  %213 = vmatprep.mubr.bf16.mxu0 0
  %214 = vmatmul.mubr.bf16.gmra.mrb[0].mxu0 %v112
  %v215 = vpop.f32.mrb[0].mxu0
  %v216 = vadd.f32 0.0, %v215
  %v217 = vpop.f32.mrb[0].mxu0
  %v218 = vpop.f32.mrb[0].mxu0
  %v219 = vadd.f32 0.0, %v218
  %v220 = vpop.f32.mrb[0].mxu0
  %221 = vmatprep.mubr.bf16.mxu0 0
  %222 = vmatmul.mubr.bf16.gmra.mrb[0].mxu0 %v113
  %v223 = vpop.f32.mrb[0].mxu0
  %v224 = vadd.f32 0.0, %v223
  %v225 = vpop.f32.mrb[0].mxu0
  %v226 = vpop.f32.mrb[0].mxu0
  %v227 = vadd.f32 0.0, %v226
  %v228 = vpop.f32.mrb[0].mxu0
  %229 = vmatprep.mubr.bf16.mxu0 0
  %230 = vmatmul.mubr.bf16.gmra.mrb[0].mxu0 %v114
  %v231 = vpop.f32.mrb[0].mxu0
  %v232 = vadd.f32 0.0, %v231
  %v233 = vpop.f32.mrb[0].mxu0
  %v234 = vpop.f32.mrb[0].mxu0
  %v235 = vadd.f32 0.0, %v234
  %v236 = vpop.f32.mrb[0].mxu0
  %237 = vmatprep.mubr.bf16.mxu0 0
  %238 = vmatmul.mubr.bf16.gmra.mrb[0].mxu0 %v115
  %v239 = vpop.f32.mrb[0].mxu0
  %v240 = vadd.f32 0.0, %v239
  %v241 = vpop.f32.mrb[0].mxu0
  %v242 = vpop.f32.mrb[0].mxu0
  %v243 = vadd.f32 0.0, %v242
  %v244 = vpop.f32.mrb[0].mxu0
  %245 = vmatprep.mubr.bf16.mxu0 0
  %246 = vmatmul.mubr.bf16.gmra.mrb[0].mxu0 %v116
  %v247 = vpop.f32.mrb[0].mxu0
  %v248 = vadd.f32 0.0, %v247
  %v249 = vpop.f32.mrb[0].mxu0
  %v250 = vpop.f32.mrb[0].mxu0
  %v251 = vadd.f32 0.0, %v250
  %v252 = vpop.f32.mrb[0].mxu0
  %253 = vmatprep.mubr.bf16.mxu0 0
  %254 = vmatmul.mubr.bf16.gmra.mrb[0].mxu0 %v117
  %v255 = vpop.f32.mrb[0].mxu0
  %v256 = vadd.f32 0.0, %v255
  %v257 = vpop.f32.mrb[0].mxu0
  %v258 = vpop.f32.mrb[0].mxu0
  %v259 = vadd.f32 0.0, %v258
  %v260 = vpop.f32.mrb[0].mxu0
  %261 = vdwg.mxu0
  %v262 = vadd.f32 %v39, %v208
  %v263 = vadd.f32 %v40, %v211
  %v264 = vadd.f32 %v41, %v216
  %v265 = vadd.f32 %v42, %v219
  %v266 = vadd.f32 %v43, %v224
  %v267 = vadd.f32 %v44, %v227
  %v268 = vadd.f32 %v45, %v232
  %v269 = vadd.f32 %v46, %v235
  %v270 = vadd.f32 %v47, %v240
  %v271 = vadd.f32 %v48, %v243
  %v272 = vadd.f32 %v49, %v248
  %v273 = vadd.f32 %v50, %v251
  %v274 = vadd.f32 %v51, %v256
  %v275 = vadd.f32 %v52, %v259
  %v276 = vld [vmem:[%s2] sm:$0xf]
  %v277 = vld [vmem:[%s2 + $0x4] sm:$0xf]
  %v278 = vld [vmem:[%s2 + $0x8] sm:$0xf]
  %v279 = vld [vmem:[%s2 + $0xc] sm:$0xf]
  %v280 = vld [vmem:[%s2 + $0x10] sm:$0xf]
  %v281 = vld [vmem:[%s2 + $0x14] sm:$0xf]
  %v282 = vld [vmem:[%s2 + $0x18] sm:$0xf]
  %v283 = vld [vmem:[%s2 + $0x1c] sm:$0xf]
  %v284 = vld [vmem:[%s2 + $0x20] sm:$0xf]
  %v285 = vld [vmem:[%s2 + $0x24] sm:$0xf]
  %v286 = vld [vmem:[%s2 + $0x28] sm:$0xf]
  %v287 = vld [vmem:[%s2 + $0x2c] sm:$0xf]
  %v288 = vld [vmem:[%s2 + $0x30] sm:$0xf]
  %v289 = vld [vmem:[%s2 + $0x34] sm:$0xf]
  %v290 = vld [vmem:[%s3] sm:$0xf]
  %v291 = vld [vmem:[%s3 + $0x4] sm:$0xf]
  %v292 = vld [vmem:[%s3 + $0x8] sm:$0xf]
  %v293 = vld [vmem:[%s3 + $0xc] sm:$0xf]
  %v294 = vld [vmem:[%s3 + $0x10] sm:$0xf]
  %v295 = vld [vmem:[%s3 + $0x14] sm:$0xf]
  %v296 = vld [vmem:[%s3 + $0x18] sm:$0xf]
  %v297 = vld [vmem:[%s3 + $0x1c] sm:$0xf]
  %v298 = vld [vmem:[%s3 + $0x20] sm:$0xf]
  %v299 = vld [vmem:[%s3 + $0x24] sm:$0xf]
  %v300 = vld [vmem:[%s3 + $0x28] sm:$0xf]
  %v301 = vld [vmem:[%s3 + $0x2c] sm:$0xf]
  %v302 = vld [vmem:[%s3 + $0x30] sm:$0xf]
  %v303 = vld [vmem:[%s3 + $0x34] sm:$0xf]
  %v304 = vld [vmem:[%s3 + $0x38] sm:$0xf]
  %v305 = vld [vmem:[%s3 + $0x3c] sm:$0xf]
  %v320 = vunpack.c.l.b16 %v276
  %v321 = vunpack.c.l.b16 %v277
  %v322 = vunpack.c.l.b16 %v278
  %v323 = vunpack.c.l.b16 %v279
  %v324 = vunpack.c.l.b16 %v280
  %v325 = vunpack.c.l.b16 %v281
  %v326 = vunpack.c.l.b16 %v282
  %v327 = vunpack.c.l.b16 %v283
  %v328 = vunpack.c.l.b16 %v284
  %v329 = vunpack.c.l.b16 %v285
  %v330 = vunpack.c.l.b16 %v286
  %v331 = vunpack.c.l.b16 %v287
  %v332 = vunpack.c.l.b16 %v288
  %v333 = vunpack.c.l.b16 %v289
  %v334 = vpack.c.b16 %v321, %v320
  %v335 = vpack.c.b16 %v323, %v322
  %v336 = vpack.c.b16 %v325, %v324
  %v337 = vpack.c.b16 %v327, %v326
  %v338 = vpack.c.b16 %v329, %v328
  %v339 = vpack.c.b16 %v331, %v330
  %v340 = vpack.c.b16 %v333, %v332
  %v364 = vunpack.c.l.b16 %v290
  %v365 = vunpack.c.l.b16 %v291
  %v366 = vunpack.c.l.b16 %v292
  %v367 = vunpack.c.l.b16 %v293
  %v368 = vunpack.c.l.b16 %v294
  %v369 = vunpack.c.l.b16 %v295
  %v370 = vunpack.c.l.b16 %v296
  %v371 = vunpack.c.l.b16 %v297
  %v372 = vunpack.c.l.b16 %v298
  %v373 = vunpack.c.l.b16 %v299
  %v374 = vunpack.c.l.b16 %v300
  %v375 = vunpack.c.l.b16 %v301
  %v376 = vunpack.c.l.b16 %v302
  %v377 = vunpack.c.l.b16 %v303
  %v378 = vunpack.c.l.b16 %v304
  %v379 = vunpack.c.l.b16 %v305
  %v380 = vpack.c.b16 %v365, %v364
  %v381 = vpack.c.b16 %v367, %v366
  %v382 = vpack.c.b16 %v369, %v368
  %v383 = vpack.c.b16 %v371, %v370
  %v384 = vpack.c.b16 %v373, %v372
  %v385 = vpack.c.b16 %v375, %v374
  %v386 = vpack.c.b16 %v377, %v376
  %v387 = vpack.c.b16 %v379, %v378
  %396 = vmatprep.subr.bf16.mxu0 0
  %397 = vmatpush1.bf16.msra.mxu0 %v380
  %398 = vmatprep.subr.bf16.mxu0 0
  %399 = vmatpush1.bf16.msra.mxu0 %v381
  %400 = vmatprep.subr.bf16.mxu0 0
  %401 = vmatpush1.bf16.msra.mxu0 %v382
  %402 = vmatprep.subr.bf16.mxu0 0
  %403 = vmatpush1.bf16.msra.mxu0 %v383
  %404 = vmatprep.subr.bf16.mxu0 0
  %405 = vmatpush1.bf16.msra.mxu0 %v384
  %406 = vmatprep.subr.bf16.mxu0 0
  %407 = vmatpush1.bf16.msra.mxu0 %v385
  %408 = vmatprep.subr.bf16.mxu0 0
  %409 = vmatpush1.bf16.msra.mxu0 %v386
  %410 = vmatprep.subr.bf16.mxu0 0
  %411 = vmatpush1.bf16.msra.mxu0 %v387
  %412 = vmatprep.subr.bf16.mxu0 0
  %413 = vmatpush1.bf16.msra.mxu0 0
  %414 = vmatprep.subr.bf16.mxu0 0
  %415 = vmatpush1.bf16.msra.mxu0 0
  %416 = vmatprep.subr.bf16.mxu0 0
  %417 = vmatpush1.bf16.msra.mxu0 0
  %418 = vmatprep.subr.bf16.mxu0 0
  %419 = vmatpush1.bf16.msra.mxu0 0
  %420 = vmatprep.subr.bf16.mxu0 0
  %421 = vmatpush1.bf16.msra.mxu0 0
  %422 = vmatprep.subr.bf16.mxu0 0
  %423 = vmatpush1.bf16.msra.mxu0 0
  %424 = vmatprep.subr.bf16.mxu0 0
  %425 = vmatpush1.bf16.msra.mxu0 0
  %426 = vmatprep.subr.bf16.mxu0 0
  %427 = vmatpush1.bf16.msra.mxu0 0
  %428 = vmatprep.mubr.bf16.mxu0 0
  %429 = vmatmul.mubr.bf16.gmra.mrb[0].mxu0 %v334
  %v430 = vpop.f32.mrb[0].mxu0
  %v431 = vadd.f32 0.0, %v430
  %v432 = vpop.f32.mrb[0].mxu0
  %v433 = vpop.f32.mrb[0].mxu0
  %v434 = vadd.f32 0.0, %v433
  %v435 = vpop.f32.mrb[0].mxu0
  %436 = vmatprep.mubr.bf16.mxu0 0
  %437 = vmatmul.mubr.bf16.gmra.mrb[0].mxu0 %v335
  %v438 = vpop.f32.mrb[0].mxu0
  %v439 = vadd.f32 0.0, %v438
  %v440 = vpop.f32.mrb[0].mxu0
  %v441 = vpop.f32.mrb[0].mxu0
  %v442 = vadd.f32 0.0, %v441
  %v443 = vpop.f32.mrb[0].mxu0
  %444 = vmatprep.mubr.bf16.mxu0 0
  %445 = vmatmul.mubr.bf16.gmra.mrb[0].mxu0 %v336
  %v446 = vpop.f32.mrb[0].mxu0
  %v447 = vadd.f32 0.0, %v446
  %v448 = vpop.f32.mrb[0].mxu0
  %v449 = vpop.f32.mrb[0].mxu0
  %v450 = vadd.f32 0.0, %v449
  %v451 = vpop.f32.mrb[0].mxu0
  %452 = vmatprep.mubr.bf16.mxu0 0
  %453 = vmatmul.mubr.bf16.gmra.mrb[0].mxu0 %v337
  %v454 = vpop.f32.mrb[0].mxu0
  %v455 = vadd.f32 0.0, %v454
  %v456 = vpop.f32.mrb[0].mxu0
  %v457 = vpop.f32.mrb[0].mxu0
  %v458 = vadd.f32 0.0, %v457
  %v459 = vpop.f32.mrb[0].mxu0
  %460 = vmatprep.mubr.bf16.mxu0 0
  %461 = vmatmul.mubr.bf16.gmra.mrb[0].mxu0 %v338
  %v462 = vpop.f32.mrb[0].mxu0
  %v463 = vadd.f32 0.0, %v462
  %v464 = vpop.f32.mrb[0].mxu0
  %v465 = vpop.f32.mrb[0].mxu0
  %v466 = vadd.f32 0.0, %v465
  %v467 = vpop.f32.mrb[0].mxu0
  %468 = vmatprep.mubr.bf16.mxu0 0
  %469 = vmatmul.mubr.bf16.gmra.mrb[0].mxu0 %v339
  %v470 = vpop.f32.mrb[0].mxu0
  %v471 = vadd.f32 0.0, %v470
  %v472 = vpop.f32.mrb[0].mxu0
  %v473 = vpop.f32.mrb[0].mxu0
  %v474 = vadd.f32 0.0, %v473
  %v475 = vpop.f32.mrb[0].mxu0
  %476 = vmatprep.mubr.bf16.mxu0 0
  %477 = vmatmul.mubr.bf16.gmra.mrb[0].mxu0 %v340
  %v478 = vpop.f32.mrb[0].mxu0
  %v479 = vadd.f32 0.0, %v478
  %v480 = vpop.f32.mrb[0].mxu0
  %v481 = vpop.f32.mrb[0].mxu0
  %v482 = vadd.f32 0.0, %v481
  %v483 = vpop.f32.mrb[0].mxu0
  %484 = vdwg.mxu0
  %v485 = vadd.f32 %v262, %v431
  %v486 = vadd.f32 %v263, %v434
  %v487 = vadd.f32 %v264, %v439
  %v488 = vadd.f32 %v265, %v442
  %v489 = vadd.f32 %v266, %v447
  %v490 = vadd.f32 %v267, %v450
  %v491 = vadd.f32 %v268, %v455
  %v492 = vadd.f32 %v269, %v458
  %v493 = vadd.f32 %v270, %v463
  %v494 = vadd.f32 %v271, %v466
  %v495 = vadd.f32 %v272, %v471
  %v496 = vadd.f32 %v273, %v474
  %v497 = vadd.f32 %v274, %v479
  %v498 = vadd.f32 %v275, %v482
  %499 = vst [vmem:[#allocation2] sm:$0xff] %v485
  %500 = vst [vmem:[#allocation2 + $0x8] sm:$0xff] %v486
  %501 = vst [vmem:[#allocation2 + $0x10] sm:$0xff] %v487
  %502 = vst [vmem:[#allocation2 + $0x18] sm:$0xff] %v488
  %503 = vst [vmem:[#allocation2 + $0x20] sm:$0xff] %v489
  %504 = vst [vmem:[#allocation2 + $0x28] sm:$0xff] %v490
  %505 = vst [vmem:[#allocation2 + $0x30] sm:$0xff] %v491
  %506 = vst [vmem:[#allocation2 + $0x38] sm:$0xff] %v492
  %507 = vst [vmem:[#allocation2 + $0x40] sm:$0xff] %v493
  %508 = vst [vmem:[#allocation2 + $0x48] sm:$0xff] %v494
  %509 = vst [vmem:[#allocation2 + $0x50] sm:$0xff] %v495
  %510 = vst [vmem:[#allocation2 + $0x58] sm:$0xff] %v496
  %511 = vst [vmem:[#allocation2 + $0x60] sm:$0xff] %v497
  %512 = vst [vmem:[#allocation2 + $0x68] sm:$0xff] %v498
  // Predicated region
  $region26: #{_lambda_.7} parent=0 // pred_check
    %p513 = pneg %p21
  $region27: #{_lambda_.7} parent=0 // pred_check_branch
    %515 = sbr.rel (%p513) target = $region29
  $region28: #{_lambda_.7} parent=0 // pred_region
    %v516 = vld [vmem:[#allocation2] sm:$0xff]
    %v517 = vld [vmem:[#allocation2 + $0x8] sm:$0xff]
    %v518 = vld [vmem:[#allocation2 + $0x10] sm:$0xff]
    %v519 = vld [vmem:[#allocation2 + $0x18] sm:$0xff]
    %v520 = vld [vmem:[#allocation2 + $0x20] sm:$0xff]
    %v521 = vld [vmem:[#allocation2 + $0x28] sm:$0xff]
    %v522 = vld [vmem:[#allocation2 + $0x30] sm:$0xff]
    %v523 = vld [vmem:[#allocation2 + $0x38] sm:$0xff]
    %v524 = vld [vmem:[#allocation2 + $0x40] sm:$0xff]
    %v525 = vld [vmem:[#allocation2 + $0x48] sm:$0xff]
    %v526 = vld [vmem:[#allocation2 + $0x50] sm:$0xff]
    %v527 = vld [vmem:[#allocation2 + $0x58] sm:$0xff]
    %v528 = vld [vmem:[#allocation2 + $0x60] sm:$0xff]
    %v529 = vld [vmem:[#allocation2 + $0x68] sm:$0xff]
    %v530 = vld [vmem:[%s4] sm:$0x1]
    %v532 = vlaneseq
    %v533 = vshrl.u32 %v532, 7
    %v534 = vsub.s32 0, %v533
    %v535 = vrot.slane %v530, %v534
    %v537 = vadd.f32 %v516, %v535
    %v538 = vadd.f32 %v517, %v535
    %v539 = vadd.f32 %v518, %v535
    %v540 = vadd.f32 %v519, %v535
    %v541 = vadd.f32 %v520, %v535
    %v542 = vadd.f32 %v521, %v535
    %v543 = vadd.f32 %v522, %v535
    %v544 = vadd.f32 %v523, %v535
    %v545 = vadd.f32 %v524, %v535
    %v546 = vadd.f32 %v525, %v535
    %v547 = vadd.f32 %v526, %v535
    %v548 = vadd.f32 %v527, %v535
    %v549 = vadd.f32 %v528, %v535
    %v550 = vadd.f32 %v529, %v535
    %v551 = vmax.f32 %v537, 0.0
    %v552 = vmax.f32 %v538, 0.0
    %v553 = vmax.f32 %v539, 0.0
    %v554 = vmax.f32 %v540, 0.0
    %v555 = vmax.f32 %v541, 0.0
    %v556 = vmax.f32 %v542, 0.0
    %v557 = vmax.f32 %v543, 0.0
    %v558 = vmax.f32 %v544, 0.0
    %v559 = vmax.f32 %v545, 0.0
    %v560 = vmax.f32 %v546, 0.0
    %v561 = vmax.f32 %v547, 0.0
    %v562 = vmax.f32 %v548, 0.0
    %v563 = vmax.f32 %v549, 0.0
    %v564 = vmax.f32 %v550, 0.0
    %v565 = vpack.c.bf16 %v552, %v551
    %v566 = vpack.c.bf16 %v554, %v553
    %v567 = vpack.c.bf16 %v556, %v555
    %v568 = vpack.c.bf16 %v558, %v557
    %v569 = vpack.c.bf16 %v560, %v559
    %v570 = vpack.c.bf16 %v562, %v561
    %v571 = vpack.c.bf16 %v564, %v563
    %v579 = vunpack.c.l.b16 %v565
    %v580 = vunpack.c.h.b16 %v565
    %v581 = vunpack.c.l.b16 %v566
    %v582 = vunpack.c.h.b16 %v566
    %v583 = vunpack.c.l.b16 %v567
    %v584 = vunpack.c.h.b16 %v567
    %v585 = vunpack.c.l.b16 %v568
    %v586 = vunpack.c.h.b16 %v568
    %v587 = vunpack.c.l.b16 %v569
    %v588 = vunpack.c.h.b16 %v569
    %v589 = vunpack.c.l.b16 %v570
    %v590 = vunpack.c.h.b16 %v570
    %v591 = vunpack.c.l.b16 %v571
    %v592 = vunpack.c.h.b16 %v571
    %v593 = vpack.c.b16 %v579, %v579
    %v594 = vpack.c.b16 %v580, %v580
    %v595 = vpack.c.b16 %v581, %v581
    %v596 = vpack.c.b16 %v582, %v582
    %v597 = vpack.c.b16 %v583, %v583
    %v598 = vpack.c.b16 %v584, %v584
    %v599 = vpack.c.b16 %v585, %v585
    %v600 = vpack.c.b16 %v586, %v586
    %v601 = vpack.c.b16 %v587, %v587
    %v602 = vpack.c.b16 %v588, %v588
    %v603 = vpack.c.b16 %v589, %v589
    %v604 = vpack.c.b16 %v590, %v590
    %v605 = vpack.c.b16 %v591, %v591
    %v606 = vpack.c.b16 %v592, %v592
    %621 = vst [vmem:[%s5] sm:$0xf] %v593
    %622 = vst [vmem:[%s5 + $0x4] sm:$0xf] %v594
    %623 = vst [vmem:[%s5 + $0x8] sm:$0xf] %v595
    %624 = vst [vmem:[%s5 + $0xc] sm:$0xf] %v596
    %625 = vst [vmem:[%s5 + $0x10] sm:$0xf] %v597
    %626 = vst [vmem:[%s5 + $0x14] sm:$0xf] %v598
    %627 = vst [vmem:[%s5 + $0x18] sm:$0xf] %v599
    %628 = vst [vmem:[%s5 + $0x1c] sm:$0xf] %v600
    %629 = vst [vmem:[%s5 + $0x20] sm:$0xf] %v601
    %630 = vst [vmem:[%s5 + $0x24] sm:$0xf] %v602
    %631 = vst [vmem:[%s5 + $0x28] sm:$0xf] %v603
    %632 = vst [vmem:[%s5 + $0x2c] sm:$0xf] %v604
    %633 = vst [vmem:[%s5 + $0x30] sm:$0xf] %v605
    %634 = vst [vmem:[%s5 + $0x34] sm:$0xf] %v606
  $region29: #{_lambda_.7} parent=0 // pred_fallthru
    _
  // Predicated region
  $region30: #{_lambda_.7} parent=0 // pred_check
    _
  $region31: #{_lambda_.7} parent=0 // pred_check_branch
    %636 = sbr.rel (0) target = $region33
  $region32: #{_lambda_.7} parent=0 // pred_region
    _
  $region33: #{_lambda_.7} parent=0 // pred_fallthru
    _
  // Predicated region
  $region34: #{_lambda_.7} parent=0 // pred_check
    _
  $region35: #{_lambda_.7} parent=0 // pred_check_branch
    %638 = sbr.rel (0) target = $region37
  $region36: #{_lambda_.7} parent=0 // pred_region
    _
  $region37: #{_lambda_.7} parent=0 // pred_fallthru
    _

// kernel: tile.19
$region0: #{tile.19}
  %s0 = inlined_call_operand.vmem [shape: f32[4,8], index: 0, kind: input, shape index: {}]
  %s1 = inlined_call_operand.vmem [shape: f32[1,32], index: 1, kind: output, shape index: {}]
  $region1: #{tile.19} parent=0
    #allocation0 [shape = 'u8[4096]{0}', space=vmem, size = 0x1000, scoped, tag = 'scoped mem for output reshape']
    #allocation1 [shape = 'u8[4096]{0}', space=vmem, size = 0x1000, scoped, tag = 'scoped mem for input reshape']
    %s3 = sshllo.u32 0, 4
    %v4 = vld [vmem:[%s0] sm:%s3]
    %5 = vst [vmem:[#allocation1] sm:%s3] %v4
    %v6 = vld [vmem:[#allocation1] sm:$0x1]
    %vm7 = vcmask 64512
    %8 = vst.msk [vmem:[#allocation0] sm:$0x1] %vm7, %v6
    %s9 = scalar_lea.vmem [#allocation1], 3
    %v10 = vld [vmem:[%s9] sm:$0x1]
    %11 = vrot.lane.b32.xlu0 %v10, 24
    %v12 = vpop.permute.xlu0 %11
    %vm13 = vcmask 261312
    %14 = vst.msk [vmem:[#allocation0] sm:$0x1] %vm13, %v12
    %s15 = scalar_lea.vmem [#allocation1], 2
    %v16 = vld [vmem:[%s15] sm:$0x1]
    %17 = vrot.lane.b32.xlu0 %v16, 16
    %v18 = vpop.permute.xlu0 %17
    %vm19 = vcmask 195712
    %20 = vst.msk [vmem:[#allocation0] sm:$0x1] %vm19, %v18
    %s21 = scalar_lea.vmem [#allocation1], 1
    %v22 = vld [vmem:[%s21] sm:$0x1]
    %23 = vrot.lane.b32.xlu0 %v22, 8
    %v24 = vpop.permute.xlu0 %23
    %vm25 = vcmask 130112
    %26 = vst.msk [vmem:[#allocation0] sm:$0x1] %vm25, %v24
    %s28 = sshllo.u32 0, 1
    %v30 = vld [vmem:[#allocation0] sm:%s28]
    %s31 = sshllo.u32 0, 1
    %32 = vst [vmem:[%s1] sm:%s31] %v30

// kernel: _lambda_.8
$region0: #{_lambda_.8}
  #allocation0 [shape = 'u32[]', space=smem, size = 0x4, offset = 0x4, fixed_abs, tag = 'smem constant byte address 0x4 - core index']
  #allocation1 [shape = 'u32[144,128]{1,0:T(1,128)}', space=vmem, size = 0x12000, scoped, tag = 'internal scratch']
  #allocation2 [shape = 'f32[80,128]{1,0:T(8,128)}', space=vmem, size = 0xa000, scoped, tag = 'scratch operand']
  %s0 = inlined_call_operand.vmem [shape: bf16[80,128], index: 0, kind: input, shape index: {}]
  %s1 = inlined_call_operand.vmem [shape: bf16[128,128], index: 1, kind: input, shape index: {}]
  %s2 = inlined_call_operand.vmem [shape: f32[1,128], index: 2, kind: input, shape index: {}]
  %s3 = inlined_call_operand.vmem [shape: bf16[80,128], index: 3, kind: output, shape index: {}]
  %s4 = sld [smem:[#allocation0]]
  $region30: #{_lambda_.8} parent=0
    _
  %s6 = ssub.s32 1, %s4
  %s7 = scalar_select 0, %s6, %s4
  // Predicated region
  $region2: #{_lambda_.8} parent=0 // pred_check
    _
  $region3: #{_lambda_.8} parent=0 // pred_check_branch
    %9 = sbr.rel (0) target = $region5
  $region4: #{_lambda_.8} parent=0 // pred_region
    _
  $region5: #{_lambda_.8} parent=0 // pred_fallthru
    _
  // Predicated region
  $region6: #{_lambda_.8} parent=0 // pred_check
    _
  $region7: #{_lambda_.8} parent=0 // pred_check_branch
    %11 = sbr.rel (0) target = $region9
  $region8: #{_lambda_.8} parent=0 // pred_region
    _
  $region9: #{_lambda_.8} parent=0 // pred_fallthru
    _
  // Predicated region
  $region10: #{_lambda_.8} parent=0 // pred_check
    _
  $region11: #{_lambda_.8} parent=0 // pred_check_branch
    %13 = sbr.rel (0) target = $region13
  $region12: #{_lambda_.8} parent=0 // pred_region
    _
  $region13: #{_lambda_.8} parent=0 // pred_fallthru
    _
  %p15 = scmp.eq.s32.totalorder 0, 0
  // Predicated region
  $region14: #{_lambda_.8} parent=0 // pred_check
    %p16 = pneg %p15
  $region15: #{_lambda_.8} parent=0 // pred_check_branch
    %18 = sbr.rel (%p16) target = $region17
  $region16: #{_lambda_.8} parent=0 // pred_region
    %19 = vst [vmem:[#allocation2] sm:$0xff] 0.0
    %20 = vst [vmem:[#allocation2 + $0x8] sm:$0xff] 0.0
    %21 = vst [vmem:[#allocation2 + $0x10] sm:$0xff] 0.0
    %22 = vst [vmem:[#allocation2 + $0x18] sm:$0xff] 0.0
    %23 = vst [vmem:[#allocation2 + $0x20] sm:$0xff] 0.0
    %24 = vst [vmem:[#allocation2 + $0x28] sm:$0xff] 0.0
    %25 = vst [vmem:[#allocation2 + $0x30] sm:$0xff] 0.0
    %26 = vst [vmem:[#allocation2 + $0x38] sm:$0xff] 0.0
    %27 = vst [vmem:[#allocation2 + $0x40] sm:$0xff] 0.0
    %28 = vst [vmem:[#allocation2 + $0x48] sm:$0xff] 0.0
  $region17: #{_lambda_.8} parent=0 // pred_fallthru
    _
  %v29 = vld [vmem:[#allocation2] sm:$0xff]
  %v30 = vld [vmem:[#allocation2 + $0x8] sm:$0xff]
  %v31 = vld [vmem:[#allocation2 + $0x10] sm:$0xff]
  %v32 = vld [vmem:[#allocation2 + $0x18] sm:$0xff]
  %v33 = vld [vmem:[#allocation2 + $0x20] sm:$0xff]
  %v34 = vld [vmem:[#allocation2 + $0x28] sm:$0xff]
  %v35 = vld [vmem:[#allocation2 + $0x30] sm:$0xff]
  %v36 = vld [vmem:[#allocation2 + $0x38] sm:$0xff]
  %v37 = vld [vmem:[#allocation2 + $0x40] sm:$0xff]
  %v38 = vld [vmem:[#allocation2 + $0x48] sm:$0xff]
  %v39 = vld [vmem:[%s0] sm:$0xf]
  %v40 = vld [vmem:[%s0 + $0x4] sm:$0xf]
  %v41 = vld [vmem:[%s0 + $0x8] sm:$0xf]
  %v42 = vld [vmem:[%s0 + $0xc] sm:$0xf]
  %v43 = vld [vmem:[%s0 + $0x10] sm:$0xf]
  %v44 = vld [vmem:[%s0 + $0x14] sm:$0xf]
  %v45 = vld [vmem:[%s0 + $0x18] sm:$0xf]
  %v46 = vld [vmem:[%s0 + $0x1c] sm:$0xf]
  %v47 = vld [vmem:[%s0 + $0x20] sm:$0xf]
  %v48 = vld [vmem:[%s0 + $0x24] sm:$0xf]
  %v49 = vld [vmem:[%s1] sm:$0xf]
  %v50 = vld [vmem:[%s1 + $0x4] sm:$0xf]
  %v51 = vld [vmem:[%s1 + $0x8] sm:$0xf]
  %v52 = vld [vmem:[%s1 + $0xc] sm:$0xf]
  %v53 = vld [vmem:[%s1 + $0x10] sm:$0xf]
  %v54 = vld [vmem:[%s1 + $0x14] sm:$0xf]
  %v55 = vld [vmem:[%s1 + $0x18] sm:$0xf]
  %v56 = vld [vmem:[%s1 + $0x1c] sm:$0xf]
  %v57 = vld [vmem:[%s1 + $0x20] sm:$0xf]
  %v58 = vld [vmem:[%s1 + $0x24] sm:$0xf]
  %v59 = vld [vmem:[%s1 + $0x28] sm:$0xf]
  %v60 = vld [vmem:[%s1 + $0x2c] sm:$0xf]
  %v61 = vld [vmem:[%s1 + $0x30] sm:$0xf]
  %v62 = vld [vmem:[%s1 + $0x34] sm:$0xf]
  %v63 = vld [vmem:[%s1 + $0x38] sm:$0xf]
  %v64 = vld [vmem:[%s1 + $0x3c] sm:$0xf]
  %v75 = vunpack.c.l.b16 %v39
  %v76 = vunpack.c.l.b16 %v40
  %v77 = vunpack.c.l.b16 %v41
  %v78 = vunpack.c.l.b16 %v42
  %v79 = vunpack.c.l.b16 %v43
  %v80 = vunpack.c.l.b16 %v44
  %v81 = vunpack.c.l.b16 %v45
  %v82 = vunpack.c.l.b16 %v46
  %v83 = vunpack.c.l.b16 %v47
  %v84 = vunpack.c.l.b16 %v48
  %v85 = vpack.c.b16 %v76, %v75
  %v86 = vpack.c.b16 %v78, %v77
  %v87 = vpack.c.b16 %v80, %v79
  %v88 = vpack.c.b16 %v82, %v81
  %v89 = vpack.c.b16 %v84, %v83
  %v111 = vunpack.c.l.b16 %v49
  %v112 = vunpack.c.l.b16 %v50
  %v113 = vunpack.c.l.b16 %v51
  %v114 = vunpack.c.l.b16 %v52
  %v115 = vunpack.c.l.b16 %v53
  %v116 = vunpack.c.l.b16 %v54
  %v117 = vunpack.c.l.b16 %v55
  %v118 = vunpack.c.l.b16 %v56
  %v119 = vunpack.c.l.b16 %v57
  %v120 = vunpack.c.l.b16 %v58
  %v121 = vunpack.c.l.b16 %v59
  %v122 = vunpack.c.l.b16 %v60
  %v123 = vunpack.c.l.b16 %v61
  %v124 = vunpack.c.l.b16 %v62
  %v125 = vunpack.c.l.b16 %v63
  %v126 = vunpack.c.l.b16 %v64
  %v127 = vpack.c.b16 %v112, %v111
  %v128 = vpack.c.b16 %v114, %v113
  %v129 = vpack.c.b16 %v116, %v115
  %v130 = vpack.c.b16 %v118, %v117
  %v131 = vpack.c.b16 %v120, %v119
  %v132 = vpack.c.b16 %v122, %v121
  %v133 = vpack.c.b16 %v124, %v123
  %v134 = vpack.c.b16 %v126, %v125
  %143 = vmatprep.subr.bf16.mxu0 0
  %144 = vmatpush1.bf16.msra.mxu0 %v127
  %145 = vmatprep.subr.bf16.mxu0 0
  %146 = vmatpush1.bf16.msra.mxu0 %v128
  %147 = vmatprep.subr.bf16.mxu0 0
  %148 = vmatpush1.bf16.msra.mxu0 %v129
  %149 = vmatprep.subr.bf16.mxu0 0
  %150 = vmatpush1.bf16.msra.mxu0 %v130
  %151 = vmatprep.subr.bf16.mxu0 0
  %152 = vmatpush1.bf16.msra.mxu0 %v131
  %153 = vmatprep.subr.bf16.mxu0 0
  %154 = vmatpush1.bf16.msra.mxu0 %v132
  %155 = vmatprep.subr.bf16.mxu0 0
  %156 = vmatpush1.bf16.msra.mxu0 %v133
  %157 = vmatprep.subr.bf16.mxu0 0
  %158 = vmatpush1.bf16.msra.mxu0 %v134
  %159 = vmatprep.subr.bf16.mxu0 0
  %160 = vmatpush1.bf16.msra.mxu0 0
  %161 = vmatprep.subr.bf16.mxu0 0
  %162 = vmatpush1.bf16.msra.mxu0 0
  %163 = vmatprep.subr.bf16.mxu0 0
  %164 = vmatpush1.bf16.msra.mxu0 0
  %165 = vmatprep.subr.bf16.mxu0 0
  %166 = vmatpush1.bf16.msra.mxu0 0
  %167 = vmatprep.subr.bf16.mxu0 0
  %168 = vmatpush1.bf16.msra.mxu0 0
  %169 = vmatprep.subr.bf16.mxu0 0
  %170 = vmatpush1.bf16.msra.mxu0 0
  %171 = vmatprep.subr.bf16.mxu0 0
  %172 = vmatpush1.bf16.msra.mxu0 0
  %173 = vmatprep.subr.bf16.mxu0 0
  %174 = vmatpush1.bf16.msra.mxu0 0
  %175 = vmatprep.mubr.bf16.mxu0 0
  %176 = vmatmul.mubr.bf16.gmra.mrb[0].mxu0 %v85
  %v177 = vpop.f32.mrb[0].mxu0
  %v178 = vadd.f32 0.0, %v177
  %v179 = vpop.f32.mrb[0].mxu0
  %v180 = vpop.f32.mrb[0].mxu0
  %v181 = vadd.f32 0.0, %v180
  %v182 = vpop.f32.mrb[0].mxu0
  %183 = vmatprep.mubr.bf16.mxu0 0
  %184 = vmatmul.mubr.bf16.gmra.mrb[0].mxu0 %v86
  %v185 = vpop.f32.mrb[0].mxu0
  %v186 = vadd.f32 0.0, %v185
  %v187 = vpop.f32.mrb[0].mxu0
  %v188 = vpop.f32.mrb[0].mxu0
  %v189 = vadd.f32 0.0, %v188
  %v190 = vpop.f32.mrb[0].mxu0
  %191 = vmatprep.mubr.bf16.mxu0 0
  %192 = vmatmul.mubr.bf16.gmra.mrb[0].mxu0 %v87
  %v193 = vpop.f32.mrb[0].mxu0
  %v194 = vadd.f32 0.0, %v193
  %v195 = vpop.f32.mrb[0].mxu0
  %v196 = vpop.f32.mrb[0].mxu0
  %v197 = vadd.f32 0.0, %v196
  %v198 = vpop.f32.mrb[0].mxu0
  %199 = vmatprep.mubr.bf16.mxu0 0
  %200 = vmatmul.mubr.bf16.gmra.mrb[0].mxu0 %v88
  %v201 = vpop.f32.mrb[0].mxu0
  %v202 = vadd.f32 0.0, %v201
  %v203 = vpop.f32.mrb[0].mxu0
  %v204 = vpop.f32.mrb[0].mxu0
  %v205 = vadd.f32 0.0, %v204
  %v206 = vpop.f32.mrb[0].mxu0
  %207 = vmatprep.mubr.bf16.mxu0 0
  %208 = vmatmul.mubr.bf16.gmra.mrb[0].mxu0 %v89
  %v209 = vpop.f32.mrb[0].mxu0
  %v210 = vadd.f32 0.0, %v209
  %v211 = vpop.f32.mrb[0].mxu0
  %v212 = vpop.f32.mrb[0].mxu0
  %v213 = vadd.f32 0.0, %v212
  %v214 = vpop.f32.mrb[0].mxu0
  %215 = vdwg.mxu0
  %v216 = vadd.f32 %v29, %v178
  %v217 = vadd.f32 %v30, %v181
  %v218 = vadd.f32 %v31, %v186
  %v219 = vadd.f32 %v32, %v189
  %v220 = vadd.f32 %v33, %v194
  %v221 = vadd.f32 %v34, %v197
  %v222 = vadd.f32 %v35, %v202
  %v223 = vadd.f32 %v36, %v205
  %v224 = vadd.f32 %v37, %v210
  %v225 = vadd.f32 %v38, %v213
  %226 = vst [vmem:[#allocation2] sm:$0xff] %v216
  %227 = vst [vmem:[#allocation2 + $0x8] sm:$0xff] %v217
  %228 = vst [vmem:[#allocation2 + $0x10] sm:$0xff] %v218
  %229 = vst [vmem:[#allocation2 + $0x18] sm:$0xff] %v219
  %230 = vst [vmem:[#allocation2 + $0x20] sm:$0xff] %v220
  %231 = vst [vmem:[#allocation2 + $0x28] sm:$0xff] %v221
  %232 = vst [vmem:[#allocation2 + $0x30] sm:$0xff] %v222
  %233 = vst [vmem:[#allocation2 + $0x38] sm:$0xff] %v223
  %234 = vst [vmem:[#allocation2 + $0x40] sm:$0xff] %v224
  %235 = vst [vmem:[#allocation2 + $0x48] sm:$0xff] %v225
  // Predicated region
  $region18: #{_lambda_.8} parent=0 // pred_check
    %p236 = pneg %p15
  $region19: #{_lambda_.8} parent=0 // pred_check_branch
    %238 = sbr.rel (%p236) target = $region21
  $region20: #{_lambda_.8} parent=0 // pred_region
    %v239 = vld [vmem:[#allocation2] sm:$0xff]
    %v240 = vld [vmem:[#allocation2 + $0x8] sm:$0xff]
    %v241 = vld [vmem:[#allocation2 + $0x10] sm:$0xff]
    %v242 = vld [vmem:[#allocation2 + $0x18] sm:$0xff]
    %v243 = vld [vmem:[#allocation2 + $0x20] sm:$0xff]
    %v244 = vld [vmem:[#allocation2 + $0x28] sm:$0xff]
    %v245 = vld [vmem:[#allocation2 + $0x30] sm:$0xff]
    %v246 = vld [vmem:[#allocation2 + $0x38] sm:$0xff]
    %v247 = vld [vmem:[#allocation2 + $0x40] sm:$0xff]
    %v248 = vld [vmem:[#allocation2 + $0x48] sm:$0xff]
    %v249 = vld [vmem:[%s2] sm:$0x1]
    %v251 = vlaneseq
    %v252 = vshrl.u32 %v251, 7
    %v253 = vsub.s32 0, %v252
    %v254 = vrot.slane %v249, %v253
    %v256 = vadd.f32 %v239, %v254
    %v257 = vadd.f32 %v240, %v254
    %v258 = vadd.f32 %v241, %v254
    %v259 = vadd.f32 %v242, %v254
    %v260 = vadd.f32 %v243, %v254
    %v261 = vadd.f32 %v244, %v254
    %v262 = vadd.f32 %v245, %v254
    %v263 = vadd.f32 %v246, %v254
    %v264 = vadd.f32 %v247, %v254
    %v265 = vadd.f32 %v248, %v254
    %v266 = vmax.f32 %v256, 0.0
    %v267 = vmax.f32 %v257, 0.0
    %v268 = vmax.f32 %v258, 0.0
    %v269 = vmax.f32 %v259, 0.0
    %v270 = vmax.f32 %v260, 0.0
    %v271 = vmax.f32 %v261, 0.0
    %v272 = vmax.f32 %v262, 0.0
    %v273 = vmax.f32 %v263, 0.0
    %v274 = vmax.f32 %v264, 0.0
    %v275 = vmax.f32 %v265, 0.0
    %v276 = vpack.c.bf16 %v267, %v266
    %v277 = vpack.c.bf16 %v269, %v268
    %v278 = vpack.c.bf16 %v271, %v270
    %v279 = vpack.c.bf16 %v273, %v272
    %v280 = vpack.c.bf16 %v275, %v274
    %v286 = vunpack.c.l.b16 %v276
    %v287 = vunpack.c.h.b16 %v276
    %v288 = vunpack.c.l.b16 %v277
    %v289 = vunpack.c.h.b16 %v277
    %v290 = vunpack.c.l.b16 %v278
    %v291 = vunpack.c.h.b16 %v278
    %v292 = vunpack.c.l.b16 %v279
    %v293 = vunpack.c.h.b16 %v279
    %v294 = vunpack.c.l.b16 %v280
    %v295 = vunpack.c.h.b16 %v280
    %v296 = vpack.c.b16 %v286, %v286
    %v297 = vpack.c.b16 %v287, %v287
    %v298 = vpack.c.b16 %v288, %v288
    %v299 = vpack.c.b16 %v289, %v289
    %v300 = vpack.c.b16 %v290, %v290
    %v301 = vpack.c.b16 %v291, %v291
    %v302 = vpack.c.b16 %v292, %v292
    %v303 = vpack.c.b16 %v293, %v293
    %v304 = vpack.c.b16 %v294, %v294
    %v305 = vpack.c.b16 %v295, %v295
    %316 = vst [vmem:[%s3] sm:$0xf] %v296
    %317 = vst [vmem:[%s3 + $0x4] sm:$0xf] %v297
    %318 = vst [vmem:[%s3 + $0x8] sm:$0xf] %v298
    %319 = vst [vmem:[%s3 + $0xc] sm:$0xf] %v299
    %320 = vst [vmem:[%s3 + $0x10] sm:$0xf] %v300
    %321 = vst [vmem:[%s3 + $0x14] sm:$0xf] %v301
    %322 = vst [vmem:[%s3 + $0x18] sm:$0xf] %v302
    %323 = vst [vmem:[%s3 + $0x1c] sm:$0xf] %v303
    %324 = vst [vmem:[%s3 + $0x20] sm:$0xf] %v304
    %325 = vst [vmem:[%s3 + $0x24] sm:$0xf] %v305
  $region21: #{_lambda_.8} parent=0 // pred_fallthru
    _
  // Predicated region
  $region22: #{_lambda_.8} parent=0 // pred_check
    _
  $region23: #{_lambda_.8} parent=0 // pred_check_branch
    %327 = sbr.rel (0) target = $region25
  $region24: #{_lambda_.8} parent=0 // pred_region
    _
  $region25: #{_lambda_.8} parent=0 // pred_fallthru
    _
  // Predicated region
  $region26: #{_lambda_.8} parent=0 // pred_check
    _
  $region27: #{_lambda_.8} parent=0 // pred_check_branch
    %329 = sbr.rel (0) target = $region29
  $region28: #{_lambda_.8} parent=0 // pred_region
    _
  $region29: #{_lambda_.8} parent=0 // pred_fallthru
    _

// kernel: _lambda_.9
$region0: #{_lambda_.9}
  #allocation0 [shape = 'u32[]', space=smem, size = 0x4, offset = 0x4, fixed_abs, tag = 'smem constant byte address 0x4 - core index']
  #allocation1 [shape = 'u32[144,128]{1,0:T(1,128)}', space=vmem, size = 0x12000, scoped, tag = 'internal scratch']
  #allocation2 [shape = 'f32[80,128]{1,0:T(8,128)}', space=vmem, size = 0xa000, scoped, tag = 'scratch operand']
  %s0 = inlined_call_operand.vmem [shape: bf16[80,128], index: 0, kind: input, shape index: {}]
  %s1 = inlined_call_operand.vmem [shape: bf16[128,128], index: 1, kind: input, shape index: {}]
  %s2 = inlined_call_operand.vmem [shape: f32[1,128], index: 2, kind: input, shape index: {}]
  %s3 = inlined_call_operand.vmem [shape: bf16[80,128], index: 3, kind: output, shape index: {}]
  %s4 = sld [smem:[#allocation0]]
  $region30: #{_lambda_.9} parent=0
    _
  %s6 = ssub.s32 1, %s4
  %s7 = scalar_select 0, %s6, %s4
  // Predicated region
  $region2: #{_lambda_.9} parent=0 // pred_check
    _
  $region3: #{_lambda_.9} parent=0 // pred_check_branch
    %9 = sbr.rel (0) target = $region5
  $region4: #{_lambda_.9} parent=0 // pred_region
    _
  $region5: #{_lambda_.9} parent=0 // pred_fallthru
    _
  // Predicated region
  $region6: #{_lambda_.9} parent=0 // pred_check
    _
  $region7: #{_lambda_.9} parent=0 // pred_check_branch
    %11 = sbr.rel (0) target = $region9
  $region8: #{_lambda_.9} parent=0 // pred_region
    _
  $region9: #{_lambda_.9} parent=0 // pred_fallthru
    _
  // Predicated region
  $region10: #{_lambda_.9} parent=0 // pred_check
    _
  $region11: #{_lambda_.9} parent=0 // pred_check_branch
    %13 = sbr.rel (0) target = $region13
  $region12: #{_lambda_.9} parent=0 // pred_region
    _
  $region13: #{_lambda_.9} parent=0 // pred_fallthru
    _
  %p15 = scmp.eq.s32.totalorder 0, 0
  // Predicated region
  $region14: #{_lambda_.9} parent=0 // pred_check
    %p16 = pneg %p15
  $region15: #{_lambda_.9} parent=0 // pred_check_branch
    %18 = sbr.rel (%p16) target = $region17
  $region16: #{_lambda_.9} parent=0 // pred_region
    %19 = vst [vmem:[#allocation2] sm:$0xff] 0.0
    %20 = vst [vmem:[#allocation2 + $0x8] sm:$0xff] 0.0
    %21 = vst [vmem:[#allocation2 + $0x10] sm:$0xff] 0.0
    %22 = vst [vmem:[#allocation2 + $0x18] sm:$0xff] 0.0
    %23 = vst [vmem:[#allocation2 + $0x20] sm:$0xff] 0.0
    %24 = vst [vmem:[#allocation2 + $0x28] sm:$0xff] 0.0
    %25 = vst [vmem:[#allocation2 + $0x30] sm:$0xff] 0.0
    %26 = vst [vmem:[#allocation2 + $0x38] sm:$0xff] 0.0
    %27 = vst [vmem:[#allocation2 + $0x40] sm:$0xff] 0.0
    %28 = vst [vmem:[#allocation2 + $0x48] sm:$0xff] 0.0
  $region17: #{_lambda_.9} parent=0 // pred_fallthru
    _
  %v29 = vld [vmem:[#allocation2] sm:$0xff]
  %v30 = vld [vmem:[#allocation2 + $0x8] sm:$0xff]
  %v31 = vld [vmem:[#allocation2 + $0x10] sm:$0xff]
  %v32 = vld [vmem:[#allocation2 + $0x18] sm:$0xff]
  %v33 = vld [vmem:[#allocation2 + $0x20] sm:$0xff]
  %v34 = vld [vmem:[#allocation2 + $0x28] sm:$0xff]
  %v35 = vld [vmem:[#allocation2 + $0x30] sm:$0xff]
  %v36 = vld [vmem:[#allocation2 + $0x38] sm:$0xff]
  %v37 = vld [vmem:[#allocation2 + $0x40] sm:$0xff]
  %v38 = vld [vmem:[#allocation2 + $0x48] sm:$0xff]
  %v39 = vld [vmem:[%s0] sm:$0xf]
  %v40 = vld [vmem:[%s0 + $0x4] sm:$0xf]
  %v41 = vld [vmem:[%s0 + $0x8] sm:$0xf]
  %v42 = vld [vmem:[%s0 + $0xc] sm:$0xf]
  %v43 = vld [vmem:[%s0 + $0x10] sm:$0xf]
  %v44 = vld [vmem:[%s0 + $0x14] sm:$0xf]
  %v45 = vld [vmem:[%s0 + $0x18] sm:$0xf]
  %v46 = vld [vmem:[%s0 + $0x1c] sm:$0xf]
  %v47 = vld [vmem:[%s0 + $0x20] sm:$0xf]
  %v48 = vld [vmem:[%s0 + $0x24] sm:$0xf]
  %v49 = vld [vmem:[%s1] sm:$0xf]
  %v50 = vld [vmem:[%s1 + $0x4] sm:$0xf]
  %v51 = vld [vmem:[%s1 + $0x8] sm:$0xf]
  %v52 = vld [vmem:[%s1 + $0xc] sm:$0xf]
  %v53 = vld [vmem:[%s1 + $0x10] sm:$0xf]
  %v54 = vld [vmem:[%s1 + $0x14] sm:$0xf]
  %v55 = vld [vmem:[%s1 + $0x18] sm:$0xf]
  %v56 = vld [vmem:[%s1 + $0x1c] sm:$0xf]
  %v57 = vld [vmem:[%s1 + $0x20] sm:$0xf]
  %v58 = vld [vmem:[%s1 + $0x24] sm:$0xf]
  %v59 = vld [vmem:[%s1 + $0x28] sm:$0xf]
  %v60 = vld [vmem:[%s1 + $0x2c] sm:$0xf]
  %v61 = vld [vmem:[%s1 + $0x30] sm:$0xf]
  %v62 = vld [vmem:[%s1 + $0x34] sm:$0xf]
  %v63 = vld [vmem:[%s1 + $0x38] sm:$0xf]
  %v64 = vld [vmem:[%s1 + $0x3c] sm:$0xf]
  %v75 = vunpack.c.l.b16 %v39
  %v76 = vunpack.c.l.b16 %v40
  %v77 = vunpack.c.l.b16 %v41
  %v78 = vunpack.c.l.b16 %v42
  %v79 = vunpack.c.l.b16 %v43
  %v80 = vunpack.c.l.b16 %v44
  %v81 = vunpack.c.l.b16 %v45
  %v82 = vunpack.c.l.b16 %v46
  %v83 = vunpack.c.l.b16 %v47
  %v84 = vunpack.c.l.b16 %v48
  %v85 = vpack.c.b16 %v76, %v75
  %v86 = vpack.c.b16 %v78, %v77
  %v87 = vpack.c.b16 %v80, %v79
  %v88 = vpack.c.b16 %v82, %v81
  %v89 = vpack.c.b16 %v84, %v83
  %v111 = vunpack.c.l.b16 %v49
  %v112 = vunpack.c.l.b16 %v50
  %v113 = vunpack.c.l.b16 %v51
  %v114 = vunpack.c.l.b16 %v52
  %v115 = vunpack.c.l.b16 %v53
  %v116 = vunpack.c.l.b16 %v54
  %v117 = vunpack.c.l.b16 %v55
  %v118 = vunpack.c.l.b16 %v56
  %v119 = vunpack.c.l.b16 %v57
  %v120 = vunpack.c.l.b16 %v58
  %v121 = vunpack.c.l.b16 %v59
  %v122 = vunpack.c.l.b16 %v60
  %v123 = vunpack.c.l.b16 %v61
  %v124 = vunpack.c.l.b16 %v62
  %v125 = vunpack.c.l.b16 %v63
  %v126 = vunpack.c.l.b16 %v64
  %v127 = vpack.c.b16 %v112, %v111
  %v128 = vpack.c.b16 %v114, %v113
  %v129 = vpack.c.b16 %v116, %v115
  %v130 = vpack.c.b16 %v118, %v117
  %v131 = vpack.c.b16 %v120, %v119
  %v132 = vpack.c.b16 %v122, %v121
  %v133 = vpack.c.b16 %v124, %v123
  %v134 = vpack.c.b16 %v126, %v125
  %143 = vmatprep.subr.bf16.mxu0 0
  %144 = vmatpush1.bf16.msra.mxu0 %v127
  %145 = vmatprep.subr.bf16.mxu0 0
  %146 = vmatpush1.bf16.msra.mxu0 %v128
  %147 = vmatprep.subr.bf16.mxu0 0
  %148 = vmatpush1.bf16.msra.mxu0 %v129
  %149 = vmatprep.subr.bf16.mxu0 0
  %150 = vmatpush1.bf16.msra.mxu0 %v130
  %151 = vmatprep.subr.bf16.mxu0 0
  %152 = vmatpush1.bf16.msra.mxu0 %v131
  %153 = vmatprep.subr.bf16.mxu0 0
  %154 = vmatpush1.bf16.msra.mxu0 %v132
  %155 = vmatprep.subr.bf16.mxu0 0
  %156 = vmatpush1.bf16.msra.mxu0 %v133
  %157 = vmatprep.subr.bf16.mxu0 0
  %158 = vmatpush1.bf16.msra.mxu0 %v134
  %159 = vmatprep.subr.bf16.mxu0 0
  %160 = vmatpush1.bf16.msra.mxu0 0
  %161 = vmatprep.subr.bf16.mxu0 0
  %162 = vmatpush1.bf16.msra.mxu0 0
  %163 = vmatprep.subr.bf16.mxu0 0
  %164 = vmatpush1.bf16.msra.mxu0 0
  %165 = vmatprep.subr.bf16.mxu0 0
  %166 = vmatpush1.bf16.msra.mxu0 0
  %167 = vmatprep.subr.bf16.mxu0 0
  %168 = vmatpush1.bf16.msra.mxu0 0
  %169 = vmatprep.subr.bf16.mxu0 0
  %170 = vmatpush1.bf16.msra.mxu0 0
  %171 = vmatprep.subr.bf16.mxu0 0
  %172 = vmatpush1.bf16.msra.mxu0 0
  %173 = vmatprep.subr.bf16.mxu0 0
  %174 = vmatpush1.bf16.msra.mxu0 0
  %175 = vmatprep.mubr.bf16.mxu0 0
  %176 = vmatmul.mubr.bf16.gmra.mrb[0].mxu0 %v85
  %v177 = vpop.f32.mrb[0].mxu0
  %v178 = vadd.f32 0.0, %v177
  %v179 = vpop.f32.mrb[0].mxu0
  %v180 = vpop.f32.mrb[0].mxu0
  %v181 = vadd.f32 0.0, %v180
  %v182 = vpop.f32.mrb[0].mxu0
  %183 = vmatprep.mubr.bf16.mxu0 0
  %184 = vmatmul.mubr.bf16.gmra.mrb[0].mxu0 %v86
  %v185 = vpop.f32.mrb[0].mxu0
  %v186 = vadd.f32 0.0, %v185
  %v187 = vpop.f32.mrb[0].mxu0
  %v188 = vpop.f32.mrb[0].mxu0
  %v189 = vadd.f32 0.0, %v188
  %v190 = vpop.f32.mrb[0].mxu0
  %191 = vmatprep.mubr.bf16.mxu0 0
  %192 = vmatmul.mubr.bf16.gmra.mrb[0].mxu0 %v87
  %v193 = vpop.f32.mrb[0].mxu0
  %v194 = vadd.f32 0.0, %v193
  %v195 = vpop.f32.mrb[0].mxu0
  %v196 = vpop.f32.mrb[0].mxu0
  %v197 = vadd.f32 0.0, %v196
  %v198 = vpop.f32.mrb[0].mxu0
  %199 = vmatprep.mubr.bf16.mxu0 0
  %200 = vmatmul.mubr.bf16.gmra.mrb[0].mxu0 %v88
  %v201 = vpop.f32.mrb[0].mxu0
  %v202 = vadd.f32 0.0, %v201
  %v203 = vpop.f32.mrb[0].mxu0
  %v204 = vpop.f32.mrb[0].mxu0
  %v205 = vadd.f32 0.0, %v204
  %v206 = vpop.f32.mrb[0].mxu0
  %207 = vmatprep.mubr.bf16.mxu0 0
  %208 = vmatmul.mubr.bf16.gmra.mrb[0].mxu0 %v89
  %v209 = vpop.f32.mrb[0].mxu0
  %v210 = vadd.f32 0.0, %v209
  %v211 = vpop.f32.mrb[0].mxu0
  %v212 = vpop.f32.mrb[0].mxu0
  %v213 = vadd.f32 0.0, %v212
  %v214 = vpop.f32.mrb[0].mxu0
  %215 = vdwg.mxu0
  %v216 = vadd.f32 %v29, %v178
  %v217 = vadd.f32 %v30, %v181
  %v218 = vadd.f32 %v31, %v186
  %v219 = vadd.f32 %v32, %v189
  %v220 = vadd.f32 %v33, %v194
  %v221 = vadd.f32 %v34, %v197
  %v222 = vadd.f32 %v35, %v202
  %v223 = vadd.f32 %v36, %v205
  %v224 = vadd.f32 %v37, %v210
  %v225 = vadd.f32 %v38, %v213
  %226 = vst [vmem:[#allocation2] sm:$0xff] %v216
  %227 = vst [vmem:[#allocation2 + $0x8] sm:$0xff] %v217
  %228 = vst [vmem:[#allocation2 + $0x10] sm:$0xff] %v218
  %229 = vst [vmem:[#allocation2 + $0x18] sm:$0xff] %v219
  %230 = vst [vmem:[#allocation2 + $0x20] sm:$0xff] %v220
  %231 = vst [vmem:[#allocation2 + $0x28] sm:$0xff] %v221
  %232 = vst [vmem:[#allocation2 + $0x30] sm:$0xff] %v222
  %233 = vst [vmem:[#allocation2 + $0x38] sm:$0xff] %v223
  %234 = vst [vmem:[#allocation2 + $0x40] sm:$0xff] %v224
  %235 = vst [vmem:[#allocation2 + $0x48] sm:$0xff] %v225
  // Predicated region
  $region18: #{_lambda_.9} parent=0 // pred_check
    %p236 = pneg %p15
  $region19: #{_lambda_.9} parent=0 // pred_check_branch
    %238 = sbr.rel (%p236) target = $region21
  $region20: #{_lambda_.9} parent=0 // pred_region
    %v239 = vld [vmem:[#allocation2] sm:$0xff]
    %v240 = vld [vmem:[#allocation2 + $0x8] sm:$0xff]
    %v241 = vld [vmem:[#allocation2 + $0x10] sm:$0xff]
    %v242 = vld [vmem:[#allocation2 + $0x18] sm:$0xff]
    %v243 = vld [vmem:[#allocation2 + $0x20] sm:$0xff]
    %v244 = vld [vmem:[#allocation2 + $0x28] sm:$0xff]
    %v245 = vld [vmem:[#allocation2 + $0x30] sm:$0xff]
    %v246 = vld [vmem:[#allocation2 + $0x38] sm:$0xff]
    %v247 = vld [vmem:[#allocation2 + $0x40] sm:$0xff]
    %v248 = vld [vmem:[#allocation2 + $0x48] sm:$0xff]
    %v249 = vld [vmem:[%s2] sm:$0x1]
    %v251 = vlaneseq
    %v252 = vshrl.u32 %v251, 7
    %v253 = vsub.s32 0, %v252
    %v254 = vrot.slane %v249, %v253
    %v256 = vadd.f32 %v239, %v254
    %v257 = vadd.f32 %v240, %v254
    %v258 = vadd.f32 %v241, %v254
    %v259 = vadd.f32 %v242, %v254
    %v260 = vadd.f32 %v243, %v254
    %v261 = vadd.f32 %v244, %v254
    %v262 = vadd.f32 %v245, %v254
    %v263 = vadd.f32 %v246, %v254
    %v264 = vadd.f32 %v247, %v254
    %v265 = vadd.f32 %v248, %v254
    %v266 = vpack.c.bf16 %v257, %v256
    %v267 = vpack.c.bf16 %v259, %v258
    %v268 = vpack.c.bf16 %v261, %v260
    %v269 = vpack.c.bf16 %v263, %v262
    %v270 = vpack.c.bf16 %v265, %v264
    %v276 = vunpack.c.l.b16 %v266
    %v277 = vunpack.c.h.b16 %v266
    %v278 = vunpack.c.l.b16 %v267
    %v279 = vunpack.c.h.b16 %v267
    %v280 = vunpack.c.l.b16 %v268
    %v281 = vunpack.c.h.b16 %v268
    %v282 = vunpack.c.l.b16 %v269
    %v283 = vunpack.c.h.b16 %v269
    %v284 = vunpack.c.l.b16 %v270
    %v285 = vunpack.c.h.b16 %v270
    %v286 = vpack.c.b16 %v276, %v276
    %v287 = vpack.c.b16 %v277, %v277
    %v288 = vpack.c.b16 %v278, %v278
    %v289 = vpack.c.b16 %v279, %v279
    %v290 = vpack.c.b16 %v280, %v280
    %v291 = vpack.c.b16 %v281, %v281
    %v292 = vpack.c.b16 %v282, %v282
    %v293 = vpack.c.b16 %v283, %v283
    %v294 = vpack.c.b16 %v284, %v284
    %v295 = vpack.c.b16 %v285, %v285
    %306 = vst [vmem:[%s3] sm:$0xf] %v286
    %307 = vst [vmem:[%s3 + $0x4] sm:$0xf] %v287
    %308 = vst [vmem:[%s3 + $0x8] sm:$0xf] %v288
    %309 = vst [vmem:[%s3 + $0xc] sm:$0xf] %v289
    %310 = vst [vmem:[%s3 + $0x10] sm:$0xf] %v290
    %311 = vst [vmem:[%s3 + $0x14] sm:$0xf] %v291
    %312 = vst [vmem:[%s3 + $0x18] sm:$0xf] %v292
    %313 = vst [vmem:[%s3 + $0x1c] sm:$0xf] %v293
    %314 = vst [vmem:[%s3 + $0x20] sm:$0xf] %v294
    %315 = vst [vmem:[%s3 + $0x24] sm:$0xf] %v295
  $region21: #{_lambda_.9} parent=0 // pred_fallthru
    _
  // Predicated region
  $region22: #{_lambda_.9} parent=0 // pred_check
    _
  $region23: #{_lambda_.9} parent=0 // pred_check_branch
    %317 = sbr.rel (0) target = $region25
  $region24: #{_lambda_.9} parent=0 // pred_region
    _
  $region25: #{_lambda_.9} parent=0 // pred_fallthru
    _
  // Predicated region
  $region26: #{_lambda_.9} parent=0 // pred_check
    _
  $region27: #{_lambda_.9} parent=0 // pred_check_branch
    %319 = sbr.rel (0) target = $region29
  $region28: #{_lambda_.9} parent=0 // pred_region
    _
  $region29: #{_lambda_.9} parent=0 // pred_fallthru
    _

// kernel: _lambda_.10
$region0: #{_lambda_.10}
  #allocation0 [shape = 'u32[]', space=smem, size = 0x4, offset = 0x4, fixed_abs, tag = 'smem constant byte address 0x4 - core index']
  #allocation1 [shape = 'u32[144,128]{1,0:T(1,128)}', space=vmem, size = 0x12000, scoped, tag = 'internal scratch']
  #allocation2 [shape = 'f32[256,128]{1,0:T(8,128)}', space=vmem, size = 0x20000, scoped, tag = 'scratch operand']
  %s0 = inlined_call_operand.vmem [shape: bf16[256,128], index: 0, kind: input, shape index: {}]
  %s1 = inlined_call_operand.vmem [shape: bf16[128,128], index: 1, kind: input, shape index: {}]
  %s2 = inlined_call_operand.vmem [shape: bf16[256,128], index: 2, kind: input, shape index: {}]
  %s3 = inlined_call_operand.vmem [shape: bf16[128,128], index: 3, kind: input, shape index: {}]
  %s4 = inlined_call_operand.vmem [shape: f32[1,128], index: 4, kind: input, shape index: {}]
  %s5 = inlined_call_operand.vmem [shape: bf16[256,128], index: 5, kind: output, shape index: {}]
  %s6 = sld [smem:[#allocation0]]
  $region38: #{_lambda_.10} parent=0
    _
  %s8 = ssub.s32 1, %s6
  %s9 = scalar_select 0, %s8, %s6
  // Predicated region
  $region2: #{_lambda_.10} parent=0 // pred_check
    _
  $region3: #{_lambda_.10} parent=0 // pred_check_branch
    %11 = sbr.rel (0) target = $region5
  $region4: #{_lambda_.10} parent=0 // pred_region
    _
  $region5: #{_lambda_.10} parent=0 // pred_fallthru
    _
  // Predicated region
  $region6: #{_lambda_.10} parent=0 // pred_check
    _
  $region7: #{_lambda_.10} parent=0 // pred_check_branch
    %13 = sbr.rel (0) target = $region9
  $region8: #{_lambda_.10} parent=0 // pred_region
    _
  $region9: #{_lambda_.10} parent=0 // pred_fallthru
    _
  // Predicated region
  $region10: #{_lambda_.10} parent=0 // pred_check
    _
  $region11: #{_lambda_.10} parent=0 // pred_check_branch
    %15 = sbr.rel (0) target = $region13
  $region12: #{_lambda_.10} parent=0 // pred_region
    _
  $region13: #{_lambda_.10} parent=0 // pred_fallthru
    _
  // Predicated region
  $region14: #{_lambda_.10} parent=0 // pred_check
    _
  $region15: #{_lambda_.10} parent=0 // pred_check_branch
    %17 = sbr.rel (0) target = $region17
  $region16: #{_lambda_.10} parent=0 // pred_region
    _
  $region17: #{_lambda_.10} parent=0 // pred_fallthru
    _
  // Predicated region
  $region18: #{_lambda_.10} parent=0 // pred_check
    _
  $region19: #{_lambda_.10} parent=0 // pred_check_branch
    %19 = sbr.rel (0) target = $region21
  $region20: #{_lambda_.10} parent=0 // pred_region
    _
  $region21: #{_lambda_.10} parent=0 // pred_fallthru
    _
  %p21 = scmp.eq.s32.totalorder 0, 0
  // Predicated region
  $region22: #{_lambda_.10} parent=0 // pred_check
    %p22 = pneg %p21
  $region23: #{_lambda_.10} parent=0 // pred_check_branch
    %24 = sbr.rel (%p22) target = $region25
  $region24: #{_lambda_.10} parent=0 // pred_region
    %25 = vst [vmem:[#allocation2] sm:$0xff] 0.0
    %26 = vst [vmem:[#allocation2 + $0x8] sm:$0xff] 0.0
    %27 = vst [vmem:[#allocation2 + $0x10] sm:$0xff] 0.0
    %28 = vst [vmem:[#allocation2 + $0x18] sm:$0xff] 0.0
    %29 = vst [vmem:[#allocation2 + $0x20] sm:$0xff] 0.0
    %30 = vst [vmem:[#allocation2 + $0x28] sm:$0xff] 0.0
    %31 = vst [vmem:[#allocation2 + $0x30] sm:$0xff] 0.0
    %32 = vst [vmem:[#allocation2 + $0x38] sm:$0xff] 0.0
    %33 = vst [vmem:[#allocation2 + $0x40] sm:$0xff] 0.0
    %34 = vst [vmem:[#allocation2 + $0x48] sm:$0xff] 0.0
    %35 = vst [vmem:[#allocation2 + $0x50] sm:$0xff] 0.0
    %36 = vst [vmem:[#allocation2 + $0x58] sm:$0xff] 0.0
    %37 = vst [vmem:[#allocation2 + $0x60] sm:$0xff] 0.0
    %38 = vst [vmem:[#allocation2 + $0x68] sm:$0xff] 0.0
    %39 = vst [vmem:[#allocation2 + $0x70] sm:$0xff] 0.0
    %40 = vst [vmem:[#allocation2 + $0x78] sm:$0xff] 0.0
    %41 = vst [vmem:[#allocation2 + $0x80] sm:$0xff] 0.0
    %42 = vst [vmem:[#allocation2 + $0x88] sm:$0xff] 0.0
    %43 = vst [vmem:[#allocation2 + $0x90] sm:$0xff] 0.0
    %44 = vst [vmem:[#allocation2 + $0x98] sm:$0xff] 0.0
    %45 = vst [vmem:[#allocation2 + $0xa0] sm:$0xff] 0.0
    %46 = vst [vmem:[#allocation2 + $0xa8] sm:$0xff] 0.0
    %47 = vst [vmem:[#allocation2 + $0xb0] sm:$0xff] 0.0
    %48 = vst [vmem:[#allocation2 + $0xb8] sm:$0xff] 0.0
    %49 = vst [vmem:[#allocation2 + $0xc0] sm:$0xff] 0.0
    %50 = vst [vmem:[#allocation2 + $0xc8] sm:$0xff] 0.0
    %51 = vst [vmem:[#allocation2 + $0xd0] sm:$0xff] 0.0
    %52 = vst [vmem:[#allocation2 + $0xd8] sm:$0xff] 0.0
    %53 = vst [vmem:[#allocation2 + $0xe0] sm:$0xff] 0.0
    %54 = vst [vmem:[#allocation2 + $0xe8] sm:$0xff] 0.0
    %55 = vst [vmem:[#allocation2 + $0xf0] sm:$0xff] 0.0
    %56 = vst [vmem:[#allocation2 + $0xf8] sm:$0xff] 0.0
  $region25: #{_lambda_.10} parent=0 // pred_fallthru
    _
  %v57 = vld [vmem:[#allocation2] sm:$0xff]
  %v58 = vld [vmem:[#allocation2 + $0x8] sm:$0xff]
  %v59 = vld [vmem:[#allocation2 + $0x10] sm:$0xff]
  %v60 = vld [vmem:[#allocation2 + $0x18] sm:$0xff]
  %v61 = vld [vmem:[#allocation2 + $0x20] sm:$0xff]
  %v62 = vld [vmem:[#allocation2 + $0x28] sm:$0xff]
  %v63 = vld [vmem:[#allocation2 + $0x30] sm:$0xff]
  %v64 = vld [vmem:[#allocation2 + $0x38] sm:$0xff]
  %v65 = vld [vmem:[#allocation2 + $0x40] sm:$0xff]
  %v66 = vld [vmem:[#allocation2 + $0x48] sm:$0xff]
  %v67 = vld [vmem:[#allocation2 + $0x50] sm:$0xff]
  %v68 = vld [vmem:[#allocation2 + $0x58] sm:$0xff]
  %v69 = vld [vmem:[#allocation2 + $0x60] sm:$0xff]
  %v70 = vld [vmem:[#allocation2 + $0x68] sm:$0xff]
  %v71 = vld [vmem:[#allocation2 + $0x70] sm:$0xff]
  %v72 = vld [vmem:[#allocation2 + $0x78] sm:$0xff]
  %v73 = vld [vmem:[#allocation2 + $0x80] sm:$0xff]
  %v74 = vld [vmem:[#allocation2 + $0x88] sm:$0xff]
  %v75 = vld [vmem:[#allocation2 + $0x90] sm:$0xff]
  %v76 = vld [vmem:[#allocation2 + $0x98] sm:$0xff]
  %v77 = vld [vmem:[#allocation2 + $0xa0] sm:$0xff]
  %v78 = vld [vmem:[#allocation2 + $0xa8] sm:$0xff]
  %v79 = vld [vmem:[#allocation2 + $0xb0] sm:$0xff]
  %v80 = vld [vmem:[#allocation2 + $0xb8] sm:$0xff]
  %v81 = vld [vmem:[#allocation2 + $0xc0] sm:$0xff]
  %v82 = vld [vmem:[#allocation2 + $0xc8] sm:$0xff]
  %v83 = vld [vmem:[#allocation2 + $0xd0] sm:$0xff]
  %v84 = vld [vmem:[#allocation2 + $0xd8] sm:$0xff]
  %v85 = vld [vmem:[#allocation2 + $0xe0] sm:$0xff]
  %v86 = vld [vmem:[#allocation2 + $0xe8] sm:$0xff]
  %v87 = vld [vmem:[#allocation2 + $0xf0] sm:$0xff]
  %v88 = vld [vmem:[#allocation2 + $0xf8] sm:$0xff]
  %v89 = vld [vmem:[%s0] sm:$0xf]
  %v90 = vld [vmem:[%s0 + $0x4] sm:$0xf]
  %v91 = vld [vmem:[%s0 + $0x8] sm:$0xf]
  %v92 = vld [vmem:[%s0 + $0xc] sm:$0xf]
  %v93 = vld [vmem:[%s0 + $0x10] sm:$0xf]
  %v94 = vld [vmem:[%s0 + $0x14] sm:$0xf]
  %v95 = vld [vmem:[%s0 + $0x18] sm:$0xf]
  %v96 = vld [vmem:[%s0 + $0x1c] sm:$0xf]
  %v97 = vld [vmem:[%s0 + $0x20] sm:$0xf]
  %v98 = vld [vmem:[%s0 + $0x24] sm:$0xf]
  %v99 = vld [vmem:[%s0 + $0x28] sm:$0xf]
  %v100 = vld [vmem:[%s0 + $0x2c] sm:$0xf]
  %v101 = vld [vmem:[%s0 + $0x30] sm:$0xf]
  %v102 = vld [vmem:[%s0 + $0x34] sm:$0xf]
  %v103 = vld [vmem:[%s0 + $0x38] sm:$0xf]
  %v104 = vld [vmem:[%s0 + $0x3c] sm:$0xf]
  %v105 = vld [vmem:[%s0 + $0x40] sm:$0xf]
  %v106 = vld [vmem:[%s0 + $0x44] sm:$0xf]
  %v107 = vld [vmem:[%s0 + $0x48] sm:$0xf]
  %v108 = vld [vmem:[%s0 + $0x4c] sm:$0xf]
  %v109 = vld [vmem:[%s0 + $0x50] sm:$0xf]
  %v110 = vld [vmem:[%s0 + $0x54] sm:$0xf]
  %v111 = vld [vmem:[%s0 + $0x58] sm:$0xf]
  %v112 = vld [vmem:[%s0 + $0x5c] sm:$0xf]
  %v113 = vld [vmem:[%s0 + $0x60] sm:$0xf]
  %v114 = vld [vmem:[%s0 + $0x64] sm:$0xf]
  %v115 = vld [vmem:[%s0 + $0x68] sm:$0xf]
  %v116 = vld [vmem:[%s0 + $0x6c] sm:$0xf]
  %v117 = vld [vmem:[%s0 + $0x70] sm:$0xf]
  %v118 = vld [vmem:[%s0 + $0x74] sm:$0xf]
  %v119 = vld [vmem:[%s0 + $0x78] sm:$0xf]
  %v120 = vld [vmem:[%s0 + $0x7c] sm:$0xf]
  %v121 = vld [vmem:[%s1] sm:$0xf]
  %v122 = vld [vmem:[%s1 + $0x4] sm:$0xf]
  %v123 = vld [vmem:[%s1 + $0x8] sm:$0xf]
  %v124 = vld [vmem:[%s1 + $0xc] sm:$0xf]
  %v125 = vld [vmem:[%s1 + $0x10] sm:$0xf]
  %v126 = vld [vmem:[%s1 + $0x14] sm:$0xf]
  %v127 = vld [vmem:[%s1 + $0x18] sm:$0xf]
  %v128 = vld [vmem:[%s1 + $0x1c] sm:$0xf]
  %v129 = vld [vmem:[%s1 + $0x20] sm:$0xf]
  %v130 = vld [vmem:[%s1 + $0x24] sm:$0xf]
  %v131 = vld [vmem:[%s1 + $0x28] sm:$0xf]
  %v132 = vld [vmem:[%s1 + $0x2c] sm:$0xf]
  %v133 = vld [vmem:[%s1 + $0x30] sm:$0xf]
  %v134 = vld [vmem:[%s1 + $0x34] sm:$0xf]
  %v135 = vld [vmem:[%s1 + $0x38] sm:$0xf]
  %v136 = vld [vmem:[%s1 + $0x3c] sm:$0xf]
  %v169 = vunpack.c.l.b16 %v89
  %v170 = vunpack.c.l.b16 %v90
  %v171 = vunpack.c.l.b16 %v91
  %v172 = vunpack.c.l.b16 %v92
  %v173 = vunpack.c.l.b16 %v93
  %v174 = vunpack.c.l.b16 %v94
  %v175 = vunpack.c.l.b16 %v95
  %v176 = vunpack.c.l.b16 %v96
  %v177 = vunpack.c.l.b16 %v97
  %v178 = vunpack.c.l.b16 %v98
  %v179 = vunpack.c.l.b16 %v99
  %v180 = vunpack.c.l.b16 %v100
  %v181 = vunpack.c.l.b16 %v101
  %v182 = vunpack.c.l.b16 %v102
  %v183 = vunpack.c.l.b16 %v103
  %v184 = vunpack.c.l.b16 %v104
  %v185 = vunpack.c.l.b16 %v105
  %v186 = vunpack.c.l.b16 %v106
  %v187 = vunpack.c.l.b16 %v107
  %v188 = vunpack.c.l.b16 %v108
  %v189 = vunpack.c.l.b16 %v109
  %v190 = vunpack.c.l.b16 %v110
  %v191 = vunpack.c.l.b16 %v111
  %v192 = vunpack.c.l.b16 %v112
  %v193 = vunpack.c.l.b16 %v113
  %v194 = vunpack.c.l.b16 %v114
  %v195 = vunpack.c.l.b16 %v115
  %v196 = vunpack.c.l.b16 %v116
  %v197 = vunpack.c.l.b16 %v117
  %v198 = vunpack.c.l.b16 %v118
  %v199 = vunpack.c.l.b16 %v119
  %v200 = vunpack.c.l.b16 %v120
  %v201 = vpack.c.b16 %v170, %v169
  %v202 = vpack.c.b16 %v172, %v171
  %v203 = vpack.c.b16 %v174, %v173
  %v204 = vpack.c.b16 %v176, %v175
  %v205 = vpack.c.b16 %v178, %v177
  %v206 = vpack.c.b16 %v180, %v179
  %v207 = vpack.c.b16 %v182, %v181
  %v208 = vpack.c.b16 %v184, %v183
  %v209 = vpack.c.b16 %v186, %v185
  %v210 = vpack.c.b16 %v188, %v187
  %v211 = vpack.c.b16 %v190, %v189
  %v212 = vpack.c.b16 %v192, %v191
  %v213 = vpack.c.b16 %v194, %v193
  %v214 = vpack.c.b16 %v196, %v195
  %v215 = vpack.c.b16 %v198, %v197
  %v216 = vpack.c.b16 %v200, %v199
  %v249 = vunpack.c.l.b16 %v121
  %v250 = vunpack.c.l.b16 %v122
  %v251 = vunpack.c.l.b16 %v123
  %v252 = vunpack.c.l.b16 %v124
  %v253 = vunpack.c.l.b16 %v125
  %v254 = vunpack.c.l.b16 %v126
  %v255 = vunpack.c.l.b16 %v127
  %v256 = vunpack.c.l.b16 %v128
  %v257 = vunpack.c.l.b16 %v129
  %v258 = vunpack.c.l.b16 %v130
  %v259 = vunpack.c.l.b16 %v131
  %v260 = vunpack.c.l.b16 %v132
  %v261 = vunpack.c.l.b16 %v133
  %v262 = vunpack.c.l.b16 %v134
  %v263 = vunpack.c.l.b16 %v135
  %v264 = vunpack.c.l.b16 %v136
  %v265 = vpack.c.b16 %v250, %v249
  %v266 = vpack.c.b16 %v252, %v251
  %v267 = vpack.c.b16 %v254, %v253
  %v268 = vpack.c.b16 %v256, %v255
  %v269 = vpack.c.b16 %v258, %v257
  %v270 = vpack.c.b16 %v260, %v259
  %v271 = vpack.c.b16 %v262, %v261
  %v272 = vpack.c.b16 %v264, %v263
  %281 = vmatprep.subr.bf16.mxu0 0
  %282 = vmatpush1.bf16.msra.mxu0 %v265
  %283 = vmatprep.subr.bf16.mxu0 0
  %284 = vmatpush1.bf16.msra.mxu0 %v266
  %285 = vmatprep.subr.bf16.mxu0 0
  %286 = vmatpush1.bf16.msra.mxu0 %v267
  %287 = vmatprep.subr.bf16.mxu0 0
  %288 = vmatpush1.bf16.msra.mxu0 %v268
  %289 = vmatprep.subr.bf16.mxu0 0
  %290 = vmatpush1.bf16.msra.mxu0 %v269
  %291 = vmatprep.subr.bf16.mxu0 0
  %292 = vmatpush1.bf16.msra.mxu0 %v270
  %293 = vmatprep.subr.bf16.mxu0 0
  %294 = vmatpush1.bf16.msra.mxu0 %v271
  %295 = vmatprep.subr.bf16.mxu0 0
  %296 = vmatpush1.bf16.msra.mxu0 %v272
  %297 = vmatprep.subr.bf16.mxu0 0
  %298 = vmatpush1.bf16.msra.mxu0 0
  %299 = vmatprep.subr.bf16.mxu0 0
  %300 = vmatpush1.bf16.msra.mxu0 0
  %301 = vmatprep.subr.bf16.mxu0 0
  %302 = vmatpush1.bf16.msra.mxu0 0
  %303 = vmatprep.subr.bf16.mxu0 0
  %304 = vmatpush1.bf16.msra.mxu0 0
  %305 = vmatprep.subr.bf16.mxu0 0
  %306 = vmatpush1.bf16.msra.mxu0 0
  %307 = vmatprep.subr.bf16.mxu0 0
  %308 = vmatpush1.bf16.msra.mxu0 0
  %309 = vmatprep.subr.bf16.mxu0 0
  %310 = vmatpush1.bf16.msra.mxu0 0
  %311 = vmatprep.subr.bf16.mxu0 0
  %312 = vmatpush1.bf16.msra.mxu0 0
  %313 = vmatprep.mubr.bf16.mxu0 0
  %314 = vmatmul.mubr.bf16.gmra.mrb[0].mxu0 %v201
  %v315 = vpop.f32.mrb[0].mxu0
  %v316 = vadd.f32 0.0, %v315
  %v317 = vpop.f32.mrb[0].mxu0
  %v318 = vpop.f32.mrb[0].mxu0
  %v319 = vadd.f32 0.0, %v318
  %v320 = vpop.f32.mrb[0].mxu0
  %321 = vmatprep.mubr.bf16.mxu0 0
  %322 = vmatmul.mubr.bf16.gmra.mrb[0].mxu0 %v202
  %v323 = vpop.f32.mrb[0].mxu0
  %v324 = vadd.f32 0.0, %v323
  %v325 = vpop.f32.mrb[0].mxu0
  %v326 = vpop.f32.mrb[0].mxu0
  %v327 = vadd.f32 0.0, %v326
  %v328 = vpop.f32.mrb[0].mxu0
  %329 = vmatprep.mubr.bf16.mxu0 0
  %330 = vmatmul.mubr.bf16.gmra.mrb[0].mxu0 %v203
  %v331 = vpop.f32.mrb[0].mxu0
  %v332 = vadd.f32 0.0, %v331
  %v333 = vpop.f32.mrb[0].mxu0
  %v334 = vpop.f32.mrb[0].mxu0
  %v335 = vadd.f32 0.0, %v334
  %v336 = vpop.f32.mrb[0].mxu0
  %337 = vmatprep.mubr.bf16.mxu0 0
  %338 = vmatmul.mubr.bf16.gmra.mrb[0].mxu0 %v204
  %v339 = vpop.f32.mrb[0].mxu0
  %v340 = vadd.f32 0.0, %v339
  %v341 = vpop.f32.mrb[0].mxu0
  %v342 = vpop.f32.mrb[0].mxu0
  %v343 = vadd.f32 0.0, %v342
  %v344 = vpop.f32.mrb[0].mxu0
  %345 = vmatprep.mubr.bf16.mxu0 0
  %346 = vmatmul.mubr.bf16.gmra.mrb[0].mxu0 %v205
  %v347 = vpop.f32.mrb[0].mxu0
  %v348 = vadd.f32 0.0, %v347
  %v349 = vpop.f32.mrb[0].mxu0
  %v350 = vpop.f32.mrb[0].mxu0
  %v351 = vadd.f32 0.0, %v350
  %v352 = vpop.f32.mrb[0].mxu0
  %353 = vmatprep.mubr.bf16.mxu0 0
  %354 = vmatmul.mubr.bf16.gmra.mrb[0].mxu0 %v206
  %v355 = vpop.f32.mrb[0].mxu0
  %v356 = vadd.f32 0.0, %v355
  %v357 = vpop.f32.mrb[0].mxu0
  %v358 = vpop.f32.mrb[0].mxu0
  %v359 = vadd.f32 0.0, %v358
  %v360 = vpop.f32.mrb[0].mxu0
  %361 = vmatprep.mubr.bf16.mxu0 0
  %362 = vmatmul.mubr.bf16.gmra.mrb[0].mxu0 %v207
  %v363 = vpop.f32.mrb[0].mxu0
  %v364 = vadd.f32 0.0, %v363
  %v365 = vpop.f32.mrb[0].mxu0
  %v366 = vpop.f32.mrb[0].mxu0
  %v367 = vadd.f32 0.0, %v366
  %v368 = vpop.f32.mrb[0].mxu0
  %369 = vmatprep.mubr.bf16.mxu0 0
  %370 = vmatmul.mubr.bf16.gmra.mrb[0].mxu0 %v208
  %v371 = vpop.f32.mrb[0].mxu0
  %v372 = vadd.f32 0.0, %v371
  %v373 = vpop.f32.mrb[0].mxu0
  %v374 = vpop.f32.mrb[0].mxu0
  %v375 = vadd.f32 0.0, %v374
  %v376 = vpop.f32.mrb[0].mxu0
  %377 = vmatprep.mubr.bf16.mxu0 0
  %378 = vmatmul.mubr.bf16.gmra.mrb[0].mxu0 %v209
  %v379 = vpop.f32.mrb[0].mxu0
  %v380 = vadd.f32 0.0, %v379
  %v381 = vpop.f32.mrb[0].mxu0
  %v382 = vpop.f32.mrb[0].mxu0
  %v383 = vadd.f32 0.0, %v382
  %v384 = vpop.f32.mrb[0].mxu0
  %385 = vmatprep.mubr.bf16.mxu0 0
  %386 = vmatmul.mubr.bf16.gmra.mrb[0].mxu0 %v210
  %v387 = vpop.f32.mrb[0].mxu0
  %v388 = vadd.f32 0.0, %v387
  %v389 = vpop.f32.mrb[0].mxu0
  %v390 = vpop.f32.mrb[0].mxu0
  %v391 = vadd.f32 0.0, %v390
  %v392 = vpop.f32.mrb[0].mxu0
  %393 = vmatprep.mubr.bf16.mxu0 0
  %394 = vmatmul.mubr.bf16.gmra.mrb[0].mxu0 %v211
  %v395 = vpop.f32.mrb[0].mxu0
  %v396 = vadd.f32 0.0, %v395
  %v397 = vpop.f32.mrb[0].mxu0
  %v398 = vpop.f32.mrb[0].mxu0
  %v399 = vadd.f32 0.0, %v398
  %v400 = vpop.f32.mrb[0].mxu0
  %401 = vmatprep.mubr.bf16.mxu0 0
  %402 = vmatmul.mubr.bf16.gmra.mrb[0].mxu0 %v212
  %v403 = vpop.f32.mrb[0].mxu0
  %v404 = vadd.f32 0.0, %v403
  %v405 = vpop.f32.mrb[0].mxu0
  %v406 = vpop.f32.mrb[0].mxu0
  %v407 = vadd.f32 0.0, %v406
  %v408 = vpop.f32.mrb[0].mxu0
  %409 = vmatprep.mubr.bf16.mxu0 0
  %410 = vmatmul.mubr.bf16.gmra.mrb[0].mxu0 %v213
  %v411 = vpop.f32.mrb[0].mxu0
  %v412 = vadd.f32 0.0, %v411
  %v413 = vpop.f32.mrb[0].mxu0
  %v414 = vpop.f32.mrb[0].mxu0
  %v415 = vadd.f32 0.0, %v414
  %v416 = vpop.f32.mrb[0].mxu0
  %417 = vmatprep.mubr.bf16.mxu0 0
  %418 = vmatmul.mubr.bf16.gmra.mrb[0].mxu0 %v214
  %v419 = vpop.f32.mrb[0].mxu0
  %v420 = vadd.f32 0.0, %v419
  %v421 = vpop.f32.mrb[0].mxu0
  %v422 = vpop.f32.mrb[0].mxu0
  %v423 = vadd.f32 0.0, %v422
  %v424 = vpop.f32.mrb[0].mxu0
  %425 = vmatprep.mubr.bf16.mxu0 0
  %426 = vmatmul.mubr.bf16.gmra.mrb[0].mxu0 %v215
  %v427 = vpop.f32.mrb[0].mxu0
  %v428 = vadd.f32 0.0, %v427
  %v429 = vpop.f32.mrb[0].mxu0
  %v430 = vpop.f32.mrb[0].mxu0
  %v431 = vadd.f32 0.0, %v430
  %v432 = vpop.f32.mrb[0].mxu0
  %433 = vmatprep.mubr.bf16.mxu0 0
  %434 = vmatmul.mubr.bf16.gmra.mrb[0].mxu0 %v216
  %v435 = vpop.f32.mrb[0].mxu0
  %v436 = vadd.f32 0.0, %v435
  %v437 = vpop.f32.mrb[0].mxu0
  %v438 = vpop.f32.mrb[0].mxu0
  %v439 = vadd.f32 0.0, %v438
  %v440 = vpop.f32.mrb[0].mxu0
  %441 = vdwg.mxu0
  %v442 = vadd.f32 %v57, %v316
  %v443 = vadd.f32 %v58, %v319
  %v444 = vadd.f32 %v59, %v324
  %v445 = vadd.f32 %v60, %v327
  %v446 = vadd.f32 %v61, %v332
  %v447 = vadd.f32 %v62, %v335
  %v448 = vadd.f32 %v63, %v340
  %v449 = vadd.f32 %v64, %v343
  %v450 = vadd.f32 %v65, %v348
  %v451 = vadd.f32 %v66, %v351
  %v452 = vadd.f32 %v67, %v356
  %v453 = vadd.f32 %v68, %v359
  %v454 = vadd.f32 %v69, %v364
  %v455 = vadd.f32 %v70, %v367
  %v456 = vadd.f32 %v71, %v372
  %v457 = vadd.f32 %v72, %v375
  %v458 = vadd.f32 %v73, %v380
  %v459 = vadd.f32 %v74, %v383
  %v460 = vadd.f32 %v75, %v388
  %v461 = vadd.f32 %v76, %v391
  %v462 = vadd.f32 %v77, %v396
  %v463 = vadd.f32 %v78, %v399
  %v464 = vadd.f32 %v79, %v404
  %v465 = vadd.f32 %v80, %v407
  %v466 = vadd.f32 %v81, %v412
  %v467 = vadd.f32 %v82, %v415
  %v468 = vadd.f32 %v83, %v420
  %v469 = vadd.f32 %v84, %v423
  %v470 = vadd.f32 %v85, %v428
  %v471 = vadd.f32 %v86, %v431
  %v472 = vadd.f32 %v87, %v436
  %v473 = vadd.f32 %v88, %v439
  %v474 = vld [vmem:[%s2] sm:$0xf]
  %v475 = vld [vmem:[%s2 + $0x4] sm:$0xf]
  %v476 = vld [vmem:[%s2 + $0x8] sm:$0xf]
  %v477 = vld [vmem:[%s2 + $0xc] sm:$0xf]
  %v478 = vld [vmem:[%s2 + $0x10] sm:$0xf]
  %v479 = vld [vmem:[%s2 + $0x14] sm:$0xf]
  %v480 = vld [vmem:[%s2 + $0x18] sm:$0xf]
  %v481 = vld [vmem:[%s2 + $0x1c] sm:$0xf]
  %v482 = vld [vmem:[%s2 + $0x20] sm:$0xf]
  %v483 = vld [vmem:[%s2 + $0x24] sm:$0xf]
  %v484 = vld [vmem:[%s2 + $0x28] sm:$0xf]
  %v485 = vld [vmem:[%s2 + $0x2c] sm:$0xf]
  %v486 = vld [vmem:[%s2 + $0x30] sm:$0xf]
  %v487 = vld [vmem:[%s2 + $0x34] sm:$0xf]
  %v488 = vld [vmem:[%s2 + $0x38] sm:$0xf]
  %v489 = vld [vmem:[%s2 + $0x3c] sm:$0xf]
  %v490 = vld [vmem:[%s2 + $0x40] sm:$0xf]
  %v491 = vld [vmem:[%s2 + $0x44] sm:$0xf]
  %v492 = vld [vmem:[%s2 + $0x48] sm:$0xf]
  %v493 = vld [vmem:[%s2 + $0x4c] sm:$0xf]
  %v494 = vld [vmem:[%s2 + $0x50] sm:$0xf]
  %v495 = vld [vmem:[%s2 + $0x54] sm:$0xf]
  %v496 = vld [vmem:[%s2 + $0x58] sm:$0xf]
  %v497 = vld [vmem:[%s2 + $0x5c] sm:$0xf]
  %v498 = vld [vmem:[%s2 + $0x60] sm:$0xf]
  %v499 = vld [vmem:[%s2 + $0x64] sm:$0xf]
  %v500 = vld [vmem:[%s2 + $0x68] sm:$0xf]
  %v501 = vld [vmem:[%s2 + $0x6c] sm:$0xf]
  %v502 = vld [vmem:[%s2 + $0x70] sm:$0xf]
  %v503 = vld [vmem:[%s2 + $0x74] sm:$0xf]
  %v504 = vld [vmem:[%s2 + $0x78] sm:$0xf]
  %v505 = vld [vmem:[%s2 + $0x7c] sm:$0xf]
  %v506 = vld [vmem:[%s3] sm:$0xf]
  %v507 = vld [vmem:[%s3 + $0x4] sm:$0xf]
  %v508 = vld [vmem:[%s3 + $0x8] sm:$0xf]
  %v509 = vld [vmem:[%s3 + $0xc] sm:$0xf]
  %v510 = vld [vmem:[%s3 + $0x10] sm:$0xf]
  %v511 = vld [vmem:[%s3 + $0x14] sm:$0xf]
  %v512 = vld [vmem:[%s3 + $0x18] sm:$0xf]
  %v513 = vld [vmem:[%s3 + $0x1c] sm:$0xf]
  %v514 = vld [vmem:[%s3 + $0x20] sm:$0xf]
  %v515 = vld [vmem:[%s3 + $0x24] sm:$0xf]
  %v516 = vld [vmem:[%s3 + $0x28] sm:$0xf]
  %v517 = vld [vmem:[%s3 + $0x2c] sm:$0xf]
  %v518 = vld [vmem:[%s3 + $0x30] sm:$0xf]
  %v519 = vld [vmem:[%s3 + $0x34] sm:$0xf]
  %v520 = vld [vmem:[%s3 + $0x38] sm:$0xf]
  %v521 = vld [vmem:[%s3 + $0x3c] sm:$0xf]
  %v554 = vunpack.c.l.b16 %v474
  %v555 = vunpack.c.l.b16 %v475
  %v556 = vunpack.c.l.b16 %v476
  %v557 = vunpack.c.l.b16 %v477
  %v558 = vunpack.c.l.b16 %v478
  %v559 = vunpack.c.l.b16 %v479
  %v560 = vunpack.c.l.b16 %v480
  %v561 = vunpack.c.l.b16 %v481
  %v562 = vunpack.c.l.b16 %v482
  %v563 = vunpack.c.l.b16 %v483
  %v564 = vunpack.c.l.b16 %v484
  %v565 = vunpack.c.l.b16 %v485
  %v566 = vunpack.c.l.b16 %v486
  %v567 = vunpack.c.l.b16 %v487
  %v568 = vunpack.c.l.b16 %v488
  %v569 = vunpack.c.l.b16 %v489
  %v570 = vunpack.c.l.b16 %v490
  %v571 = vunpack.c.l.b16 %v491
  %v572 = vunpack.c.l.b16 %v492
  %v573 = vunpack.c.l.b16 %v493
  %v574 = vunpack.c.l.b16 %v494
  %v575 = vunpack.c.l.b16 %v495
  %v576 = vunpack.c.l.b16 %v496
  %v577 = vunpack.c.l.b16 %v497
  %v578 = vunpack.c.l.b16 %v498
  %v579 = vunpack.c.l.b16 %v499
  %v580 = vunpack.c.l.b16 %v500
  %v581 = vunpack.c.l.b16 %v501
  %v582 = vunpack.c.l.b16 %v502
  %v583 = vunpack.c.l.b16 %v503
  %v584 = vunpack.c.l.b16 %v504
  %v585 = vunpack.c.l.b16 %v505
  %v586 = vpack.c.b16 %v555, %v554
  %v587 = vpack.c.b16 %v557, %v556
  %v588 = vpack.c.b16 %v559, %v558
  %v589 = vpack.c.b16 %v561, %v560
  %v590 = vpack.c.b16 %v563, %v562
  %v591 = vpack.c.b16 %v565, %v564
  %v592 = vpack.c.b16 %v567, %v566
  %v593 = vpack.c.b16 %v569, %v568
  %v594 = vpack.c.b16 %v571, %v570
  %v595 = vpack.c.b16 %v573, %v572
  %v596 = vpack.c.b16 %v575, %v574
  %v597 = vpack.c.b16 %v577, %v576
  %v598 = vpack.c.b16 %v579, %v578
  %v599 = vpack.c.b16 %v581, %v580
  %v600 = vpack.c.b16 %v583, %v582
  %v601 = vpack.c.b16 %v585, %v584
  %v634 = vunpack.c.l.b16 %v506
  %v635 = vunpack.c.l.b16 %v507
  %v636 = vunpack.c.l.b16 %v508
  %v637 = vunpack.c.l.b16 %v509
  %v638 = vunpack.c.l.b16 %v510
  %v639 = vunpack.c.l.b16 %v511
  %v640 = vunpack.c.l.b16 %v512
  %v641 = vunpack.c.l.b16 %v513
  %v642 = vunpack.c.l.b16 %v514
  %v643 = vunpack.c.l.b16 %v515
  %v644 = vunpack.c.l.b16 %v516
  %v645 = vunpack.c.l.b16 %v517
  %v646 = vunpack.c.l.b16 %v518
  %v647 = vunpack.c.l.b16 %v519
  %v648 = vunpack.c.l.b16 %v520
  %v649 = vunpack.c.l.b16 %v521
  %v650 = vpack.c.b16 %v635, %v634
  %v651 = vpack.c.b16 %v637, %v636
  %v652 = vpack.c.b16 %v639, %v638
  %v653 = vpack.c.b16 %v641, %v640
  %v654 = vpack.c.b16 %v643, %v642
  %v655 = vpack.c.b16 %v645, %v644
  %v656 = vpack.c.b16 %v647, %v646
  %v657 = vpack.c.b16 %v649, %v648
  %666 = vmatprep.subr.bf16.mxu0 0
  %667 = vmatpush1.bf16.msra.mxu0 %v650
  %668 = vmatprep.subr.bf16.mxu0 0
  %669 = vmatpush1.bf16.msra.mxu0 %v651
  %670 = vmatprep.subr.bf16.mxu0 0
  %671 = vmatpush1.bf16.msra.mxu0 %v652
  %672 = vmatprep.subr.bf16.mxu0 0
  %673 = vmatpush1.bf16.msra.mxu0 %v653
  %674 = vmatprep.subr.bf16.mxu0 0
  %675 = vmatpush1.bf16.msra.mxu0 %v654
  %676 = vmatprep.subr.bf16.mxu0 0
  %677 = vmatpush1.bf16.msra.mxu0 %v655
  %678 = vmatprep.subr.bf16.mxu0 0
  %679 = vmatpush1.bf16.msra.mxu0 %v656
  %680 = vmatprep.subr.bf16.mxu0 0
  %681 = vmatpush1.bf16.msra.mxu0 %v657
  %682 = vmatprep.subr.bf16.mxu0 0
  %683 = vmatpush1.bf16.msra.mxu0 0
  %684 = vmatprep.subr.bf16.mxu0 0
  %685 = vmatpush1.bf16.msra.mxu0 0
  %686 = vmatprep.subr.bf16.mxu0 0
  %687 = vmatpush1.bf16.msra.mxu0 0
  %688 = vmatprep.subr.bf16.mxu0 0
  %689 = vmatpush1.bf16.msra.mxu0 0
  %690 = vmatprep.subr.bf16.mxu0 0
  %691 = vmatpush1.bf16.msra.mxu0 0
  %692 = vmatprep.subr.bf16.mxu0 0
  %693 = vmatpush1.bf16.msra.mxu0 0
  %694 = vmatprep.subr.bf16.mxu0 0
  %695 = vmatpush1.bf16.msra.mxu0 0
  %696 = vmatprep.subr.bf16.mxu0 0
  %697 = vmatpush1.bf16.msra.mxu0 0
  %698 = vmatprep.mubr.bf16.mxu0 0
  %699 = vmatmul.mubr.bf16.gmra.mrb[0].mxu0 %v586
  %v700 = vpop.f32.mrb[0].mxu0
  %v701 = vadd.f32 0.0, %v700
  %v702 = vpop.f32.mrb[0].mxu0
  %v703 = vpop.f32.mrb[0].mxu0
  %v704 = vadd.f32 0.0, %v703
  %v705 = vpop.f32.mrb[0].mxu0
  %706 = vmatprep.mubr.bf16.mxu0 0
  %707 = vmatmul.mubr.bf16.gmra.mrb[0].mxu0 %v587
  %v708 = vpop.f32.mrb[0].mxu0
  %v709 = vadd.f32 0.0, %v708
  %v710 = vpop.f32.mrb[0].mxu0
  %v711 = vpop.f32.mrb[0].mxu0
  %v712 = vadd.f32 0.0, %v711
  %v713 = vpop.f32.mrb[0].mxu0
  %714 = vmatprep.mubr.bf16.mxu0 0
  %715 = vmatmul.mubr.bf16.gmra.mrb[0].mxu0 %v588
  %v716 = vpop.f32.mrb[0].mxu0
  %v717 = vadd.f32 0.0, %v716
  %v718 = vpop.f32.mrb[0].mxu0
  %v719 = vpop.f32.mrb[0].mxu0
  %v720 = vadd.f32 0.0, %v719
  %v721 = vpop.f32.mrb[0].mxu0
  %722 = vmatprep.mubr.bf16.mxu0 0
  %723 = vmatmul.mubr.bf16.gmra.mrb[0].mxu0 %v589
  %v724 = vpop.f32.mrb[0].mxu0
  %v725 = vadd.f32 0.0, %v724
  %v726 = vpop.f32.mrb[0].mxu0
  %v727 = vpop.f32.mrb[0].mxu0
  %v728 = vadd.f32 0.0, %v727
  %v729 = vpop.f32.mrb[0].mxu0
  %730 = vmatprep.mubr.bf16.mxu0 0
  %731 = vmatmul.mubr.bf16.gmra.mrb[0].mxu0 %v590
  %v732 = vpop.f32.mrb[0].mxu0
  %v733 = vadd.f32 0.0, %v732
  %v734 = vpop.f32.mrb[0].mxu0
  %v735 = vpop.f32.mrb[0].mxu0
  %v736 = vadd.f32 0.0, %v735
  %v737 = vpop.f32.mrb[0].mxu0
  %738 = vmatprep.mubr.bf16.mxu0 0
  %739 = vmatmul.mubr.bf16.gmra.mrb[0].mxu0 %v591
  %v740 = vpop.f32.mrb[0].mxu0
  %v741 = vadd.f32 0.0, %v740
  %v742 = vpop.f32.mrb[0].mxu0
  %v743 = vpop.f32.mrb[0].mxu0
  %v744 = vadd.f32 0.0, %v743
  %v745 = vpop.f32.mrb[0].mxu0
  %746 = vmatprep.mubr.bf16.mxu0 0
  %747 = vmatmul.mubr.bf16.gmra.mrb[0].mxu0 %v592
  %v748 = vpop.f32.mrb[0].mxu0
  %v749 = vadd.f32 0.0, %v748
  %v750 = vpop.f32.mrb[0].mxu0
  %v751 = vpop.f32.mrb[0].mxu0
  %v752 = vadd.f32 0.0, %v751
  %v753 = vpop.f32.mrb[0].mxu0
  %754 = vmatprep.mubr.bf16.mxu0 0
  %755 = vmatmul.mubr.bf16.gmra.mrb[0].mxu0 %v593
  %v756 = vpop.f32.mrb[0].mxu0
  %v757 = vadd.f32 0.0, %v756
  %v758 = vpop.f32.mrb[0].mxu0
  %v759 = vpop.f32.mrb[0].mxu0
  %v760 = vadd.f32 0.0, %v759
  %v761 = vpop.f32.mrb[0].mxu0
  %762 = vmatprep.mubr.bf16.mxu0 0
  %763 = vmatmul.mubr.bf16.gmra.mrb[0].mxu0 %v594
  %v764 = vpop.f32.mrb[0].mxu0
  %v765 = vadd.f32 0.0, %v764
  %v766 = vpop.f32.mrb[0].mxu0
  %v767 = vpop.f32.mrb[0].mxu0
  %v768 = vadd.f32 0.0, %v767
  %v769 = vpop.f32.mrb[0].mxu0
  %770 = vmatprep.mubr.bf16.mxu0 0
  %771 = vmatmul.mubr.bf16.gmra.mrb[0].mxu0 %v595
  %v772 = vpop.f32.mrb[0].mxu0
  %v773 = vadd.f32 0.0, %v772
  %v774 = vpop.f32.mrb[0].mxu0
  %v775 = vpop.f32.mrb[0].mxu0
  %v776 = vadd.f32 0.0, %v775
  %v777 = vpop.f32.mrb[0].mxu0
  %778 = vmatprep.mubr.bf16.mxu0 0
  %779 = vmatmul.mubr.bf16.gmra.mrb[0].mxu0 %v596
  %v780 = vpop.f32.mrb[0].mxu0
  %v781 = vadd.f32 0.0, %v780
  %v782 = vpop.f32.mrb[0].mxu0
  %v783 = vpop.f32.mrb[0].mxu0
  %v784 = vadd.f32 0.0, %v783
  %v785 = vpop.f32.mrb[0].mxu0
  %786 = vmatprep.mubr.bf16.mxu0 0
  %787 = vmatmul.mubr.bf16.gmra.mrb[0].mxu0 %v597
  %v788 = vpop.f32.mrb[0].mxu0
  %v789 = vadd.f32 0.0, %v788
  %v790 = vpop.f32.mrb[0].mxu0
  %v791 = vpop.f32.mrb[0].mxu0
  %v792 = vadd.f32 0.0, %v791
  %v793 = vpop.f32.mrb[0].mxu0
  %794 = vmatprep.mubr.bf16.mxu0 0
  %795 = vmatmul.mubr.bf16.gmra.mrb[0].mxu0 %v598
  %v796 = vpop.f32.mrb[0].mxu0
  %v797 = vadd.f32 0.0, %v796
  %v798 = vpop.f32.mrb[0].mxu0
  %v799 = vpop.f32.mrb[0].mxu0
  %v800 = vadd.f32 0.0, %v799
  %v801 = vpop.f32.mrb[0].mxu0
  %802 = vmatprep.mubr.bf16.mxu0 0
  %803 = vmatmul.mubr.bf16.gmra.mrb[0].mxu0 %v599
  %v804 = vpop.f32.mrb[0].mxu0
  %v805 = vadd.f32 0.0, %v804
  %v806 = vpop.f32.mrb[0].mxu0
  %v807 = vpop.f32.mrb[0].mxu0
  %v808 = vadd.f32 0.0, %v807
  %v809 = vpop.f32.mrb[0].mxu0
  %810 = vmatprep.mubr.bf16.mxu0 0
  %811 = vmatmul.mubr.bf16.gmra.mrb[0].mxu0 %v600
  %v812 = vpop.f32.mrb[0].mxu0
  %v813 = vadd.f32 0.0, %v812
  %v814 = vpop.f32.mrb[0].mxu0
  %v815 = vpop.f32.mrb[0].mxu0
  %v816 = vadd.f32 0.0, %v815
  %v817 = vpop.f32.mrb[0].mxu0
  %818 = vmatprep.mubr.bf16.mxu0 0
  %819 = vmatmul.mubr.bf16.gmra.mrb[0].mxu0 %v601
  %v820 = vpop.f32.mrb[0].mxu0
  %v821 = vadd.f32 0.0, %v820
  %v822 = vpop.f32.mrb[0].mxu0
  %v823 = vpop.f32.mrb[0].mxu0
  %v824 = vadd.f32 0.0, %v823
  %v825 = vpop.f32.mrb[0].mxu0
  %826 = vdwg.mxu0
  %v827 = vadd.f32 %v442, %v701
  %v828 = vadd.f32 %v443, %v704
  %v829 = vadd.f32 %v444, %v709
  %v830 = vadd.f32 %v445, %v712
  %v831 = vadd.f32 %v446, %v717
  %v832 = vadd.f32 %v447, %v720
  %v833 = vadd.f32 %v448, %v725
  %v834 = vadd.f32 %v449, %v728
  %v835 = vadd.f32 %v450, %v733
  %v836 = vadd.f32 %v451, %v736
  %v837 = vadd.f32 %v452, %v741
  %v838 = vadd.f32 %v453, %v744
  %v839 = vadd.f32 %v454, %v749
  %v840 = vadd.f32 %v455, %v752
  %v841 = vadd.f32 %v456, %v757
  %v842 = vadd.f32 %v457, %v760
  %v843 = vadd.f32 %v458, %v765
  %v844 = vadd.f32 %v459, %v768
  %v845 = vadd.f32 %v460, %v773
  %v846 = vadd.f32 %v461, %v776
  %v847 = vadd.f32 %v462, %v781
  %v848 = vadd.f32 %v463, %v784
  %v849 = vadd.f32 %v464, %v789
  %v850 = vadd.f32 %v465, %v792
  %v851 = vadd.f32 %v466, %v797
  %v852 = vadd.f32 %v467, %v800
  %v853 = vadd.f32 %v468, %v805
  %v854 = vadd.f32 %v469, %v808
  %v855 = vadd.f32 %v470, %v813
  %v856 = vadd.f32 %v471, %v816
  %v857 = vadd.f32 %v472, %v821
  %v858 = vadd.f32 %v473, %v824
  %859 = vst [vmem:[#allocation2] sm:$0xff] %v827
  %860 = vst [vmem:[#allocation2 + $0x8] sm:$0xff] %v828
  %861 = vst [vmem:[#allocation2 + $0x10] sm:$0xff] %v829
  %862 = vst [vmem:[#allocation2 + $0x18] sm:$0xff] %v830
  %863 = vst [vmem:[#allocation2 + $0x20] sm:$0xff] %v831
  %864 = vst [vmem:[#allocation2 + $0x28] sm:$0xff] %v832
  %865 = vst [vmem:[#allocation2 + $0x30] sm:$0xff] %v833
  %866 = vst [vmem:[#allocation2 + $0x38] sm:$0xff] %v834
  %867 = vst [vmem:[#allocation2 + $0x40] sm:$0xff] %v835
  %868 = vst [vmem:[#allocation2 + $0x48] sm:$0xff] %v836
  %869 = vst [vmem:[#allocation2 + $0x50] sm:$0xff] %v837
  %870 = vst [vmem:[#allocation2 + $0x58] sm:$0xff] %v838
  %871 = vst [vmem:[#allocation2 + $0x60] sm:$0xff] %v839
  %872 = vst [vmem:[#allocation2 + $0x68] sm:$0xff] %v840
  %873 = vst [vmem:[#allocation2 + $0x70] sm:$0xff] %v841
  %874 = vst [vmem:[#allocation2 + $0x78] sm:$0xff] %v842
  %875 = vst [vmem:[#allocation2 + $0x80] sm:$0xff] %v843
  %876 = vst [vmem:[#allocation2 + $0x88] sm:$0xff] %v844
  %877 = vst [vmem:[#allocation2 + $0x90] sm:$0xff] %v845
  %878 = vst [vmem:[#allocation2 + $0x98] sm:$0xff] %v846
  %879 = vst [vmem:[#allocation2 + $0xa0] sm:$0xff] %v847
  %880 = vst [vmem:[#allocation2 + $0xa8] sm:$0xff] %v848
  %881 = vst [vmem:[#allocation2 + $0xb0] sm:$0xff] %v849
  %882 = vst [vmem:[#allocation2 + $0xb8] sm:$0xff] %v850
  %883 = vst [vmem:[#allocation2 + $0xc0] sm:$0xff] %v851
  %884 = vst [vmem:[#allocation2 + $0xc8] sm:$0xff] %v852
  %885 = vst [vmem:[#allocation2 + $0xd0] sm:$0xff] %v853
  %886 = vst [vmem:[#allocation2 + $0xd8] sm:$0xff] %v854
  %887 = vst [vmem:[#allocation2 + $0xe0] sm:$0xff] %v855
  %888 = vst [vmem:[#allocation2 + $0xe8] sm:$0xff] %v856
  %889 = vst [vmem:[#allocation2 + $0xf0] sm:$0xff] %v857
  %890 = vst [vmem:[#allocation2 + $0xf8] sm:$0xff] %v858
  // Predicated region
  $region26: #{_lambda_.10} parent=0 // pred_check
    %p891 = pneg %p21
  $region27: #{_lambda_.10} parent=0 // pred_check_branch
    %893 = sbr.rel (%p891) target = $region29
  $region28: #{_lambda_.10} parent=0 // pred_region
    %v894 = vld [vmem:[#allocation2] sm:$0xff]
    %v895 = vld [vmem:[#allocation2 + $0x8] sm:$0xff]
    %v896 = vld [vmem:[#allocation2 + $0x10] sm:$0xff]
    %v897 = vld [vmem:[#allocation2 + $0x18] sm:$0xff]
    %v898 = vld [vmem:[#allocation2 + $0x20] sm:$0xff]
    %v899 = vld [vmem:[#allocation2 + $0x28] sm:$0xff]
    %v900 = vld [vmem:[#allocation2 + $0x30] sm:$0xff]
    %v901 = vld [vmem:[#allocation2 + $0x38] sm:$0xff]
    %v902 = vld [vmem:[#allocation2 + $0x40] sm:$0xff]
    %v903 = vld [vmem:[#allocation2 + $0x48] sm:$0xff]
    %v904 = vld [vmem:[#allocation2 + $0x50] sm:$0xff]
    %v905 = vld [vmem:[#allocation2 + $0x58] sm:$0xff]
    %v906 = vld [vmem:[#allocation2 + $0x60] sm:$0xff]
    %v907 = vld [vmem:[#allocation2 + $0x68] sm:$0xff]
    %v908 = vld [vmem:[#allocation2 + $0x70] sm:$0xff]
    %v909 = vld [vmem:[#allocation2 + $0x78] sm:$0xff]
    %v910 = vld [vmem:[#allocation2 + $0x80] sm:$0xff]
    %v911 = vld [vmem:[#allocation2 + $0x88] sm:$0xff]
    %v912 = vld [vmem:[#allocation2 + $0x90] sm:$0xff]
    %v913 = vld [vmem:[#allocation2 + $0x98] sm:$0xff]
    %v914 = vld [vmem:[#allocation2 + $0xa0] sm:$0xff]
    %v915 = vld [vmem:[#allocation2 + $0xa8] sm:$0xff]
    %v916 = vld [vmem:[#allocation2 + $0xb0] sm:$0xff]
    %v917 = vld [vmem:[#allocation2 + $0xb8] sm:$0xff]
    %v918 = vld [vmem:[#allocation2 + $0xc0] sm:$0xff]
    %v919 = vld [vmem:[#allocation2 + $0xc8] sm:$0xff]
    %v920 = vld [vmem:[#allocation2 + $0xd0] sm:$0xff]
    %v921 = vld [vmem:[#allocation2 + $0xd8] sm:$0xff]
    %v922 = vld [vmem:[#allocation2 + $0xe0] sm:$0xff]
    %v923 = vld [vmem:[#allocation2 + $0xe8] sm:$0xff]
    %v924 = vld [vmem:[#allocation2 + $0xf0] sm:$0xff]
    %v925 = vld [vmem:[#allocation2 + $0xf8] sm:$0xff]
    %v926 = vld [vmem:[%s4] sm:$0x1]
    %v928 = vlaneseq
    %v929 = vshrl.u32 %v928, 7
    %v930 = vsub.s32 0, %v929
    %v931 = vrot.slane %v926, %v930
    %v933 = vadd.f32 %v894, %v931
    %v934 = vadd.f32 %v895, %v931
    %v935 = vadd.f32 %v896, %v931
    %v936 = vadd.f32 %v897, %v931
    %v937 = vadd.f32 %v898, %v931
    %v938 = vadd.f32 %v899, %v931
    %v939 = vadd.f32 %v900, %v931
    %v940 = vadd.f32 %v901, %v931
    %v941 = vadd.f32 %v902, %v931
    %v942 = vadd.f32 %v903, %v931
    %v943 = vadd.f32 %v904, %v931
    %v944 = vadd.f32 %v905, %v931
    %v945 = vadd.f32 %v906, %v931
    %v946 = vadd.f32 %v907, %v931
    %v947 = vadd.f32 %v908, %v931
    %v948 = vadd.f32 %v909, %v931
    %v949 = vadd.f32 %v910, %v931
    %v950 = vadd.f32 %v911, %v931
    %v951 = vadd.f32 %v912, %v931
    %v952 = vadd.f32 %v913, %v931
    %v953 = vadd.f32 %v914, %v931
    %v954 = vadd.f32 %v915, %v931
    %v955 = vadd.f32 %v916, %v931
    %v956 = vadd.f32 %v917, %v931
    %v957 = vadd.f32 %v918, %v931
    %v958 = vadd.f32 %v919, %v931
    %v959 = vadd.f32 %v920, %v931
    %v960 = vadd.f32 %v921, %v931
    %v961 = vadd.f32 %v922, %v931
    %v962 = vadd.f32 %v923, %v931
    %v963 = vadd.f32 %v924, %v931
    %v964 = vadd.f32 %v925, %v931
    %v965 = vmax.f32 %v933, 0.0
    %v966 = vmax.f32 %v934, 0.0
    %v967 = vmax.f32 %v935, 0.0
    %v968 = vmax.f32 %v936, 0.0
    %v969 = vmax.f32 %v937, 0.0
    %v970 = vmax.f32 %v938, 0.0
    %v971 = vmax.f32 %v939, 0.0
    %v972 = vmax.f32 %v940, 0.0
    %v973 = vmax.f32 %v941, 0.0
    %v974 = vmax.f32 %v942, 0.0
    %v975 = vmax.f32 %v943, 0.0
    %v976 = vmax.f32 %v944, 0.0
    %v977 = vmax.f32 %v945, 0.0
    %v978 = vmax.f32 %v946, 0.0
    %v979 = vmax.f32 %v947, 0.0
    %v980 = vmax.f32 %v948, 0.0
    %v981 = vmax.f32 %v949, 0.0
    %v982 = vmax.f32 %v950, 0.0
    %v983 = vmax.f32 %v951, 0.0
    %v984 = vmax.f32 %v952, 0.0
    %v985 = vmax.f32 %v953, 0.0
    %v986 = vmax.f32 %v954, 0.0
    %v987 = vmax.f32 %v955, 0.0
    %v988 = vmax.f32 %v956, 0.0
    %v989 = vmax.f32 %v957, 0.0
    %v990 = vmax.f32 %v958, 0.0
    %v991 = vmax.f32 %v959, 0.0
    %v992 = vmax.f32 %v960, 0.0
    %v993 = vmax.f32 %v961, 0.0
    %v994 = vmax.f32 %v962, 0.0
    %v995 = vmax.f32 %v963, 0.0
    %v996 = vmax.f32 %v964, 0.0
    %v997 = vpack.c.bf16 %v966, %v965
    %v998 = vpack.c.bf16 %v968, %v967
    %v999 = vpack.c.bf16 %v970, %v969
    %v1000 = vpack.c.bf16 %v972, %v971
    %v1001 = vpack.c.bf16 %v974, %v973
    %v1002 = vpack.c.bf16 %v976, %v975
    %v1003 = vpack.c.bf16 %v978, %v977
    %v1004 = vpack.c.bf16 %v980, %v979
    %v1005 = vpack.c.bf16 %v982, %v981
    %v1006 = vpack.c.bf16 %v984, %v983
    %v1007 = vpack.c.bf16 %v986, %v985
    %v1008 = vpack.c.bf16 %v988, %v987
    %v1009 = vpack.c.bf16 %v990, %v989
    %v1010 = vpack.c.bf16 %v992, %v991
    %v1011 = vpack.c.bf16 %v994, %v993
    %v1012 = vpack.c.bf16 %v996, %v995
    %v1029 = vunpack.c.l.b16 %v997
    %v1030 = vunpack.c.h.b16 %v997
    %v1031 = vunpack.c.l.b16 %v998
    %v1032 = vunpack.c.h.b16 %v998
    %v1033 = vunpack.c.l.b16 %v999
    %v1034 = vunpack.c.h.b16 %v999
    %v1035 = vunpack.c.l.b16 %v1000
    %v1036 = vunpack.c.h.b16 %v1000
    %v1037 = vunpack.c.l.b16 %v1001
    %v1038 = vunpack.c.h.b16 %v1001
    %v1039 = vunpack.c.l.b16 %v1002
    %v1040 = vunpack.c.h.b16 %v1002
    %v1041 = vunpack.c.l.b16 %v1003
    %v1042 = vunpack.c.h.b16 %v1003
    %v1043 = vunpack.c.l.b16 %v1004
    %v1044 = vunpack.c.h.b16 %v1004
    %v1045 = vunpack.c.l.b16 %v1005
    %v1046 = vunpack.c.h.b16 %v1005
    %v1047 = vunpack.c.l.b16 %v1006
    %v1048 = vunpack.c.h.b16 %v1006
    %v1049 = vunpack.c.l.b16 %v1007
    %v1050 = vunpack.c.h.b16 %v1007
    %v1051 = vunpack.c.l.b16 %v1008
    %v1052 = vunpack.c.h.b16 %v1008
    %v1053 = vunpack.c.l.b16 %v1009
    %v1054 = vunpack.c.h.b16 %v1009
    %v1055 = vunpack.c.l.b16 %v1010
    %v1056 = vunpack.c.h.b16 %v1010
    %v1057 = vunpack.c.l.b16 %v1011
    %v1058 = vunpack.c.h.b16 %v1011
    %v1059 = vunpack.c.l.b16 %v1012
    %v1060 = vunpack.c.h.b16 %v1012
    %v1061 = vpack.c.b16 %v1029, %v1029
    %v1062 = vpack.c.b16 %v1030, %v1030
    %v1063 = vpack.c.b16 %v1031, %v1031
    %v1064 = vpack.c.b16 %v1032, %v1032
    %v1065 = vpack.c.b16 %v1033, %v1033
    %v1066 = vpack.c.b16 %v1034, %v1034
    %v1067 = vpack.c.b16 %v1035, %v1035
    %v1068 = vpack.c.b16 %v1036, %v1036
    %v1069 = vpack.c.b16 %v1037, %v1037
    %v1070 = vpack.c.b16 %v1038, %v1038
    %v1071 = vpack.c.b16 %v1039, %v1039
    %v1072 = vpack.c.b16 %v1040, %v1040
    %v1073 = vpack.c.b16 %v1041, %v1041
    %v1074 = vpack.c.b16 %v1042, %v1042
    %v1075 = vpack.c.b16 %v1043, %v1043
    %v1076 = vpack.c.b16 %v1044, %v1044
    %v1077 = vpack.c.b16 %v1045, %v1045
    %v1078 = vpack.c.b16 %v1046, %v1046
    %v1079 = vpack.c.b16 %v1047, %v1047
    %v1080 = vpack.c.b16 %v1048, %v1048
    %v1081 = vpack.c.b16 %v1049, %v1049
    %v1082 = vpack.c.b16 %v1050, %v1050
    %v1083 = vpack.c.b16 %v1051, %v1051
    %v1084 = vpack.c.b16 %v1052, %v1052
    %v1085 = vpack.c.b16 %v1053, %v1053
    %v1086 = vpack.c.b16 %v1054, %v1054
    %v1087 = vpack.c.b16 %v1055, %v1055
    %v1088 = vpack.c.b16 %v1056, %v1056
    %v1089 = vpack.c.b16 %v1057, %v1057
    %v1090 = vpack.c.b16 %v1058, %v1058
    %v1091 = vpack.c.b16 %v1059, %v1059
    %v1092 = vpack.c.b16 %v1060, %v1060
    %1125 = vst [vmem:[%s5] sm:$0xf] %v1061
    %1126 = vst [vmem:[%s5 + $0x4] sm:$0xf] %v1062
    %1127 = vst [vmem:[%s5 + $0x8] sm:$0xf] %v1063
    %1128 = vst [vmem:[%s5 + $0xc] sm:$0xf] %v1064
    %1129 = vst [vmem:[%s5 + $0x10] sm:$0xf] %v1065
    %1130 = vst [vmem:[%s5 + $0x14] sm:$0xf] %v1066
    %1131 = vst [vmem:[%s5 + $0x18] sm:$0xf] %v1067
    %1132 = vst [vmem:[%s5 + $0x1c] sm:$0xf] %v1068
    %1133 = vst [vmem:[%s5 + $0x20] sm:$0xf] %v1069
    %1134 = vst [vmem:[%s5 + $0x24] sm:$0xf] %v1070
    %1135 = vst [vmem:[%s5 + $0x28] sm:$0xf] %v1071
    %1136 = vst [vmem:[%s5 + $0x2c] sm:$0xf] %v1072
    %1137 = vst [vmem:[%s5 + $0x30] sm:$0xf] %v1073
    %1138 = vst [vmem:[%s5 + $0x34] sm:$0xf] %v1074
    %1139 = vst [vmem:[%s5 + $0x38] sm:$0xf] %v1075
    %1140 = vst [vmem:[%s5 + $0x3c] sm:$0xf] %v1076
    %1141 = vst [vmem:[%s5 + $0x40] sm:$0xf] %v1077
    %1142 = vst [vmem:[%s5 + $0x44] sm:$0xf] %v1078
    %1143 = vst [vmem:[%s5 + $0x48] sm:$0xf] %v1079
    %1144 = vst [vmem:[%s5 + $0x4c] sm:$0xf] %v1080
    %1145 = vst [vmem:[%s5 + $0x50] sm:$0xf] %v1081
    %1146 = vst [vmem:[%s5 + $0x54] sm:$0xf] %v1082
    %1147 = vst [vmem:[%s5 + $0x58] sm:$0xf] %v1083
    %1148 = vst [vmem:[%s5 + $0x5c] sm:$0xf] %v1084
    %1149 = vst [vmem:[%s5 + $0x60] sm:$0xf] %v1085
    %1150 = vst [vmem:[%s5 + $0x64] sm:$0xf] %v1086
    %1151 = vst [vmem:[%s5 + $0x68] sm:$0xf] %v1087
    %1152 = vst [vmem:[%s5 + $0x6c] sm:$0xf] %v1088
    %1153 = vst [vmem:[%s5 + $0x70] sm:$0xf] %v1089
    %1154 = vst [vmem:[%s5 + $0x74] sm:$0xf] %v1090
    %1155 = vst [vmem:[%s5 + $0x78] sm:$0xf] %v1091
    %1156 = vst [vmem:[%s5 + $0x7c] sm:$0xf] %v1092
  $region29: #{_lambda_.10} parent=0 // pred_fallthru
    _
  // Predicated region
  $region30: #{_lambda_.10} parent=0 // pred_check
    _
  $region31: #{_lambda_.10} parent=0 // pred_check_branch
    %1158 = sbr.rel (0) target = $region33
  $region32: #{_lambda_.10} parent=0 // pred_region
    _
  $region33: #{_lambda_.10} parent=0 // pred_fallthru
    _
  // Predicated region
  $region34: #{_lambda_.10} parent=0 // pred_check
    _
  $region35: #{_lambda_.10} parent=0 // pred_check_branch
    %1160 = sbr.rel (0) target = $region37
  $region36: #{_lambda_.10} parent=0 // pred_region
    _
  $region37: #{_lambda_.10} parent=0 // pred_fallthru
    _

// kernel: _lambda_.11
$region0: #{_lambda_.11}
  #allocation0 [shape = 'u32[]', space=smem, size = 0x4, offset = 0x4, fixed_abs, tag = 'smem constant byte address 0x4 - core index']
  #allocation1 [shape = 'u32[144,128]{1,0:T(1,128)}', space=vmem, size = 0x12000, scoped, tag = 'internal scratch']
  #allocation2 [shape = 'f32[208,128]{1,0:T(8,128)}', space=vmem, size = 0x1a000, scoped, tag = 'scratch operand']
  %s0 = inlined_call_operand.vmem [shape: bf16[208,128], index: 0, kind: input, shape index: {}]
  %s1 = inlined_call_operand.vmem [shape: bf16[128,128], index: 1, kind: input, shape index: {}]
  %s2 = inlined_call_operand.vmem [shape: f32[1,128], index: 2, kind: input, shape index: {}]
  %s3 = inlined_call_operand.vmem [shape: f32[208,128], index: 3, kind: output, shape index: {}]
  %s4 = sld [smem:[#allocation0]]
  $region30: #{_lambda_.11} parent=0
    _
  %s6 = ssub.s32 1, %s4
  %s7 = scalar_select 0, %s6, %s4
  // Predicated region
  $region2: #{_lambda_.11} parent=0 // pred_check
    _
  $region3: #{_lambda_.11} parent=0 // pred_check_branch
    %9 = sbr.rel (0) target = $region5
  $region4: #{_lambda_.11} parent=0 // pred_region
    _
  $region5: #{_lambda_.11} parent=0 // pred_fallthru
    _
  // Predicated region
  $region6: #{_lambda_.11} parent=0 // pred_check
    _
  $region7: #{_lambda_.11} parent=0 // pred_check_branch
    %11 = sbr.rel (0) target = $region9
  $region8: #{_lambda_.11} parent=0 // pred_region
    _
  $region9: #{_lambda_.11} parent=0 // pred_fallthru
    _
  // Predicated region
  $region10: #{_lambda_.11} parent=0 // pred_check
    _
  $region11: #{_lambda_.11} parent=0 // pred_check_branch
    %13 = sbr.rel (0) target = $region13
  $region12: #{_lambda_.11} parent=0 // pred_region
    _
  $region13: #{_lambda_.11} parent=0 // pred_fallthru
    _
  %p15 = scmp.eq.s32.totalorder 0, 0
  // Predicated region
  $region14: #{_lambda_.11} parent=0 // pred_check
    %p16 = pneg %p15
  $region15: #{_lambda_.11} parent=0 // pred_check_branch
    %18 = sbr.rel (%p16) target = $region17
  $region16: #{_lambda_.11} parent=0 // pred_region
    %19 = vst [vmem:[#allocation2] sm:$0xff] 0.0
    %20 = vst [vmem:[#allocation2 + $0x8] sm:$0xff] 0.0
    %21 = vst [vmem:[#allocation2 + $0x10] sm:$0xff] 0.0
    %22 = vst [vmem:[#allocation2 + $0x18] sm:$0xff] 0.0
    %23 = vst [vmem:[#allocation2 + $0x20] sm:$0xff] 0.0
    %24 = vst [vmem:[#allocation2 + $0x28] sm:$0xff] 0.0
    %25 = vst [vmem:[#allocation2 + $0x30] sm:$0xff] 0.0
    %26 = vst [vmem:[#allocation2 + $0x38] sm:$0xff] 0.0
    %27 = vst [vmem:[#allocation2 + $0x40] sm:$0xff] 0.0
    %28 = vst [vmem:[#allocation2 + $0x48] sm:$0xff] 0.0
    %29 = vst [vmem:[#allocation2 + $0x50] sm:$0xff] 0.0
    %30 = vst [vmem:[#allocation2 + $0x58] sm:$0xff] 0.0
    %31 = vst [vmem:[#allocation2 + $0x60] sm:$0xff] 0.0
    %32 = vst [vmem:[#allocation2 + $0x68] sm:$0xff] 0.0
    %33 = vst [vmem:[#allocation2 + $0x70] sm:$0xff] 0.0
    %34 = vst [vmem:[#allocation2 + $0x78] sm:$0xff] 0.0
    %35 = vst [vmem:[#allocation2 + $0x80] sm:$0xff] 0.0
    %36 = vst [vmem:[#allocation2 + $0x88] sm:$0xff] 0.0
    %37 = vst [vmem:[#allocation2 + $0x90] sm:$0xff] 0.0
    %38 = vst [vmem:[#allocation2 + $0x98] sm:$0xff] 0.0
    %39 = vst [vmem:[#allocation2 + $0xa0] sm:$0xff] 0.0
    %40 = vst [vmem:[#allocation2 + $0xa8] sm:$0xff] 0.0
    %41 = vst [vmem:[#allocation2 + $0xb0] sm:$0xff] 0.0
    %42 = vst [vmem:[#allocation2 + $0xb8] sm:$0xff] 0.0
    %43 = vst [vmem:[#allocation2 + $0xc0] sm:$0xff] 0.0
    %44 = vst [vmem:[#allocation2 + $0xc8] sm:$0xff] 0.0
  $region17: #{_lambda_.11} parent=0 // pred_fallthru
    _
  %v45 = vld [vmem:[#allocation2] sm:$0xff]
  %v46 = vld [vmem:[#allocation2 + $0x8] sm:$0xff]
  %v47 = vld [vmem:[#allocation2 + $0x10] sm:$0xff]
  %v48 = vld [vmem:[#allocation2 + $0x18] sm:$0xff]
  %v49 = vld [vmem:[#allocation2 + $0x20] sm:$0xff]
  %v50 = vld [vmem:[#allocation2 + $0x28] sm:$0xff]
  %v51 = vld [vmem:[#allocation2 + $0x30] sm:$0xff]
  %v52 = vld [vmem:[#allocation2 + $0x38] sm:$0xff]
  %v53 = vld [vmem:[#allocation2 + $0x40] sm:$0xff]
  %v54 = vld [vmem:[#allocation2 + $0x48] sm:$0xff]
  %v55 = vld [vmem:[#allocation2 + $0x50] sm:$0xff]
  %v56 = vld [vmem:[#allocation2 + $0x58] sm:$0xff]
  %v57 = vld [vmem:[#allocation2 + $0x60] sm:$0xff]
  %v58 = vld [vmem:[#allocation2 + $0x68] sm:$0xff]
  %v59 = vld [vmem:[#allocation2 + $0x70] sm:$0xff]
  %v60 = vld [vmem:[#allocation2 + $0x78] sm:$0xff]
  %v61 = vld [vmem:[#allocation2 + $0x80] sm:$0xff]
  %v62 = vld [vmem:[#allocation2 + $0x88] sm:$0xff]
  %v63 = vld [vmem:[#allocation2 + $0x90] sm:$0xff]
  %v64 = vld [vmem:[#allocation2 + $0x98] sm:$0xff]
  %v65 = vld [vmem:[#allocation2 + $0xa0] sm:$0xff]
  %v66 = vld [vmem:[#allocation2 + $0xa8] sm:$0xff]
  %v67 = vld [vmem:[#allocation2 + $0xb0] sm:$0xff]
  %v68 = vld [vmem:[#allocation2 + $0xb8] sm:$0xff]
  %v69 = vld [vmem:[#allocation2 + $0xc0] sm:$0xff]
  %v70 = vld [vmem:[#allocation2 + $0xc8] sm:$0xff]
  %v71 = vld [vmem:[%s0] sm:$0xf]
  %v72 = vld [vmem:[%s0 + $0x4] sm:$0xf]
  %v73 = vld [vmem:[%s0 + $0x8] sm:$0xf]
  %v74 = vld [vmem:[%s0 + $0xc] sm:$0xf]
  %v75 = vld [vmem:[%s0 + $0x10] sm:$0xf]
  %v76 = vld [vmem:[%s0 + $0x14] sm:$0xf]
  %v77 = vld [vmem:[%s0 + $0x18] sm:$0xf]
  %v78 = vld [vmem:[%s0 + $0x1c] sm:$0xf]
  %v79 = vld [vmem:[%s0 + $0x20] sm:$0xf]
  %v80 = vld [vmem:[%s0 + $0x24] sm:$0xf]
  %v81 = vld [vmem:[%s0 + $0x28] sm:$0xf]
  %v82 = vld [vmem:[%s0 + $0x2c] sm:$0xf]
  %v83 = vld [vmem:[%s0 + $0x30] sm:$0xf]
  %v84 = vld [vmem:[%s0 + $0x34] sm:$0xf]
  %v85 = vld [vmem:[%s0 + $0x38] sm:$0xf]
  %v86 = vld [vmem:[%s0 + $0x3c] sm:$0xf]
  %v87 = vld [vmem:[%s0 + $0x40] sm:$0xf]
  %v88 = vld [vmem:[%s0 + $0x44] sm:$0xf]
  %v89 = vld [vmem:[%s0 + $0x48] sm:$0xf]
  %v90 = vld [vmem:[%s0 + $0x4c] sm:$0xf]
  %v91 = vld [vmem:[%s0 + $0x50] sm:$0xf]
  %v92 = vld [vmem:[%s0 + $0x54] sm:$0xf]
  %v93 = vld [vmem:[%s0 + $0x58] sm:$0xf]
  %v94 = vld [vmem:[%s0 + $0x5c] sm:$0xf]
  %v95 = vld [vmem:[%s0 + $0x60] sm:$0xf]
  %v96 = vld [vmem:[%s0 + $0x64] sm:$0xf]
  %v97 = vld [vmem:[%s1] sm:$0xf]
  %v98 = vld [vmem:[%s1 + $0x4] sm:$0xf]
  %v99 = vld [vmem:[%s1 + $0x8] sm:$0xf]
  %v100 = vld [vmem:[%s1 + $0xc] sm:$0xf]
  %v101 = vld [vmem:[%s1 + $0x10] sm:$0xf]
  %v102 = vld [vmem:[%s1 + $0x14] sm:$0xf]
  %v103 = vld [vmem:[%s1 + $0x18] sm:$0xf]
  %v104 = vld [vmem:[%s1 + $0x1c] sm:$0xf]
  %v105 = vld [vmem:[%s1 + $0x20] sm:$0xf]
  %v106 = vld [vmem:[%s1 + $0x24] sm:$0xf]
  %v107 = vld [vmem:[%s1 + $0x28] sm:$0xf]
  %v108 = vld [vmem:[%s1 + $0x2c] sm:$0xf]
  %v109 = vld [vmem:[%s1 + $0x30] sm:$0xf]
  %v110 = vld [vmem:[%s1 + $0x34] sm:$0xf]
  %v111 = vld [vmem:[%s1 + $0x38] sm:$0xf]
  %v112 = vld [vmem:[%s1 + $0x3c] sm:$0xf]
  %v139 = vunpack.c.l.b16 %v71
  %v140 = vunpack.c.l.b16 %v72
  %v141 = vunpack.c.l.b16 %v73
  %v142 = vunpack.c.l.b16 %v74
  %v143 = vunpack.c.l.b16 %v75
  %v144 = vunpack.c.l.b16 %v76
  %v145 = vunpack.c.l.b16 %v77
  %v146 = vunpack.c.l.b16 %v78
  %v147 = vunpack.c.l.b16 %v79
  %v148 = vunpack.c.l.b16 %v80
  %v149 = vunpack.c.l.b16 %v81
  %v150 = vunpack.c.l.b16 %v82
  %v151 = vunpack.c.l.b16 %v83
  %v152 = vunpack.c.l.b16 %v84
  %v153 = vunpack.c.l.b16 %v85
  %v154 = vunpack.c.l.b16 %v86
  %v155 = vunpack.c.l.b16 %v87
  %v156 = vunpack.c.l.b16 %v88
  %v157 = vunpack.c.l.b16 %v89
  %v158 = vunpack.c.l.b16 %v90
  %v159 = vunpack.c.l.b16 %v91
  %v160 = vunpack.c.l.b16 %v92
  %v161 = vunpack.c.l.b16 %v93
  %v162 = vunpack.c.l.b16 %v94
  %v163 = vunpack.c.l.b16 %v95
  %v164 = vunpack.c.l.b16 %v96
  %v165 = vpack.c.b16 %v140, %v139
  %v166 = vpack.c.b16 %v142, %v141
  %v167 = vpack.c.b16 %v144, %v143
  %v168 = vpack.c.b16 %v146, %v145
  %v169 = vpack.c.b16 %v148, %v147
  %v170 = vpack.c.b16 %v150, %v149
  %v171 = vpack.c.b16 %v152, %v151
  %v172 = vpack.c.b16 %v154, %v153
  %v173 = vpack.c.b16 %v156, %v155
  %v174 = vpack.c.b16 %v158, %v157
  %v175 = vpack.c.b16 %v160, %v159
  %v176 = vpack.c.b16 %v162, %v161
  %v177 = vpack.c.b16 %v164, %v163
  %v207 = vunpack.c.l.b16 %v97
  %v208 = vunpack.c.l.b16 %v98
  %v209 = vunpack.c.l.b16 %v99
  %v210 = vunpack.c.l.b16 %v100
  %v211 = vunpack.c.l.b16 %v101
  %v212 = vunpack.c.l.b16 %v102
  %v213 = vunpack.c.l.b16 %v103
  %v214 = vunpack.c.l.b16 %v104
  %v215 = vunpack.c.l.b16 %v105
  %v216 = vunpack.c.l.b16 %v106
  %v217 = vunpack.c.l.b16 %v107
  %v218 = vunpack.c.l.b16 %v108
  %v219 = vunpack.c.l.b16 %v109
  %v220 = vunpack.c.l.b16 %v110
  %v221 = vunpack.c.l.b16 %v111
  %v222 = vunpack.c.l.b16 %v112
  %v223 = vpack.c.b16 %v208, %v207
  %v224 = vpack.c.b16 %v210, %v209
  %v225 = vpack.c.b16 %v212, %v211
  %v226 = vpack.c.b16 %v214, %v213
  %v227 = vpack.c.b16 %v216, %v215
  %v228 = vpack.c.b16 %v218, %v217
  %v229 = vpack.c.b16 %v220, %v219
  %v230 = vpack.c.b16 %v222, %v221
  %239 = vmatprep.subr.bf16.mxu0 0
  %240 = vmatpush1.bf16.msra.mxu0 %v223
  %241 = vmatprep.subr.bf16.mxu0 0
  %242 = vmatpush1.bf16.msra.mxu0 %v224
  %243 = vmatprep.subr.bf16.mxu0 0
  %244 = vmatpush1.bf16.msra.mxu0 %v225
  %245 = vmatprep.subr.bf16.mxu0 0
  %246 = vmatpush1.bf16.msra.mxu0 %v226
  %247 = vmatprep.subr.bf16.mxu0 0
  %248 = vmatpush1.bf16.msra.mxu0 %v227
  %249 = vmatprep.subr.bf16.mxu0 0
  %250 = vmatpush1.bf16.msra.mxu0 %v228
  %251 = vmatprep.subr.bf16.mxu0 0
  %252 = vmatpush1.bf16.msra.mxu0 %v229
  %253 = vmatprep.subr.bf16.mxu0 0
  %254 = vmatpush1.bf16.msra.mxu0 %v230
  %255 = vmatprep.subr.bf16.mxu0 0
  %256 = vmatpush1.bf16.msra.mxu0 0
  %257 = vmatprep.subr.bf16.mxu0 0
  %258 = vmatpush1.bf16.msra.mxu0 0
  %259 = vmatprep.subr.bf16.mxu0 0
  %260 = vmatpush1.bf16.msra.mxu0 0
  %261 = vmatprep.subr.bf16.mxu0 0
  %262 = vmatpush1.bf16.msra.mxu0 0
  %263 = vmatprep.subr.bf16.mxu0 0
  %264 = vmatpush1.bf16.msra.mxu0 0
  %265 = vmatprep.subr.bf16.mxu0 0
  %266 = vmatpush1.bf16.msra.mxu0 0
  %267 = vmatprep.subr.bf16.mxu0 0
  %268 = vmatpush1.bf16.msra.mxu0 0
  %269 = vmatprep.subr.bf16.mxu0 0
  %270 = vmatpush1.bf16.msra.mxu0 0
  %271 = vmatprep.mubr.bf16.mxu0 0
  %272 = vmatmul.mubr.bf16.gmra.mrb[0].mxu0 %v165
  %v273 = vpop.f32.mrb[0].mxu0
  %v274 = vadd.f32 0.0, %v273
  %v275 = vpop.f32.mrb[0].mxu0
  %v276 = vpop.f32.mrb[0].mxu0
  %v277 = vadd.f32 0.0, %v276
  %v278 = vpop.f32.mrb[0].mxu0
  %279 = vmatprep.mubr.bf16.mxu0 0
  %280 = vmatmul.mubr.bf16.gmra.mrb[0].mxu0 %v166
  %v281 = vpop.f32.mrb[0].mxu0
  %v282 = vadd.f32 0.0, %v281
  %v283 = vpop.f32.mrb[0].mxu0
  %v284 = vpop.f32.mrb[0].mxu0
  %v285 = vadd.f32 0.0, %v284
  %v286 = vpop.f32.mrb[0].mxu0
  %287 = vmatprep.mubr.bf16.mxu0 0
  %288 = vmatmul.mubr.bf16.gmra.mrb[0].mxu0 %v167
  %v289 = vpop.f32.mrb[0].mxu0
  %v290 = vadd.f32 0.0, %v289
  %v291 = vpop.f32.mrb[0].mxu0
  %v292 = vpop.f32.mrb[0].mxu0
  %v293 = vadd.f32 0.0, %v292
  %v294 = vpop.f32.mrb[0].mxu0
  %295 = vmatprep.mubr.bf16.mxu0 0
  %296 = vmatmul.mubr.bf16.gmra.mrb[0].mxu0 %v168
  %v297 = vpop.f32.mrb[0].mxu0
  %v298 = vadd.f32 0.0, %v297
  %v299 = vpop.f32.mrb[0].mxu0
  %v300 = vpop.f32.mrb[0].mxu0
  %v301 = vadd.f32 0.0, %v300
  %v302 = vpop.f32.mrb[0].mxu0
  %303 = vmatprep.mubr.bf16.mxu0 0
  %304 = vmatmul.mubr.bf16.gmra.mrb[0].mxu0 %v169
  %v305 = vpop.f32.mrb[0].mxu0
  %v306 = vadd.f32 0.0, %v305
  %v307 = vpop.f32.mrb[0].mxu0
  %v308 = vpop.f32.mrb[0].mxu0
  %v309 = vadd.f32 0.0, %v308
  %v310 = vpop.f32.mrb[0].mxu0
  %311 = vmatprep.mubr.bf16.mxu0 0
  %312 = vmatmul.mubr.bf16.gmra.mrb[0].mxu0 %v170
  %v313 = vpop.f32.mrb[0].mxu0
  %v314 = vadd.f32 0.0, %v313
  %v315 = vpop.f32.mrb[0].mxu0
  %v316 = vpop.f32.mrb[0].mxu0
  %v317 = vadd.f32 0.0, %v316
  %v318 = vpop.f32.mrb[0].mxu0
  %319 = vmatprep.mubr.bf16.mxu0 0
  %320 = vmatmul.mubr.bf16.gmra.mrb[0].mxu0 %v171
  %v321 = vpop.f32.mrb[0].mxu0
  %v322 = vadd.f32 0.0, %v321
  %v323 = vpop.f32.mrb[0].mxu0
  %v324 = vpop.f32.mrb[0].mxu0
  %v325 = vadd.f32 0.0, %v324
  %v326 = vpop.f32.mrb[0].mxu0
  %327 = vmatprep.mubr.bf16.mxu0 0
  %328 = vmatmul.mubr.bf16.gmra.mrb[0].mxu0 %v172
  %v329 = vpop.f32.mrb[0].mxu0
  %v330 = vadd.f32 0.0, %v329
  %v331 = vpop.f32.mrb[0].mxu0
  %v332 = vpop.f32.mrb[0].mxu0
  %v333 = vadd.f32 0.0, %v332
  %v334 = vpop.f32.mrb[0].mxu0
  %335 = vmatprep.mubr.bf16.mxu0 0
  %336 = vmatmul.mubr.bf16.gmra.mrb[0].mxu0 %v173
  %v337 = vpop.f32.mrb[0].mxu0
  %v338 = vadd.f32 0.0, %v337
  %v339 = vpop.f32.mrb[0].mxu0
  %v340 = vpop.f32.mrb[0].mxu0
  %v341 = vadd.f32 0.0, %v340
  %v342 = vpop.f32.mrb[0].mxu0
  %343 = vmatprep.mubr.bf16.mxu0 0
  %344 = vmatmul.mubr.bf16.gmra.mrb[0].mxu0 %v174
  %v345 = vpop.f32.mrb[0].mxu0
  %v346 = vadd.f32 0.0, %v345
  %v347 = vpop.f32.mrb[0].mxu0
  %v348 = vpop.f32.mrb[0].mxu0
  %v349 = vadd.f32 0.0, %v348
  %v350 = vpop.f32.mrb[0].mxu0
  %351 = vmatprep.mubr.bf16.mxu0 0
  %352 = vmatmul.mubr.bf16.gmra.mrb[0].mxu0 %v175
  %v353 = vpop.f32.mrb[0].mxu0
  %v354 = vadd.f32 0.0, %v353
  %v355 = vpop.f32.mrb[0].mxu0
  %v356 = vpop.f32.mrb[0].mxu0
  %v357 = vadd.f32 0.0, %v356
  %v358 = vpop.f32.mrb[0].mxu0
  %359 = vmatprep.mubr.bf16.mxu0 0
  %360 = vmatmul.mubr.bf16.gmra.mrb[0].mxu0 %v176
  %v361 = vpop.f32.mrb[0].mxu0
  %v362 = vadd.f32 0.0, %v361
  %v363 = vpop.f32.mrb[0].mxu0
  %v364 = vpop.f32.mrb[0].mxu0
  %v365 = vadd.f32 0.0, %v364
  %v366 = vpop.f32.mrb[0].mxu0
  %367 = vmatprep.mubr.bf16.mxu0 0
  %368 = vmatmul.mubr.bf16.gmra.mrb[0].mxu0 %v177
  %v369 = vpop.f32.mrb[0].mxu0
  %v370 = vadd.f32 0.0, %v369
  %v371 = vpop.f32.mrb[0].mxu0
  %v372 = vpop.f32.mrb[0].mxu0
  %v373 = vadd.f32 0.0, %v372
  %v374 = vpop.f32.mrb[0].mxu0
  %375 = vdwg.mxu0
  %v376 = vadd.f32 %v45, %v274
  %v377 = vadd.f32 %v46, %v277
  %v378 = vadd.f32 %v47, %v282
  %v379 = vadd.f32 %v48, %v285
  %v380 = vadd.f32 %v49, %v290
  %v381 = vadd.f32 %v50, %v293
  %v382 = vadd.f32 %v51, %v298
  %v383 = vadd.f32 %v52, %v301
  %v384 = vadd.f32 %v53, %v306
  %v385 = vadd.f32 %v54, %v309
  %v386 = vadd.f32 %v55, %v314
  %v387 = vadd.f32 %v56, %v317
  %v388 = vadd.f32 %v57, %v322
  %v389 = vadd.f32 %v58, %v325
  %v390 = vadd.f32 %v59, %v330
  %v391 = vadd.f32 %v60, %v333
  %v392 = vadd.f32 %v61, %v338
  %v393 = vadd.f32 %v62, %v341
  %v394 = vadd.f32 %v63, %v346
  %v395 = vadd.f32 %v64, %v349
  %v396 = vadd.f32 %v65, %v354
  %v397 = vadd.f32 %v66, %v357
  %v398 = vadd.f32 %v67, %v362
  %v399 = vadd.f32 %v68, %v365
  %v400 = vadd.f32 %v69, %v370
  %v401 = vadd.f32 %v70, %v373
  %402 = vst [vmem:[#allocation2] sm:$0xff] %v376
  %403 = vst [vmem:[#allocation2 + $0x8] sm:$0xff] %v377
  %404 = vst [vmem:[#allocation2 + $0x10] sm:$0xff] %v378
  %405 = vst [vmem:[#allocation2 + $0x18] sm:$0xff] %v379
  %406 = vst [vmem:[#allocation2 + $0x20] sm:$0xff] %v380
  %407 = vst [vmem:[#allocation2 + $0x28] sm:$0xff] %v381
  %408 = vst [vmem:[#allocation2 + $0x30] sm:$0xff] %v382
  %409 = vst [vmem:[#allocation2 + $0x38] sm:$0xff] %v383
  %410 = vst [vmem:[#allocation2 + $0x40] sm:$0xff] %v384
  %411 = vst [vmem:[#allocation2 + $0x48] sm:$0xff] %v385
  %412 = vst [vmem:[#allocation2 + $0x50] sm:$0xff] %v386
  %413 = vst [vmem:[#allocation2 + $0x58] sm:$0xff] %v387
  %414 = vst [vmem:[#allocation2 + $0x60] sm:$0xff] %v388
  %415 = vst [vmem:[#allocation2 + $0x68] sm:$0xff] %v389
  %416 = vst [vmem:[#allocation2 + $0x70] sm:$0xff] %v390
  %417 = vst [vmem:[#allocation2 + $0x78] sm:$0xff] %v391
  %418 = vst [vmem:[#allocation2 + $0x80] sm:$0xff] %v392
  %419 = vst [vmem:[#allocation2 + $0x88] sm:$0xff] %v393
  %420 = vst [vmem:[#allocation2 + $0x90] sm:$0xff] %v394
  %421 = vst [vmem:[#allocation2 + $0x98] sm:$0xff] %v395
  %422 = vst [vmem:[#allocation2 + $0xa0] sm:$0xff] %v396
  %423 = vst [vmem:[#allocation2 + $0xa8] sm:$0xff] %v397
  %424 = vst [vmem:[#allocation2 + $0xb0] sm:$0xff] %v398
  %425 = vst [vmem:[#allocation2 + $0xb8] sm:$0xff] %v399
  %426 = vst [vmem:[#allocation2 + $0xc0] sm:$0xff] %v400
  %427 = vst [vmem:[#allocation2 + $0xc8] sm:$0xff] %v401
  // Predicated region
  $region18: #{_lambda_.11} parent=0 // pred_check
    %p428 = pneg %p15
  $region19: #{_lambda_.11} parent=0 // pred_check_branch
    %430 = sbr.rel (%p428) target = $region21
  $region20: #{_lambda_.11} parent=0 // pred_region
    %v431 = vld [vmem:[#allocation2] sm:$0xff]
    %v432 = vld [vmem:[#allocation2 + $0x8] sm:$0xff]
    %v433 = vld [vmem:[#allocation2 + $0x10] sm:$0xff]
    %v434 = vld [vmem:[#allocation2 + $0x18] sm:$0xff]
    %v435 = vld [vmem:[#allocation2 + $0x20] sm:$0xff]
    %v436 = vld [vmem:[#allocation2 + $0x28] sm:$0xff]
    %v437 = vld [vmem:[#allocation2 + $0x30] sm:$0xff]
    %v438 = vld [vmem:[#allocation2 + $0x38] sm:$0xff]
    %v439 = vld [vmem:[#allocation2 + $0x40] sm:$0xff]
    %v440 = vld [vmem:[#allocation2 + $0x48] sm:$0xff]
    %v441 = vld [vmem:[#allocation2 + $0x50] sm:$0xff]
    %v442 = vld [vmem:[#allocation2 + $0x58] sm:$0xff]
    %v443 = vld [vmem:[#allocation2 + $0x60] sm:$0xff]
    %v444 = vld [vmem:[#allocation2 + $0x68] sm:$0xff]
    %v445 = vld [vmem:[#allocation2 + $0x70] sm:$0xff]
    %v446 = vld [vmem:[#allocation2 + $0x78] sm:$0xff]
    %v447 = vld [vmem:[#allocation2 + $0x80] sm:$0xff]
    %v448 = vld [vmem:[#allocation2 + $0x88] sm:$0xff]
    %v449 = vld [vmem:[#allocation2 + $0x90] sm:$0xff]
    %v450 = vld [vmem:[#allocation2 + $0x98] sm:$0xff]
    %v451 = vld [vmem:[#allocation2 + $0xa0] sm:$0xff]
    %v452 = vld [vmem:[#allocation2 + $0xa8] sm:$0xff]
    %v453 = vld [vmem:[#allocation2 + $0xb0] sm:$0xff]
    %v454 = vld [vmem:[#allocation2 + $0xb8] sm:$0xff]
    %v455 = vld [vmem:[#allocation2 + $0xc0] sm:$0xff]
    %v456 = vld [vmem:[#allocation2 + $0xc8] sm:$0xff]
    %v457 = vld [vmem:[%s2] sm:$0x1]
    %v459 = vlaneseq
    %v460 = vshrl.u32 %v459, 7
    %v461 = vsub.s32 0, %v460
    %v462 = vrot.slane %v457, %v461
    %v464 = vadd.f32 %v431, %v462
    %v465 = vadd.f32 %v432, %v462
    %v466 = vadd.f32 %v433, %v462
    %v467 = vadd.f32 %v434, %v462
    %v468 = vadd.f32 %v435, %v462
    %v469 = vadd.f32 %v436, %v462
    %v470 = vadd.f32 %v437, %v462
    %v471 = vadd.f32 %v438, %v462
    %v472 = vadd.f32 %v439, %v462
    %v473 = vadd.f32 %v440, %v462
    %v474 = vadd.f32 %v441, %v462
    %v475 = vadd.f32 %v442, %v462
    %v476 = vadd.f32 %v443, %v462
    %v477 = vadd.f32 %v444, %v462
    %v478 = vadd.f32 %v445, %v462
    %v479 = vadd.f32 %v446, %v462
    %v480 = vadd.f32 %v447, %v462
    %v481 = vadd.f32 %v448, %v462
    %v482 = vadd.f32 %v449, %v462
    %v483 = vadd.f32 %v450, %v462
    %v484 = vadd.f32 %v451, %v462
    %v485 = vadd.f32 %v452, %v462
    %v486 = vadd.f32 %v453, %v462
    %v487 = vadd.f32 %v454, %v462
    %v488 = vadd.f32 %v455, %v462
    %v489 = vadd.f32 %v456, %v462
    %v490 = vmax.f32 %v464, 0.0
    %v491 = vmax.f32 %v465, 0.0
    %v492 = vmax.f32 %v466, 0.0
    %v493 = vmax.f32 %v467, 0.0
    %v494 = vmax.f32 %v468, 0.0
    %v495 = vmax.f32 %v469, 0.0
    %v496 = vmax.f32 %v470, 0.0
    %v497 = vmax.f32 %v471, 0.0
    %v498 = vmax.f32 %v472, 0.0
    %v499 = vmax.f32 %v473, 0.0
    %v500 = vmax.f32 %v474, 0.0
    %v501 = vmax.f32 %v475, 0.0
    %v502 = vmax.f32 %v476, 0.0
    %v503 = vmax.f32 %v477, 0.0
    %v504 = vmax.f32 %v478, 0.0
    %v505 = vmax.f32 %v479, 0.0
    %v506 = vmax.f32 %v480, 0.0
    %v507 = vmax.f32 %v481, 0.0
    %v508 = vmax.f32 %v482, 0.0
    %v509 = vmax.f32 %v483, 0.0
    %v510 = vmax.f32 %v484, 0.0
    %v511 = vmax.f32 %v485, 0.0
    %v512 = vmax.f32 %v486, 0.0
    %v513 = vmax.f32 %v487, 0.0
    %v514 = vmax.f32 %v488, 0.0
    %v515 = vmax.f32 %v489, 0.0
    %516 = vst [vmem:[%s3] sm:$0xff] %v490
    %517 = vst [vmem:[%s3 + $0x8] sm:$0xff] %v491
    %518 = vst [vmem:[%s3 + $0x10] sm:$0xff] %v492
    %519 = vst [vmem:[%s3 + $0x18] sm:$0xff] %v493
    %520 = vst [vmem:[%s3 + $0x20] sm:$0xff] %v494
    %521 = vst [vmem:[%s3 + $0x28] sm:$0xff] %v495
    %522 = vst [vmem:[%s3 + $0x30] sm:$0xff] %v496
    %523 = vst [vmem:[%s3 + $0x38] sm:$0xff] %v497
    %524 = vst [vmem:[%s3 + $0x40] sm:$0xff] %v498
    %525 = vst [vmem:[%s3 + $0x48] sm:$0xff] %v499
    %526 = vst [vmem:[%s3 + $0x50] sm:$0xff] %v500
    %527 = vst [vmem:[%s3 + $0x58] sm:$0xff] %v501
    %528 = vst [vmem:[%s3 + $0x60] sm:$0xff] %v502
    %529 = vst [vmem:[%s3 + $0x68] sm:$0xff] %v503
    %530 = vst [vmem:[%s3 + $0x70] sm:$0xff] %v504
    %531 = vst [vmem:[%s3 + $0x78] sm:$0xff] %v505
    %532 = vst [vmem:[%s3 + $0x80] sm:$0xff] %v506
    %533 = vst [vmem:[%s3 + $0x88] sm:$0xff] %v507
    %534 = vst [vmem:[%s3 + $0x90] sm:$0xff] %v508
    %535 = vst [vmem:[%s3 + $0x98] sm:$0xff] %v509
    %536 = vst [vmem:[%s3 + $0xa0] sm:$0xff] %v510
    %537 = vst [vmem:[%s3 + $0xa8] sm:$0xff] %v511
    %538 = vst [vmem:[%s3 + $0xb0] sm:$0xff] %v512
    %539 = vst [vmem:[%s3 + $0xb8] sm:$0xff] %v513
    %540 = vst [vmem:[%s3 + $0xc0] sm:$0xff] %v514
    %541 = vst [vmem:[%s3 + $0xc8] sm:$0xff] %v515
  $region21: #{_lambda_.11} parent=0 // pred_fallthru
    _
  // Predicated region
  $region22: #{_lambda_.11} parent=0 // pred_check
    _
  $region23: #{_lambda_.11} parent=0 // pred_check_branch
    %543 = sbr.rel (0) target = $region25
  $region24: #{_lambda_.11} parent=0 // pred_region
    _
  $region25: #{_lambda_.11} parent=0 // pred_fallthru
    _
  // Predicated region
  $region26: #{_lambda_.11} parent=0 // pred_check
    _
  $region27: #{_lambda_.11} parent=0 // pred_check_branch
    %545 = sbr.rel (0) target = $region29
  $region28: #{_lambda_.11} parent=0 // pred_region
    _
  $region29: #{_lambda_.11} parent=0 // pred_fallthru
    _

</llo_original>
